<compile_context>
chip_gen: v6e
topology: v6e:2x2x1
jax: 0.10.0
libtpu: 0.0.40
codegen_flags: <defaults>
</compile_context>

<pallas_src>
import functools

import jax
import jax.numpy as jnp
from jax.experimental import pallas as pl
from jax.experimental.pallas import tpu as pltpu

EPS = 1e-5
LANE = 128
DEFAULT_TM = 512
# Safe on every generation; raise to 64-96 MiB on v5e/v6e (128 MiB physical)
# together with a larger DEFAULT_TM if the epilogue becomes DMA-overhead bound.
VMEM_LIMIT = 32 * 1024 * 1024


def _round_up(x, m):
    return (x + m - 1) // m * m


def _cdiv(a, b):
    return -(-a // b)


def _choose_tm(mo):
    # Guarantee >= 2 grid steps so both v7x TensorCores get work at small M.
    tm = min(DEFAULT_TM, _round_up(_cdiv(mo, 2), 8))
    return max(tm, 8)


def _pad2d(a, rows, cols):
    r, c = a.shape
    if r == rows and c == cols:
        return a
    return jnp.pad(a, ((0, rows - r), (0, cols - c)))


def _halo_geom(tm, wp):
    """Halo DMA geometry for the stride-1 flattened-shift conv."""
    off = _round_up(wp + 1, 8)              # aligned lead inside the slab
    slab = _round_up(tm + off + wp + 1, 8)  # rows per slab (tile + halo)
    return off, slab


# ----------------------------------------------------------------------------
# Host-side layout helpers (cheap XLA pads / reshapes, ~1x activation bytes).
# "Top-left canonical" layout of a (N,H,W,C) tensor: zero-pad spatial dims on
# the bottom/right by 2, flatten (N,H+2,W+2) to rows, channels in lanes.
# ----------------------------------------------------------------------------
def _canonical_rows(x, cpad, lead, rtot):
    n, h, w, c = x.shape
    a = jnp.pad(x, ((0, 0), (0, 2), (0, 2), (0, 0)))
    a = a.reshape(n * (h + 2) * (w + 2), c)
    a = jnp.pad(a, ((lead, rtot - lead - a.shape[0]), (0, cpad - c)))
    return a.astype(jnp.bfloat16)


def _valid_mask(n, h, w, mo_up):
    """1.0 at rows that correspond to real output pixels, 0.0 elsewhere."""
    hp, wp = h + 2, w + 2
    m = jnp.zeros((n, hp, wp), jnp.float32).at[:, :h, :w].set(1.0)
    m = m.reshape(n * hp * wp, 1)
    return jnp.pad(m, ((0, mo_up - n * hp * wp), (0, 0)))


def _halo_weight(w, cinp, coutp):
    """(3,3,Cin,Cout) -> (9*Cinp, Coutp) bf16, one Cinp-row block per tap."""
    kh, kw, cin, cout = w.shape
    w9 = w.reshape(kh * kw, cin, cout)
    w9 = jnp.pad(w9, ((0, 0), (0, cinp - cin), (0, coutp - cout)))
    return w9.reshape(kh * kw * cinp, coutp).astype(jnp.bfloat16)


def _im2col_canonical(x, stride, ho, wo, kpad, mo_up):
    """3x3 / pad=1 / strided patches laid out on the top-left canonical output
    grid (pad/garbage rows hold all-zero patches)."""
    n, h, w, c = x.shape
    xp = jnp.pad(x, ((0, 0), (1, 1), (1, 1), (0, 0)))
    cols = []
    for dh in range(3):
        for dw in range(3):
            sl = jax.lax.slice(
                xp, (0, dh, dw, 0),
                (n, dh + (ho - 1) * stride + 1, dw + (wo - 1) * stride + 1, c),
                (1, stride, stride, 1))
            cols.append(sl)
    p = jnp.stack(cols, axis=3).reshape(n, ho, wo, 9 * c)
    p = jnp.pad(p, ((0, 0), (0, 2), (0, 2), (0, 0)))
    p = p.reshape(n * (ho + 2) * (wo + 2), 9 * c)
    p = jnp.pad(p, ((0, mo_up - p.shape[0]), (0, kpad - 9 * c)))
    return p.astype(jnp.bfloat16)


# ----------------------------------------------------------------------------
# Kernel 1a: stride-1 3x3 conv via halo slab DMA + 9 shifted MXU dots,
#            with per-tile masked BN partial statistics.
# ----------------------------------------------------------------------------
def _conv3x3_halo_kernel(mask_ref, w_ref, a_hbm, y_ref, ps_ref, xbuf, sem, *,
                         tm, wp, off, slab, base, cinp, coutp):
    t = pl.program_id(0)
    nt = pl.num_programs(0)

    def issue(tt, slot):
        src = a_hbm.at[pl.ds(tt * tm + base, slab)]
        pltpu.make_async_copy(src, xbuf.at[slot], sem.at[slot]).start()

    @pl.when(t == 0)
    def _():
        issue(0, 0)

    slot = jax.lax.rem(t, 2)
    # Wait for the slab of the current step (issued at t-1, or primed above).
    pltpu.make_async_copy(a_hbm.at[pl.ds(base, slab)],
                          xbuf.at[slot], sem.at[slot]).wait()

    @pl.when(t + 1 < nt)
    def _():
        issue(t + 1, 1 - slot)

    xslab = xbuf.at[slot]
    acc = None
    for tap in range(9):
        dh, dw = tap // 3, tap % 3
        o = off + (dh - 1) * wp + (dw - 1)          # static per-tap row shift
        xt = xslab[pl.ds(o, tm), :]
        wt = w_ref[pl.ds(tap * cinp, cinp), :]
        d = jnp.dot(xt, wt, preferred_element_type=jnp.float32)
        acc = d if acc is None else acc + d
    y_ref[...] = acc.astype(y_ref.dtype)            # bf16 writeback
    keep = mask_ref[...] > 0.5                      # (tm, 1) validity mask
    ym = jnp.where(keep, acc, 0.0)
    ps_ref[0] = jnp.concatenate(
        [jnp.sum(ym, axis=0, keepdims=True),
         jnp.sum(ym * ym, axis=0, keepdims=True)], axis=0)


def conv3x3_s1_with_stats(a_rows, w9, mask, *, tm, wp, lead, cinp, coutp,
                          mo_up):
    nt = mo_up // tm
    off, slab = _halo_geom(tm, wp)
    base = lead - off
    assert base >= 0 and base % 8 == 0
    assert a_rows.shape[0] >= base + (nt - 1) * tm + slab
    kernel = functools.partial(_conv3x3_halo_kernel, tm=tm, wp=wp, off=off,
                               slab=slab, base=base, cinp=cinp, coutp=coutp)
    y, ps = pl.pallas_call(
        kernel,
        grid_spec=pltpu.PrefetchScalarGridSpec(
            num_scalar_prefetch=0, grid=(nt,),
            in_specs=[pl.BlockSpec((tm, 1), lambda i: (i, 0)),       # mask
                      pl.BlockSpec((9 * cinp, coutp), lambda i: (0, 0)),  # w
                      pl.BlockSpec(memory_space=pl.ANY)],            # slabs
            out_specs=(pl.BlockSpec((tm, coutp), lambda i: (i, 0)),
                       pl.BlockSpec((1, 2, coutp), lambda i: (i, 0, 0))),
            scratch_shapes=[pltpu.VMEM((2, slab, cinp), jnp.bfloat16),
                            pltpu.SemaphoreType.DMA((2,))]),
        out_shape=(jax.ShapeDtypeStruct((mo_up, coutp), jnp.bfloat16),
                   jax.ShapeDtypeStruct((nt, 2, coutp), jnp.float32)),
        compiler_params=pltpu.CompilerParams(
            # "arbitrary": the cross-step double-buffer state must run
            # sequentially on one core.
            dimension_semantics=("arbitrary",),
            vmem_limit_bytes=VMEM_LIMIT),
    )(mask, w9, a_rows)
    return y, ps


# ----------------------------------------------------------------------------
# Kernel 1b: im2col matmul + per-tile BN partial stats (strided conv1 and the
#            stats-only pass of the 1x1 projection shortcut).
# ----------------------------------------------------------------------------
def _matmul_stats_kernel(p_ref, w_ref, y_ref, ps_ref):
    y = jnp.dot(p_ref[...], w_ref[...], preferred_element_type=jnp.float32)
    y_ref[...] = y.astype(y_ref.dtype)
    ps_ref[0] = jnp.concatenate([jnp.sum(y, axis=0, keepdims=True),
                                 jnp.sum(y * y, axis=0, keepdims=True)],
                                axis=0)


def _matmul_stats_only_kernel(p_ref, w_ref, ps_ref):
    y = jnp.dot(p_ref[...], w_ref[...], preferred_element_type=jnp.float32)
    ps_ref[0] = jnp.concatenate([jnp.sum(y, axis=0, keepdims=True),
                                 jnp.sum(y * y, axis=0, keepdims=True)],
                                axis=0)


def matmul_with_stats(p, w, *, tm, emit_y=True):
    mp, kp = p.shape
    cp = w.shape[1]
    n_m = mp // tm
    in_specs = [pl.BlockSpec((tm, kp), lambda i: (i, 0)),
                pl.BlockSpec((kp, cp), lambda i: (0, 0))]
    ps_spec = pl.BlockSpec((1, 2, cp), lambda i: (i, 0, 0))
    ps_shape = jax.ShapeDtypeStruct((n_m, 2, cp), jnp.float32)
    comp = pltpu.CompilerParams(dimension_semantics=("parallel",),
                                vmem_limit_bytes=VMEM_LIMIT)
    if emit_y:
        return pl.pallas_call(
            _matmul_stats_kernel,
            grid_spec=pltpu.PrefetchScalarGridSpec(
                num_scalar_prefetch=0, grid=(n_m,),
                in_specs=in_specs,
                out_specs=(pl.BlockSpec((tm, cp), lambda i: (i, 0)), ps_spec)),
            out_shape=(jax.ShapeDtypeStruct((mp, cp), jnp.bfloat16), ps_shape),
            compiler_params=comp)(p, w)
    ps = pl.pallas_call(
        _matmul_stats_only_kernel,
        grid_spec=pltpu.PrefetchScalarGridSpec(
            num_scalar_prefetch=0, grid=(n_m,),
            in_specs=in_specs, out_specs=ps_spec),
        out_shape=ps_shape, compiler_params=comp)(p, w)
    return None, ps


def _finalize_stats(partial_sums, m_true, gamma, beta, cpad):
    """Tiny f32 glue: partial (sum, sumsq) -> per-channel (scale, shift)."""
    s = jnp.sum(partial_sums, axis=0)                       # (2, Cpad)
    mean = s[0] / m_true
    var = jnp.maximum(s[1] / m_true - mean * mean, 0.0)     # biased, clamped
    c = gamma.shape[0]
    g = jnp.pad(gamma.astype(jnp.float32), (0, cpad - c))
    b = jnp.pad(beta.astype(jnp.float32), (0, cpad - c))
    scale = g * jax.lax.rsqrt(var + EPS)
    shift = b - mean * scale
    return scale.reshape(1, cpad), shift.reshape(1, cpad)


# ----------------------------------------------------------------------------
# Kernel 2: BN1 apply + ReLU + validity mask, emitted directly into the
#           lead/tail-zero-filled canonical layout conv2's halo DMA consumes.
# ----------------------------------------------------------------------------
def _bn_relu_mask_kernel(lb, nt, y_ref, sc_ref, sh_ref, m_ref, o_ref):
    i = pl.program_id(0)
    in_range = jnp.logical_and(i >= lb, i < lb + nt)
    v = jnp.maximum(
        y_ref[...].astype(jnp.float32) * sc_ref[...] + sh_ref[...], 0.0)
    keep = jnp.logical_and(m_ref[...] > 0.5, in_range)
    o_ref[...] = jnp.where(keep, v, 0.0).astype(o_ref.dtype)


def bn_relu_to_canonical(y, scale, shift, mask, *, tm, lb, nt, rtot):
    cp = y.shape[1]
    nblk = rtot // tm

    def src_map(i):  # lead/tail blocks clamp to a valid source block
        return (jnp.clip(i - lb, 0, nt - 1), 0)

    return pl.pallas_call(
        functools.partial(_bn_relu_mask_kernel, lb, nt),
        grid_spec=pltpu.PrefetchScalarGridSpec(
            num_scalar_prefetch=0, grid=(nblk,),
            in_specs=[pl.BlockSpec((tm, cp), src_map),
                      pl.BlockSpec((1, cp), lambda i: (0, 0)),
                      pl.BlockSpec((1, cp), lambda i: (0, 0)),
                      pl.BlockSpec((tm, 1), src_map)],
            out_specs=pl.BlockSpec((tm, cp), lambda i: (i, 0))),
        out_shape=jax.ShapeDtypeStruct((rtot, cp), jnp.bfloat16),
        compiler_params=pltpu.CompilerParams(
            dimension_semantics=("parallel",),
            vmem_limit_bytes=VMEM_LIMIT),
    )(y, scale, shift, mask)


# ----------------------------------------------------------------------------
# Kernel 3: final BN2 apply + (identity residual | fused 1x1 projection
#           conv + BN) + ReLU.
# ----------------------------------------------------------------------------
def _final_kernel(mode, *refs):
    if mode == "project":
        y_ref, sc_ref, sh_ref, xs_ref, ws_ref, ssc_ref, shsc_ref, o_ref = refs
        v = y_ref[...].astype(jnp.float32) * sc_ref[...] + sh_ref[...]
        ysc = jnp.dot(xs_ref[...], ws_ref[...],
                      preferred_element_type=jnp.float32)
        v = v + ysc * ssc_ref[...] + shsc_ref[...]
    else:  # identity
        y_ref, sc_ref, sh_ref, r_ref, o_ref = refs
        v = (y_ref[...].astype(jnp.float32) * sc_ref[...] + sh_ref[...]
             + r_ref[...].astype(jnp.float32))
    o_ref[...] = jnp.maximum(v, 0.0).astype(o_ref.dtype)


def final_apply(y, scale, shift, *, tm, residual=None, shortcut=None,
                res_block_off=0, out_dtype=jnp.float32):
    mp, cp = y.shape
    n_m = mp // tm
    tile_spec = pl.BlockSpec((tm, cp), lambda i: (i, 0))
    vec_spec = pl.BlockSpec((1, cp), lambda i: (0, 0))
    args = [y, scale, shift]
    in_specs = [tile_spec, vec_spec, vec_spec]
    if shortcut is not None:
        xs, ws, ssc, shsc = shortcut
        cinp = xs.shape[1]
        args += [xs, ws, ssc, shsc]
        in_specs += [pl.BlockSpec((tm, cinp), lambda i: (i, 0)),
                     pl.BlockSpec((cinp, cp), lambda i: (0, 0)),
                     vec_spec, vec_spec]
        mode = "project"
    else:
        args.append(residual)
        in_specs.append(
            pl.BlockSpec((tm, cp), lambda i: (i + res_block_off, 0)))
        mode = "identity"
    return pl.pallas_call(
        functools.partial(_final_kernel, mode),
        grid_spec=pltpu.PrefetchScalarGridSpec(
            num_scalar_prefetch=0, grid=(n_m,),
            in_specs=in_specs, out_specs=tile_spec),
        out_shape=jax.ShapeDtypeStruct((mp, cp), out_dtype),
        compiler_params=pltpu.CompilerParams(
            dimension_semantics=("parallel",),
            vmem_limit_bytes=VMEM_LIMIT),
    )(*args)


# ----------------------------------------------------------------------------
# ResidualBlock forward (NHWC).  Training-mode BatchNorm (batch statistics),
# matching a fresh nn.BatchNorm2d in train() like the PyTorch module.
# ----------------------------------------------------------------------------
def residual_block_forward(x_nhwc, params, stride, out_dtype=jnp.float32):
    n, h, w, cin = x_nhwc.shape
    cout = params["w1"].shape[-1]
    ho = (h - 1) // stride + 1
    wo = (w - 1) // stride + 1
    hp, wp = ho + 2, wo + 2                 # canonical (padded) output grid
    mo = n * hp * wp
    m_true = n * ho * wo                    # BN divisor (valid pixels)
    tm = _choose_tm(mo)
    mo_up = _round_up(mo, tm)
    nt = mo_up // tm
    cpad = _round_up(cout, LANE)
    cinp = _round_up(cin, LANE)

    off, slab = _halo_geom(tm, wp)
    lb = _cdiv(off, tm)                     # lead blocks (zeros above data)
    lead = lb * tm
    tail_blocks = max(1, _cdiv(max(slab - tm - off, 0), tm))
    rtot = lead + mo_up + tail_blocks * tm  # row count of halo-DMA'd arrays

    mask_o = _valid_mask(n, ho, wo, mo_up)

    # ---- conv1 + BN1 partial stats ----------------------------------------
    a_x = None
    if stride == 1:
        a_x = _canonical_rows(x_nhwc, cinp, lead, rtot)
        w1 = _halo_weight(params["w1"], cinp, cpad)
        y1, ps1 = conv3x3_s1_with_stats(a_x, w1, mask_o, tm=tm, wp=wp,
                                        lead=lead, cinp=cinp, coutp=cpad,
                                        mo_up=mo_up)
    else:
        # TODO(synk): space-to-depth halo kernel for the strided conv.
        k1 = 9 * cin
        k1p = _round_up(k1, LANE)
        p1 = _im2col_canonical(x_nhwc, stride, ho, wo, k1p, mo_up)
        w1 = _pad2d(params["w1"].reshape(k1, cout).astype(jnp.bfloat16),
                    k1p, cpad)
        y1, ps1 = matmul_with_stats(p1, w1, tm=tm, emit_y=True)
    sc1, sh1 = _finalize_stats(ps1, m_true, params["g1"], params["b1"], cpad)

    # ---- BN1 apply + ReLU into conv2's canonical input layout -------------
    a_out1 = bn_relu_to_canonical(y1, sc1, sh1, mask_o, tm=tm, lb=lb, nt=nt,
                                  rtot=rtot)

    # ---- conv2 (stride 1, halo) + BN2 partial stats ------------------------
    w2 = _halo_weight(params["w2"], cpad, cpad)
    y2, ps2 = conv3x3_s1_with_stats(a_out1, w2, mask_o, tm=tm, wp=wp,
                                    lead=lead, cinp=cpad, coutp=cpad,
                                    mo_up=mo_up)
    sc2, sh2 = _finalize_stats(ps2, m_true, params["g2"], params["b2"], cpad)

    # ---- shortcut + fused final epilogue -----------------------------------
    projection = (stride != 1) or (cin != cout)
    if projection:
        xs = x_nhwc[:, ::stride, ::stride, :]
        xs = jnp.pad(xs, ((0, 0), (0, 2), (0, 2), (0, 0))).reshape(mo, cin)
        xs = jnp.pad(xs, ((0, mo_up - mo), (0, cinp - cin)))
        xs = xs.astype(jnp.bfloat16)
        ws = _pad2d(params["ws"].reshape(cin, cout).astype(jnp.bfloat16),
                    cinp, cpad)
        # Stats-only pass; the 1x1 matmul itself is recomputed (fused) in the
        # final kernel so the shortcut never round-trips HBM.
        _, ps_sc = matmul_with_stats(xs, ws, tm=tm, emit_y=False)
        ssc, shsc = _finalize_stats(ps_sc, m_true, params["gs"], params["bs"],
                                    cpad)
        out_full = final_apply(y2, sc2, sh2, tm=tm,
                               shortcut=(xs, ws, ssc, shsc),
                               out_dtype=out_dtype)
    else:
        # Identity residual re-uses the bf16 canonical input (block offset lb).
        out_full = final_apply(y2, sc2, sh2, tm=tm, residual=a_x,
                               res_block_off=lb, out_dtype=out_dtype)

    out = out_full[:mo].reshape(n, hp, wp, cpad)[:, :ho, :wo, :cout]
    return out


# ----------------------------------------------------------------------------
# Pure-JAX reference (for sanity check)
# ----------------------------------------------------------------------------
def _bn_ref(y, gamma, beta):
    mu = jnp.mean(y, axis=(0, 1, 2), keepdims=True)
    var = jnp.mean(jnp.square(y - mu), axis=(0, 1, 2), keepdims=True)
    return (y - mu) * jax.lax.rsqrt(var + EPS) * gamma + beta


def residual_block_ref(x_nhwc, params, stride):
    dn = ("NHWC", "HWIO", "NHWC")
    prec = jax.lax.Precision.HIGHEST
    y1 = jax.lax.conv_general_dilated(
        x_nhwc, params["w1"], (stride, stride), ((1, 1), (1, 1)),
        dimension_numbers=dn, precision=prec)
    y1 = jnp.maximum(_bn_ref(y1, params["g1"], params["b1"]), 0.0)
    y2 = jax.lax.conv_general_dilated(
        y1, params["w2"], (1, 1), ((1, 1), (1, 1)),
        dimension_numbers=dn, precision=prec)
    y2 = _bn_ref(y2, params["g2"], params["b2"])
    cin, cout = x_nhwc.shape[-1], params["w1"].shape[-1]
    if stride != 1 or cin != cout:
        ws = params["ws"].reshape(1, 1, cin, cout)
        sc = jax.lax.conv_general_dilated(
            x_nhwc, ws, (stride, stride), ((0, 0), (0, 0)),
            dimension_numbers=dn, precision=prec)
        sc = _bn_ref(sc, params["gs"], params["bs"])
    else:
        sc = x_nhwc
    return jnp.maximum(y2 + sc, 0.0)


# ----------------------------------------------------------------------------
if __name__ == "__main__":
    key = jax.random.PRNGKey(0)
    keys = jax.random.split(key, 16)
    fwd = jax.jit(residual_block_forward, static_argnums=(2,))

    # Case 1: projection shortcut (stride=2, Cin != Cout).
    N, Cin, Cout, H, W, stride = 2, 4, 8, 16, 16, 2
    params = {
        "w1": 0.1 * jax.random.normal(keys[0], (3, 3, Cin, Cout), jnp.float32),
        "g1": 1.0 + 0.1 * jax.random.normal(keys[1], (Cout,), jnp.float32),
        "b1": 0.1 * jax.random.normal(keys[2], (Cout,), jnp.float32),
        "w2": 0.1 * jax.random.normal(keys[3], (3, 3, Cout, Cout), jnp.float32),
        "g2": 1.0 + 0.1 * jax.random.normal(keys[4], (Cout,), jnp.float32),
        "b2": 0.1 * jax.random.normal(keys[5], (Cout,), jnp.float32),
        "ws": 0.1 * jax.random.normal(keys[6], (Cin, Cout), jnp.float32),
        "gs": 1.0 + 0.1 * jax.random.normal(keys[7], (Cout,), jnp.float32),
        "bs": 0.1 * jax.random.normal(keys[8], (Cout,), jnp.float32),
    }
    x_nchw = jax.random.normal(keys[9], (N, Cin, H, W), jnp.float32)
    x = jnp.transpose(x_nchw, (0, 2, 3, 1))
    out = jax.block_until_ready(fwd(x, params, stride))
    ref = residual_block_ref(x, params, stride)
    assert out.shape == ref.shape == (N, H // stride, W // stride, Cout)
    err = float(jnp.max(jnp.abs(out - ref)))
    assert jnp.allclose(out, ref, atol=3e-2, rtol=3e-2), f"max abs diff {err}"

    # Case 2: identity shortcut (stride=1, Cin == Cout).
    C2 = 8
    params2 = {
        "w1": 0.1 * jax.random.normal(keys[10], (3, 3, C2, C2), jnp.float32),
        "g1": 1.0 + 0.1 * jax.random.normal(keys[11], (C2,), jnp.float32),
        "b1": 0.1 * jax.random.normal(keys[12], (C2,), jnp.float32),
        "w2": 0.1 * jax.random.normal(keys[13], (3, 3, C2, C2), jnp.float32),
        "g2": 1.0 + 0.1 * jax.random.normal(keys[14], (C2,), jnp.float32),
        "b2": 0.1 * jax.random.normal(keys[15], (C2,), jnp.float32),
    }
    x2 = jax.random.normal(keys[9], (N, H, W, C2), jnp.float32)
    out2 = jax.block_until_ready(fwd(x2, params2, 1))
    ref2 = residual_block_ref(x2, params2, 1)
    err2 = float(jnp.max(jnp.abs(out2 - ref2)))
    assert jnp.allclose(out2, ref2, atol=3e-2, rtol=3e-2), f"max abs diff {err2}"

    print("KERNEL_OK")
</pallas_src>

<mosaic_0001>
module attributes {stable_mosaic.version = 11 : i64} {
  func.func @_matmul_stats_kernel(%arg0: i32, %arg1: memref<104x128xbf16, #tpu.memory_space<vmem>>, %arg2: memref<128x128xbf16, #tpu.memory_space<vmem>>, %arg3: memref<104x128xbf16, #tpu.memory_space<vmem>>, %arg4: memref<1x2x128xf32, #tpu.memory_space<vmem>>) attributes {dimension_semantics = [#tpu.dimension_semantics<parallel>], iteration_bounds = array<i64: 2>, scalar_prefetch = 0 : i64, scratch_operands = 0 : i64, tpu.core_type = #tpu.core_type<tc>, window_params = [{transform_indices = @transform_0, window_bounds = array<i64: 104, 128>}, {pipeline_mode = #tpu.pipeline_mode<synchronous>, transform_indices = @transform_1, window_bounds = array<i64: 128, 128>}, {transform_indices = @transform_2, window_bounds = array<i64: 104, 128>}, {transform_indices = @transform_3, window_bounds = array<i64: 1, 2, 128>}]} {
    %c0 = arith.constant 0 : index
    %c0_0 = arith.constant 0 : index
    %0 = vector.load %arg1[%c0, %c0_0] : memref<104x128xbf16, #tpu.memory_space<vmem>>, vector<104x128xbf16>
    %c0_1 = arith.constant 0 : index
    %c0_2 = arith.constant 0 : index
    %1 = vector.load %arg2[%c0_1, %c0_2] : memref<128x128xbf16, #tpu.memory_space<vmem>>, vector<128x128xbf16>
    %cst = arith.constant dense<0.000000e+00> : vector<104x128xf32>
    %2 = tpu.matmul %0, %1, %cst {dimension_numbers = #tpu.dot_dimension_numbers<[1], [0], [0], [1], [0, 0, 1, 1], [], []>} : vector<104x128xbf16>, vector<128x128xbf16>, vector<104x128xf32> -> vector<104x128xf32>
    %3 = arith.truncf %2 : vector<104x128xf32> to vector<104x128xbf16>
    %c0_3 = arith.constant 0 : index
    %c0_4 = arith.constant 0 : index
    %4 = vector.load %arg3[%c0_3, %c0_4] : memref<104x128xbf16, #tpu.memory_space<vmem>>, vector<104x128xbf16>
    tpu.vector_store %arg3[%c0_3, %c0_4], %3 {strides = array<i32>} : memref<104x128xbf16, #tpu.memory_space<vmem>>, vector<104x128xbf16>,
    %cst_5 = arith.constant dense<0.000000e+00> : vector<128xf32>
    %5 = vector.multi_reduction <add>, %2, %cst_5 [0] : vector<104x128xf32> to vector<128xf32>
    %6 = vector.shape_cast %5 : vector<128xf32> to vector<1x128xf32>
    %7 = arith.mulf %2, %2 : vector<104x128xf32>
    %cst_6 = arith.constant dense<0.000000e+00> : vector<128xf32>
    %8 = vector.multi_reduction <add>, %7, %cst_6 [0] : vector<104x128xf32> to vector<128xf32>
    %9 = vector.shape_cast %8 : vector<128xf32> to vector<1x128xf32>
    %10 = tpu.concatenate %6, %9 in 0 : vector<1x128xf32>, vector<1x128xf32> -> vector<2x128xf32>
    %c0_7 = arith.constant 0 : index
    %c0_8 = arith.constant 0 : index
    %c0_9 = arith.constant 0 : index
    %11 = vector.load %arg4[%c0_7, %c0_8, %c0_9] : memref<1x2x128xf32, #tpu.memory_space<vmem>>, vector<1x2x128xf32>
    %12 = vector.shape_cast %11 : vector<1x2x128xf32> to vector<2x128xf32>
    %13 = vector.shape_cast %10 : vector<2x128xf32> to vector<1x2x128xf32>
    tpu.vector_store %arg4[%c0_7, %c0_8, %c0_9], %13 {strides = array<i32>} : memref<1x2x128xf32, #tpu.memory_space<vmem>>, vector<1x2x128xf32>,
    return
  }
  func.func @transform_0(%arg0: i32) -> (i32, i32) {
    %c0_i32 = arith.constant 0 : i32
    %c0_i32_0 = arith.constant 0 : i32
    return %arg0, %c0_i32 : i32, i32
  }
  func.func @transform_1(%arg0: i32) -> (i32, i32) {
    %c0_i32 = arith.constant 0 : i32
    %c0_i32_0 = arith.constant 0 : i32
    %c0_i32_1 = arith.constant 0 : i32
    return %c0_i32, %c0_i32_0 : i32, i32
  }
  func.func @transform_2(%arg0: i32) -> (i32, i32) {
    %c0_i32 = arith.constant 0 : i32
    %c0_i32_0 = arith.constant 0 : i32
    return %arg0, %c0_i32 : i32, i32
  }
  func.func @transform_3(%arg0: i32) -> (i32, i32, i32) {
    %c0_i32 = arith.constant 0 : i32
    %c0_i32_0 = arith.constant 0 : i32
    %c0_i32_1 = arith.constant 0 : i32
    return %arg0, %c0_i32, %c0_i32_0 : i32, i32, i32
  }
}

module attributes {stable_mosaic.version = 11 : i64} {
  func.func @_bn_relu_mask_kernel(%arg0: i32, %arg1: memref<104x128xbf16, #tpu.memory_space<vmem>>, %arg2: memref<1x128xf32, #tpu.memory_space<vmem>>, %arg3: memref<1x128xf32, #tpu.memory_space<vmem>>, %arg4: memref<104x1xf32, #tpu.memory_space<vmem>>, %arg5: memref<104x128xbf16, #tpu.memory_space<vmem>>) attributes {dimension_semantics = [#tpu.dimension_semantics<parallel>], iteration_bounds = array<i64: 4>, scalar_prefetch = 0 : i64, scratch_operands = 0 : i64, tpu.core_type = #tpu.core_type<tc>, window_params = [{transform_indices = @transform_0, window_bounds = array<i64: 104, 128>}, {pipeline_mode = #tpu.pipeline_mode<synchronous>, transform_indices = @transform_1, window_bounds = array<i64: 1, 128>}, {pipeline_mode = #tpu.pipeline_mode<synchronous>, transform_indices = @transform_2, window_bounds = array<i64: 1, 128>}, {transform_indices = @transform_3, window_bounds = array<i64: 104, 1>}, {transform_indices = @transform_4, window_bounds = array<i64: 104, 128>}]} {
    %c1_i32 = arith.constant 1 : i32
    %0 = arith.cmpi sge, %arg0, %c1_i32 : i32
    %c3_i32 = arith.constant 3 : i32
    %1 = arith.cmpi slt, %arg0, %c3_i32 : i32
    %2 = arith.andi %0, %1 : i1
    %c0 = arith.constant 0 : index
    %c0_0 = arith.constant 0 : index
    %3 = vector.load %arg1[%c0, %c0_0] : memref<104x128xbf16, #tpu.memory_space<vmem>>, vector<104x128xbf16>
    %4 = arith.extf %3 : vector<104x128xbf16> to vector<104x128xf32>
    %c0_1 = arith.constant 0 : index
    %c0_2 = arith.constant 0 : index
    %5 = vector.load %arg2[%c0_1, %c0_2] : memref<1x128xf32, #tpu.memory_space<vmem>>, vector<1x128xf32>
    %6 = vector.broadcast %5 : vector<1x128xf32> to vector<104x128xf32>
    %7 = arith.mulf %4, %6 : vector<104x128xf32>
    %c0_3 = arith.constant 0 : index
    %c0_4 = arith.constant 0 : index
    %8 = vector.load %arg3[%c0_3, %c0_4] : memref<1x128xf32, #tpu.memory_space<vmem>>, vector<1x128xf32>
    %9 = vector.broadcast %8 : vector<1x128xf32> to vector<104x128xf32>
    %10 = arith.addf %7, %9 : vector<104x128xf32>
    %cst = arith.constant 0.000000e+00 : f32
    %11 = vector.broadcast %cst : f32 to vector<104x128xf32>
    %12 = arith.maximumf %10, %11 : vector<104x128xf32>
    %c0_5 = arith.constant 0 : index
    %c0_6 = arith.constant 0 : index
    %13 = vector.load %arg4[%c0_5, %c0_6] : memref<104x1xf32, #tpu.memory_space<vmem>>, vector<104x1xf32>
    %cst_7 = arith.constant 5.000000e-01 : f32
    %14 = vector.broadcast %cst_7 : f32 to vector<104x1xf32>
    %15 = arith.cmpf ogt, %13, %14 : vector<104x1xf32>
    %16 = vector.broadcast %2 : i1 to vector<104x1xi1>
    %17 = arith.andi %15, %16 : vector<104x1xi1>
    %cst_8 = arith.constant 0.000000e+00 : f32
    %18 = vector.shape_cast %17 : vector<104x1xi1> to vector<104x1xi1>
    %19 = vector.broadcast %18 : vector<104x1xi1> to vector<104x128xi1>
    %20 = vector.broadcast %cst_8 : f32 to vector<104x128xf32>
    %21 = arith.select %19, %12, %20 : vector<104x128xi1>, vector<104x128xf32>
    %22 = arith.truncf %21 : vector<104x128xf32> to vector<104x128xbf16>
    %c0_9 = arith.constant 0 : index
    %c0_10 = arith.constant 0 : index
    %23 = vector.load %arg5[%c0_9, %c0_10] : memref<104x128xbf16, #tpu.memory_space<vmem>>, vector<104x128xbf16>
    tpu.vector_store %arg5[%c0_9, %c0_10], %22 {strides = array<i32>} : memref<104x128xbf16, #tpu.memory_space<vmem>>, vector<104x128xbf16>,
    return
  }
  func.func @transform_0(%arg0: i32) -> (i32, i32) {
    %c1_i32 = arith.constant 1 : i32
    %0 = arith.subi %arg0, %c1_i32 : i32
    %c0_i32 = arith.constant 0 : i32
    %c1_i32_0 = arith.constant 1 : i32
    %1 = arith.maxsi %c0_i32, %0 : i32
    %2 = arith.minsi %c1_i32_0, %1 : i32
    %c0_i32_1 = arith.constant 0 : i32
    %c0_i32_2 = arith.constant 0 : i32
    return %2, %c0_i32_1 : i32, i32
  }
  func.func @transform_1(%arg0: i32) -> (i32, i32) {
    %c0_i32 = arith.constant 0 : i32
    %c0_i32_0 = arith.constant 0 : i32
    %c0_i32_1 = arith.constant 0 : i32
    return %c0_i32, %c0_i32_0 : i32, i32
  }
  func.func @transform_2(%arg0: i32) -> (i32, i32) {
    %c0_i32 = arith.constant 0 : i32
    %c0_i32_0 = arith.constant 0 : i32
    %c0_i32_1 = arith.constant 0 : i32
    return %c0_i32, %c0_i32_0 : i32, i32
  }
  func.func @transform_3(%arg0: i32) -> (i32, i32) {
    %c1_i32 = arith.constant 1 : i32
    %0 = arith.subi %arg0, %c1_i32 : i32
    %c0_i32 = arith.constant 0 : i32
    %c1_i32_0 = arith.constant 1 : i32
    %1 = arith.maxsi %c0_i32, %0 : i32
    %2 = arith.minsi %c1_i32_0, %1 : i32
    %c0_i32_1 = arith.constant 0 : i32
    %c0_i32_2 = arith.constant 0 : i32
    return %2, %c0_i32_1 : i32, i32
  }
  func.func @transform_4(%arg0: i32) -> (i32, i32) {
    %c0_i32 = arith.constant 0 : i32
    %c0_i32_0 = arith.constant 0 : i32
    return %arg0, %c0_i32 : i32, i32
  }
}

module attributes {stable_mosaic.version = 11 : i64} {
  func.func @_conv3x3_halo_kernel(%arg0: i32, %arg1: memref<104x1xf32, #tpu.memory_space<vmem>>, %arg2: memref<1152x128xbf16, #tpu.memory_space<vmem>>, %arg3: memref<416x128xbf16, #tpu.memory_space<any>>, %arg4: memref<104x128xbf16, #tpu.memory_space<vmem>>, %arg5: memref<1x2x128xf32, #tpu.memory_space<vmem>>, %arg6: memref<2x136x128xbf16, #tpu.memory_space<vmem>>, %arg7: memref<2x!tpu.dma_semaphore, #tpu.memory_space<semaphore_mem>>) attributes {dimension_semantics = [#tpu.dimension_semantics<arbitrary>], iteration_bounds = array<i64: 2>, scalar_prefetch = 0 : i64, scratch_operands = 2 : i64, tpu.core_type = #tpu.core_type<tc>, window_params = [{transform_indices = @transform_0, window_bounds = array<i64: 104, 1>}, {pipeline_mode = #tpu.pipeline_mode<synchronous>, transform_indices = @transform_1, window_bounds = array<i64: 1152, 128>}, {}, {transform_indices = @transform_3, window_bounds = array<i64: 104, 128>}, {transform_indices = @transform_4, window_bounds = array<i64: 1, 2, 128>}]} {
    %c0_i32 = arith.constant 0 : i32
    %0 = arith.cmpi eq, %arg0, %c0_i32 : i32
    %1 = arith.extui %0 : i1 to i32
    %c0_i32_0 = arith.constant 0 : i32
    %2 = arith.cmpi ne, %1, %c0_i32_0 : i32
    scf.if %2 {
      %c0_i32_61 = arith.constant 0 : i32
      %c0_i32_62 = arith.constant 0 : i32
      %c88_i32_63 = arith.constant 88 : i32
      %c0_i32_64 = arith.constant 0 : i32
      %84 = tpu.memref_slice %arg3[%c88_i32_63, %c0_i32_64] : memref<416x128xbf16, #tpu.memory_space<any>> -> memref<136x128xbf16, #tpu.memory_space<any>>
      %c0_i32_65 = arith.constant 0 : i32
      %c0_i32_66 = arith.constant 0 : i32
      %85 = tpu.memref_slice %arg6[%c0_i32_61, %c0_i32_65, %c0_i32_66] : memref<2x136x128xbf16, #tpu.memory_space<vmem>> -> memref<1x136x128xbf16, #tpu.memory_space<vmem>>
      %86 = tpu.memref_squeeze %85 : memref<1x136x128xbf16, #tpu.memory_space<vmem>> -> memref<136x128xbf16, #tpu.memory_space<vmem>>
      %87 = tpu.memref_slice %arg7[%c0_i32_62] : memref<2x!tpu.dma_semaphore, #tpu.memory_space<semaphore_mem>> -> memref<1x!tpu.dma_semaphore, #tpu.memory_space<semaphore_mem>>
      %88 = tpu.memref_squeeze %87 : memref<1x!tpu.dma_semaphore, #tpu.memory_space<semaphore_mem>> -> memref<!tpu.dma_semaphore, #tpu.memory_space<semaphore_mem>>
      tpu.enqueue_dma source(%84 : memref<136x128xbf16, #tpu.memory_space<any>>) target(%86 : memref<136x128xbf16, #tpu.memory_space<vmem>>) target_semaphore(%88 : memref<!tpu.dma_semaphore, #tpu.memory_space<semaphore_mem>>)
    } else {
    }
    %c2_i32 = arith.constant 2 : i32
    %3 = arith.remsi %arg0, %c2_i32 : i32
    %c88_i32 = arith.constant 88 : i32
    %c0_i32_1 = arith.constant 0 : i32
    %4 = tpu.memref_slice %arg3[%c88_i32, %c0_i32_1] : memref<416x128xbf16, #tpu.memory_space<any>> -> memref<136x128xbf16, #tpu.memory_space<any>>
    %c0_i32_2 = arith.constant 0 : i32
    %c0_i32_3 = arith.constant 0 : i32
    %5 = tpu.memref_slice %arg6[%3, %c0_i32_2, %c0_i32_3] : memref<2x136x128xbf16, #tpu.memory_space<vmem>> -> memref<1x136x128xbf16, #tpu.memory_space<vmem>>
    %6 = tpu.memref_squeeze %5 : memref<1x136x128xbf16, #tpu.memory_space<vmem>> -> memref<136x128xbf16, #tpu.memory_space<vmem>>
    %7 = tpu.memref_slice %arg7[%3] : memref<2x!tpu.dma_semaphore, #tpu.memory_space<semaphore_mem>> -> memref<1x!tpu.dma_semaphore, #tpu.memory_space<semaphore_mem>>
    %8 = tpu.memref_squeeze %7 : memref<1x!tpu.dma_semaphore, #tpu.memory_space<semaphore_mem>> -> memref<!tpu.dma_semaphore, #tpu.memory_space<semaphore_mem>>
    tpu.wait_dma2 semaphore(%8 : memref<!tpu.dma_semaphore, #tpu.memory_space<semaphore_mem>>) src(%4 : memref<136x128xbf16, #tpu.memory_space<any>>) dst(%6 : memref<136x128xbf16, #tpu.memory_space<vmem>>)
    %c1_i32 = arith.constant 1 : i32
    %9 = arith.addi %arg0, %c1_i32 : i32
    %c2_i32_4 = arith.constant 2 : i32
    %10 = arith.cmpi slt, %9, %c2_i32_4 : i32
    %11 = arith.extui %10 : i1 to i32
    %c0_i32_5 = arith.constant 0 : i32
    %12 = arith.cmpi ne, %11, %c0_i32_5 : i32
    scf.if %12 {
      %c1_i32_61 = arith.constant 1 : i32
      %84 = arith.addi %arg0, %c1_i32_61 : i32
      %c1_i32_62 = arith.constant 1 : i32
      %85 = arith.subi %c1_i32_62, %3 : i32
      %c104_i32 = arith.constant 104 : i32
      %86 = arith.muli %84, %c104_i32 : i32
      %c88_i32_63 = arith.constant 88 : i32
      %87 = arith.addi %86, %c88_i32_63 : i32
      %c0_i32_64 = arith.constant 0 : i32
      %88 = tpu.memref_slice %arg3[%87, %c0_i32_64] : memref<416x128xbf16, #tpu.memory_space<any>> -> memref<136x128xbf16, #tpu.memory_space<any>>
      %c0_i32_65 = arith.constant 0 : i32
      %c0_i32_66 = arith.constant 0 : i32
      %89 = tpu.memref_slice %arg6[%85, %c0_i32_65, %c0_i32_66] : memref<2x136x128xbf16, #tpu.memory_space<vmem>> -> memref<1x136x128xbf16, #tpu.memory_space<vmem>>
      %90 = tpu.memref_squeeze %89 : memref<1x136x128xbf16, #tpu.memory_space<vmem>> -> memref<136x128xbf16, #tpu.memory_space<vmem>>
      %91 = tpu.memref_slice %arg7[%85] : memref<2x!tpu.dma_semaphore, #tpu.memory_space<semaphore_mem>> -> memref<1x!tpu.dma_semaphore, #tpu.memory_space<semaphore_mem>>
      %92 = tpu.memref_squeeze %91 : memref<1x!tpu.dma_semaphore, #tpu.memory_space<semaphore_mem>> -> memref<!tpu.dma_semaphore, #tpu.memory_space<semaphore_mem>>
      tpu.enqueue_dma source(%88 : memref<136x128xbf16, #tpu.memory_space<any>>) target(%90 : memref<136x128xbf16, #tpu.memory_space<vmem>>) target_semaphore(%92 : memref<!tpu.dma_semaphore, #tpu.memory_space<semaphore_mem>>)
    } else {
    }
    %c0_i32_6 = arith.constant 0 : i32
    %c0_i32_7 = arith.constant 0 : i32
    %13 = tpu.memref_slice %arg6[%3, %c0_i32_6, %c0_i32_7] : memref<2x136x128xbf16, #tpu.memory_space<vmem>> -> memref<1x136x128xbf16, #tpu.memory_space<vmem>>
    %14 = tpu.memref_squeeze %13 : memref<1x136x128xbf16, #tpu.memory_space<vmem>> -> memref<136x128xbf16, #tpu.memory_space<vmem>>
    %c5 = arith.constant 5 : index
    %c0 = arith.constant 0 : index
    %15 = vector.load %14[%c5, %c0] : memref<136x128xbf16, #tpu.memory_space<vmem>>, vector<104x128xbf16>
    %c0_8 = arith.constant 0 : index
    %c0_9 = arith.constant 0 : index
    %16 = vector.load %arg2[%c0_8, %c0_9] : memref<1152x128xbf16, #tpu.memory_space<vmem>>, vector<128x128xbf16>
    %cst = arith.constant dense<0.000000e+00> : vector<104x128xf32>
    %17 = tpu.matmul %15, %16, %cst {dimension_numbers = #tpu.dot_dimension_numbers<[1], [0], [0], [1], [0, 0, 1, 1], [], []>} : vector<104x128xbf16>, vector<128x128xbf16>, vector<104x128xf32> -> vector<104x128xf32>
    %c0_i32_10 = arith.constant 0 : i32
    %c0_i32_11 = arith.constant 0 : i32
    %18 = tpu.memref_slice %arg6[%3, %c0_i32_10, %c0_i32_11] : memref<2x136x128xbf16, #tpu.memory_space<vmem>> -> memref<1x136x128xbf16, #tpu.memory_space<vmem>>
    %19 = tpu.memref_squeeze %18 : memref<1x136x128xbf16, #tpu.memory_space<vmem>> -> memref<136x128xbf16, #tpu.memory_space<vmem>>
    %c6 = arith.constant 6 : index
    %c0_12 = arith.constant 0 : index
    %20 = vector.load %19[%c6, %c0_12] : memref<136x128xbf16, #tpu.memory_space<vmem>>, vector<104x128xbf16>
    %c128 = arith.constant 128 : index
    %c0_13 = arith.constant 0 : index
    %21 = vector.load %arg2[%c128, %c0_13] : memref<1152x128xbf16, #tpu.memory_space<vmem>>, vector<128x128xbf16>
    %cst_14 = arith.constant dense<0.000000e+00> : vector<104x128xf32>
    %22 = tpu.matmul %20, %21, %cst_14 {dimension_numbers = #tpu.dot_dimension_numbers<[1], [0], [0], [1], [0, 0, 1, 1], [], []>} : vector<104x128xbf16>, vector<128x128xbf16>, vector<104x128xf32> -> vector<104x128xf32>
    %23 = arith.addf %17, %22 : vector<104x128xf32>
    %c0_i32_15 = arith.constant 0 : i32
    %c0_i32_16 = arith.constant 0 : i32
    %24 = tpu.memref_slice %arg6[%3, %c0_i32_15, %c0_i32_16] : memref<2x136x128xbf16, #tpu.memory_space<vmem>> -> memref<1x136x128xbf16, #tpu.memory_space<vmem>>
    %25 = tpu.memref_squeeze %24 : memref<1x136x128xbf16, #tpu.memory_space<vmem>> -> memref<136x128xbf16, #tpu.memory_space<vmem>>
    %c7 = arith.constant 7 : index
    %c0_17 = arith.constant 0 : index
    %26 = vector.load %25[%c7, %c0_17] : memref<136x128xbf16, #tpu.memory_space<vmem>>, vector<104x128xbf16>
    %c256 = arith.constant 256 : index
    %c0_18 = arith.constant 0 : index
    %27 = vector.load %arg2[%c256, %c0_18] : memref<1152x128xbf16, #tpu.memory_space<vmem>>, vector<128x128xbf16>
    %cst_19 = arith.constant dense<0.000000e+00> : vector<104x128xf32>
    %28 = tpu.matmul %26, %27, %cst_19 {dimension_numbers = #tpu.dot_dimension_numbers<[1], [0], [0], [1], [0, 0, 1, 1], [], []>} : vector<104x128xbf16>, vector<128x128xbf16>, vector<104x128xf32> -> vector<104x128xf32>
    %29 = arith.addf %23, %28 : vector<104x128xf32>
    %c0_i32_20 = arith.constant 0 : i32
    %c0_i32_21 = arith.constant 0 : i32
    %30 = tpu.memref_slice %arg6[%3, %c0_i32_20, %c0_i32_21] : memref<2x136x128xbf16, #tpu.memory_space<vmem>> -> memref<1x136x128xbf16, #tpu.memory_space<vmem>>
    %31 = tpu.memref_squeeze %30 : memref<1x136x128xbf16, #tpu.memory_space<vmem>> -> memref<136x128xbf16, #tpu.memory_space<vmem>>
    %c15 = arith.constant 15 : index
    %c0_22 = arith.constant 0 : index
    %32 = vector.load %31[%c15, %c0_22] : memref<136x128xbf16, #tpu.memory_space<vmem>>, vector<104x128xbf16>
    %c384 = arith.constant 384 : index
    %c0_23 = arith.constant 0 : index
    %33 = vector.load %arg2[%c384, %c0_23] : memref<1152x128xbf16, #tpu.memory_space<vmem>>, vector<128x128xbf16>
    %cst_24 = arith.constant dense<0.000000e+00> : vector<104x128xf32>
    %34 = tpu.matmul %32, %33, %cst_24 {dimension_numbers = #tpu.dot_dimension_numbers<[1], [0], [0], [1], [0, 0, 1, 1], [], []>} : vector<104x128xbf16>, vector<128x128xbf16>, vector<104x128xf32> -> vector<104x128xf32>
    %35 = arith.addf %29, %34 : vector<104x128xf32>
    %c0_i32_25 = arith.constant 0 : i32
    %c0_i32_26 = arith.constant 0 : i32
    %36 = tpu.memref_slice %arg6[%3, %c0_i32_25, %c0_i32_26] : memref<2x136x128xbf16, #tpu.memory_space<vmem>> -> memref<1x136x128xbf16, #tpu.memory_space<vmem>>
    %37 = tpu.memref_squeeze %36 : memref<1x136x128xbf16, #tpu.memory_space<vmem>> -> memref<136x128xbf16, #tpu.memory_space<vmem>>
    %c16 = arith.constant 16 : index
    %c0_27 = arith.constant 0 : index
    %38 = vector.load %37[%c16, %c0_27] : memref<136x128xbf16, #tpu.memory_space<vmem>>, vector<104x128xbf16>
    %c512 = arith.constant 512 : index
    %c0_28 = arith.constant 0 : index
    %39 = vector.load %arg2[%c512, %c0_28] : memref<1152x128xbf16, #tpu.memory_space<vmem>>, vector<128x128xbf16>
    %cst_29 = arith.constant dense<0.000000e+00> : vector<104x128xf32>
    %40 = tpu.matmul %38, %39, %cst_29 {dimension_numbers = #tpu.dot_dimension_numbers<[1], [0], [0], [1], [0, 0, 1, 1], [], []>} : vector<104x128xbf16>, vector<128x128xbf16>, vector<104x128xf32> -> vector<104x128xf32>
    %41 = arith.addf %35, %40 : vector<104x128xf32>
    %c0_i32_30 = arith.constant 0 : i32
    %c0_i32_31 = arith.constant 0 : i32
    %42 = tpu.memref_slice %arg6[%3, %c0_i32_30, %c0_i32_31] : memref<2x136x128xbf16, #tpu.memory_space<vmem>> -> memref<1x136x128xbf16, #tpu.memory_space<vmem>>
    %43 = tpu.memref_squeeze %42 : memref<1x136x128xbf16, #tpu.memory_space<vmem>> -> memref<136x128xbf16, #tpu.memory_space<vmem>>
    %c17 = arith.constant 17 : index
    %c0_32 = arith.constant 0 : index
    %44 = vector.load %43[%c17, %c0_32] : memref<136x128xbf16, #tpu.memory_space<vmem>>, vector<104x128xbf16>
    %c640 = arith.constant 640 : index
    %c0_33 = arith.constant 0 : index
    %45 = vector.load %arg2[%c640, %c0_33] : memref<1152x128xbf16, #tpu.memory_space<vmem>>, vector<128x128xbf16>
    %cst_34 = arith.constant dense<0.000000e+00> : vector<104x128xf32>
    %46 = tpu.matmul %44, %45, %cst_34 {dimension_numbers = #tpu.dot_dimension_numbers<[1], [0], [0], [1], [0, 0, 1, 1], [], []>} : vector<104x128xbf16>, vector<128x128xbf16>, vector<104x128xf32> -> vector<104x128xf32>
    %47 = arith.addf %41, %46 : vector<104x128xf32>
    %c0_i32_35 = arith.constant 0 : i32
    %c0_i32_36 = arith.constant 0 : i32
    %48 = tpu.memref_slice %arg6[%3, %c0_i32_35, %c0_i32_36] : memref<2x136x128xbf16, #tpu.memory_space<vmem>> -> memref<1x136x128xbf16, #tpu.memory_space<vmem>>
    %49 = tpu.memref_squeeze %48 : memref<1x136x128xbf16, #tpu.memory_space<vmem>> -> memref<136x128xbf16, #tpu.memory_space<vmem>>
    %c25 = arith.constant 25 : index
    %c0_37 = arith.constant 0 : index
    %50 = vector.load %49[%c25, %c0_37] : memref<136x128xbf16, #tpu.memory_space<vmem>>, vector<104x128xbf16>
    %c768 = arith.constant 768 : index
    %c0_38 = arith.constant 0 : index
    %51 = vector.load %arg2[%c768, %c0_38] : memref<1152x128xbf16, #tpu.memory_space<vmem>>, vector<128x128xbf16>
    %cst_39 = arith.constant dense<0.000000e+00> : vector<104x128xf32>
    %52 = tpu.matmul %50, %51, %cst_39 {dimension_numbers = #tpu.dot_dimension_numbers<[1], [0], [0], [1], [0, 0, 1, 1], [], []>} : vector<104x128xbf16>, vector<128x128xbf16>, vector<104x128xf32> -> vector<104x128xf32>
    %53 = arith.addf %47, %52 : vector<104x128xf32>
    %c0_i32_40 = arith.constant 0 : i32
    %c0_i32_41 = arith.constant 0 : i32
    %54 = tpu.memref_slice %arg6[%3, %c0_i32_40, %c0_i32_41] : memref<2x136x128xbf16, #tpu.memory_space<vmem>> -> memref<1x136x128xbf16, #tpu.memory_space<vmem>>
    %55 = tpu.memref_squeeze %54 : memref<1x136x128xbf16, #tpu.memory_space<vmem>> -> memref<136x128xbf16, #tpu.memory_space<vmem>>
    %c26 = arith.constant 26 : index
    %c0_42 = arith.constant 0 : index
    %56 = vector.load %55[%c26, %c0_42] : memref<136x128xbf16, #tpu.memory_space<vmem>>, vector<104x128xbf16>
    %c896 = arith.constant 896 : index
    %c0_43 = arith.constant 0 : index
    %57 = vector.load %arg2[%c896, %c0_43] : memref<1152x128xbf16, #tpu.memory_space<vmem>>, vector<128x128xbf16>
    %cst_44 = arith.constant dense<0.000000e+00> : vector<104x128xf32>
    %58 = tpu.matmul %56, %57, %cst_44 {dimension_numbers = #tpu.dot_dimension_numbers<[1], [0], [0], [1], [0, 0, 1, 1], [], []>} : vector<104x128xbf16>, vector<128x128xbf16>, vector<104x128xf32> -> vector<104x128xf32>
    %59 = arith.addf %53, %58 : vector<104x128xf32>
    %c0_i32_45 = arith.constant 0 : i32
    %c0_i32_46 = arith.constant 0 : i32
    %60 = tpu.memref_slice %arg6[%3, %c0_i32_45, %c0_i32_46] : memref<2x136x128xbf16, #tpu.memory_space<vmem>> -> memref<1x136x128xbf16, #tpu.memory_space<vmem>>
    %61 = tpu.memref_squeeze %60 : memref<1x136x128xbf16, #tpu.memory_space<vmem>> -> memref<136x128xbf16, #tpu.memory_space<vmem>>
    %c27 = arith.constant 27 : index
    %c0_47 = arith.constant 0 : index
    %62 = vector.load %61[%c27, %c0_47] : memref<136x128xbf16, #tpu.memory_space<vmem>>, vector<104x128xbf16>
    %c1024 = arith.constant 1024 : index
    %c0_48 = arith.constant 0 : index
    %63 = vector.load %arg2[%c1024, %c0_48] : memref<1152x128xbf16, #tpu.memory_space<vmem>>, vector<128x128xbf16>
    %cst_49 = arith.constant dense<0.000000e+00> : vector<104x128xf32>
    %64 = tpu.matmul %62, %63, %cst_49 {dimension_numbers = #tpu.dot_dimension_numbers<[1], [0], [0], [1], [0, 0, 1, 1], [], []>} : vector<104x128xbf16>, vector<128x128xbf16>, vector<104x128xf32> -> vector<104x128xf32>
    %65 = arith.addf %59, %64 : vector<104x128xf32>
    %66 = arith.truncf %65 : vector<104x128xf32> to vector<104x128xbf16>
    %c0_50 = arith.constant 0 : index
    %c0_51 = arith.constant 0 : index
    %67 = vector.load %arg4[%c0_50, %c0_51] : memref<104x128xbf16, #tpu.memory_space<vmem>>, vector<104x128xbf16>
    tpu.vector_store %arg4[%c0_50, %c0_51], %66 {strides = array<i32>} : memref<104x128xbf16, #tpu.memory_space<vmem>>, vector<104x128xbf16>,
    %c0_52 = arith.constant 0 : index
    %c0_53 = arith.constant 0 : index
    %68 = vector.load %arg1[%c0_52, %c0_53] : memref<104x1xf32, #tpu.memory_space<vmem>>, vector<104x1xf32>
    %cst_54 = arith.constant 5.000000e-01 : f32
    %69 = vector.broadcast %cst_54 : f32 to vector<104x1xf32>
    %70 = arith.cmpf ogt, %68, %69 : vector<104x1xf32>
    %cst_55 = arith.constant 0.000000e+00 : f32
    %71 = vector.shape_cast %70 : vector<104x1xi1> to vector<104x1xi1>
    %72 = vector.broadcast %71 : vector<104x1xi1> to vector<104x128xi1>
    %73 = vector.broadcast %cst_55 : f32 to vector<104x128xf32>
    %74 = arith.select %72, %65, %73 : vector<104x128xi1>, vector<104x128xf32>
    %cst_56 = arith.constant dense<0.000000e+00> : vector<128xf32>
    %75 = vector.multi_reduction <add>, %74, %cst_56 [0] : vector<104x128xf32> to vector<128xf32>
    %76 = vector.shape_cast %75 : vector<128xf32> to vector<1x128xf32>
    %77 = arith.mulf %74, %74 : vector<104x128xf32>
    %cst_57 = arith.constant dense<0.000000e+00> : vector<128xf32>
    %78 = vector.multi_reduction <add>, %77, %cst_57 [0] : vector<104x128xf32> to vector<128xf32>
    %79 = vector.shape_cast %78 : vector<128xf32> to vector<1x128xf32>
    %80 = tpu.concatenate %76, %79 in 0 : vector<1x128xf32>, vector<1x128xf32> -> vector<2x128xf32>
    %c0_58 = arith.constant 0 : index
    %c0_59 = arith.constant 0 : index
    %c0_60 = arith.constant 0 : index
    %81 = vector.load %arg5[%c0_58, %c0_59, %c0_60] : memref<1x2x128xf32, #tpu.memory_space<vmem>>, vector<1x2x128xf32>
    %82 = vector.shape_cast %81 : vector<1x2x128xf32> to vector<2x128xf32>
    %83 = vector.shape_cast %80 : vector<2x128xf32> to vector<1x2x128xf32>
    tpu.vector_store %arg5[%c0_58, %c0_59, %c0_60], %83 {strides = array<i32>} : memref<1x2x128xf32, #tpu.memory_space<vmem>>, vector<1x2x128xf32>,
    return
  }
  func.func @transform_0(%arg0: i32) -> (i32, i32) {
    %c0_i32 = arith.constant 0 : i32
    %c0_i32_0 = arith.constant 0 : i32
    return %arg0, %c0_i32 : i32, i32
  }
  func.func @transform_1(%arg0: i32) -> (i32, i32) {
    %c0_i32 = arith.constant 0 : i32
    %c0_i32_0 = arith.constant 0 : i32
    %c0_i32_1 = arith.constant 0 : i32
    return %c0_i32, %c0_i32_0 : i32, i32
  }
  func.func @transform_3(%arg0: i32) -> (i32, i32) {
    %c0_i32 = arith.constant 0 : i32
    %c0_i32_0 = arith.constant 0 : i32
    return %arg0, %c0_i32 : i32, i32
  }
  func.func @transform_4(%arg0: i32) -> (i32, i32, i32) {
    %c0_i32 = arith.constant 0 : i32
    %c0_i32_0 = arith.constant 0 : i32
    %c0_i32_1 = arith.constant 0 : i32
    return %arg0, %c0_i32, %c0_i32_0 : i32, i32, i32
  }
}

module attributes {stable_mosaic.version = 11 : i64} {
  func.func @_matmul_stats_only_kernel(%arg0: i32, %arg1: memref<104x128xbf16, #tpu.memory_space<vmem>>, %arg2: memref<128x128xbf16, #tpu.memory_space<vmem>>, %arg3: memref<1x2x128xf32, #tpu.memory_space<vmem>>) attributes {dimension_semantics = [#tpu.dimension_semantics<parallel>], iteration_bounds = array<i64: 2>, scalar_prefetch = 0 : i64, scratch_operands = 0 : i64, tpu.core_type = #tpu.core_type<tc>, window_params = [{transform_indices = @transform_0, window_bounds = array<i64: 104, 128>}, {pipeline_mode = #tpu.pipeline_mode<synchronous>, transform_indices = @transform_1, window_bounds = array<i64: 128, 128>}, {transform_indices = @transform_2, window_bounds = array<i64: 1, 2, 128>}]} {
    %c0 = arith.constant 0 : index
    %c0_0 = arith.constant 0 : index
    %0 = vector.load %arg1[%c0, %c0_0] : memref<104x128xbf16, #tpu.memory_space<vmem>>, vector<104x128xbf16>
    %c0_1 = arith.constant 0 : index
    %c0_2 = arith.constant 0 : index
    %1 = vector.load %arg2[%c0_1, %c0_2] : memref<128x128xbf16, #tpu.memory_space<vmem>>, vector<128x128xbf16>
    %cst = arith.constant dense<0.000000e+00> : vector<104x128xf32>
    %2 = tpu.matmul %0, %1, %cst {dimension_numbers = #tpu.dot_dimension_numbers<[1], [0], [0], [1], [0, 0, 1, 1], [], []>} : vector<104x128xbf16>, vector<128x128xbf16>, vector<104x128xf32> -> vector<104x128xf32>
    %cst_3 = arith.constant dense<0.000000e+00> : vector<128xf32>
    %3 = vector.multi_reduction <add>, %2, %cst_3 [0] : vector<104x128xf32> to vector<128xf32>
    %4 = vector.shape_cast %3 : vector<128xf32> to vector<1x128xf32>
    %5 = arith.mulf %2, %2 : vector<104x128xf32>
    %cst_4 = arith.constant dense<0.000000e+00> : vector<128xf32>
    %6 = vector.multi_reduction <add>, %5, %cst_4 [0] : vector<104x128xf32> to vector<128xf32>
    %7 = vector.shape_cast %6 : vector<128xf32> to vector<1x128xf32>
    %8 = tpu.concatenate %4, %7 in 0 : vector<1x128xf32>, vector<1x128xf32> -> vector<2x128xf32>
    %c0_5 = arith.constant 0 : index
    %c0_6 = arith.constant 0 : index
    %c0_7 = arith.constant 0 : index
    %9 = vector.load %arg3[%c0_5, %c0_6, %c0_7] : memref<1x2x128xf32, #tpu.memory_space<vmem>>, vector<1x2x128xf32>
    %10 = vector.shape_cast %9 : vector<1x2x128xf32> to vector<2x128xf32>
    %11 = vector.shape_cast %8 : vector<2x128xf32> to vector<1x2x128xf32>
    tpu.vector_store %arg3[%c0_5, %c0_6, %c0_7], %11 {strides = array<i32>} : memref<1x2x128xf32, #tpu.memory_space<vmem>>, vector<1x2x128xf32>,
    return
  }
  func.func @transform_0(%arg0: i32) -> (i32, i32) {
    %c0_i32 = arith.constant 0 : i32
    %c0_i32_0 = arith.constant 0 : i32
    return %arg0, %c0_i32 : i32, i32
  }
  func.func @transform_1(%arg0: i32) -> (i32, i32) {
    %c0_i32 = arith.constant 0 : i32
    %c0_i32_0 = arith.constant 0 : i32
    %c0_i32_1 = arith.constant 0 : i32
    return %c0_i32, %c0_i32_0 : i32, i32
  }
  func.func @transform_2(%arg0: i32) -> (i32, i32, i32) {
    %c0_i32 = arith.constant 0 : i32
    %c0_i32_0 = arith.constant 0 : i32
    %c0_i32_1 = arith.constant 0 : i32
    return %arg0, %c0_i32, %c0_i32_0 : i32, i32, i32
  }
}

module attributes {stable_mosaic.version = 11 : i64} {
  func.func @_final_kernel(%arg0: i32, %arg1: memref<104x128xbf16, #tpu.memory_space<vmem>>, %arg2: memref<1x128xf32, #tpu.memory_space<vmem>>, %arg3: memref<1x128xf32, #tpu.memory_space<vmem>>, %arg4: memref<104x128xbf16, #tpu.memory_space<vmem>>, %arg5: memref<128x128xbf16, #tpu.memory_space<vmem>>, %arg6: memref<1x128xf32, #tpu.memory_space<vmem>>, %arg7: memref<1x128xf32, #tpu.memory_space<vmem>>, %arg8: memref<104x128xf32, #tpu.memory_space<vmem>>) attributes {dimension_semantics = [#tpu.dimension_semantics<parallel>], iteration_bounds = array<i64: 2>, scalar_prefetch = 0 : i64, scratch_operands = 0 : i64, tpu.core_type = #tpu.core_type<tc>, window_params = [{transform_indices = @transform_0, window_bounds = array<i64: 104, 128>}, {pipeline_mode = #tpu.pipeline_mode<synchronous>, transform_indices = @transform_1, window_bounds = array<i64: 1, 128>}, {pipeline_mode = #tpu.pipeline_mode<synchronous>, transform_indices = @transform_2, window_bounds = array<i64: 1, 128>}, {transform_indices = @transform_3, window_bounds = array<i64: 104, 128>}, {pipeline_mode = #tpu.pipeline_mode<synchronous>, transform_indices = @transform_4, window_bounds = array<i64: 128, 128>}, {pipeline_mode = #tpu.pipeline_mode<synchronous>, transform_indices = @transform_5, window_bounds = array<i64: 1, 128>}, {pipeline_mode = #tpu.pipeline_mode<synchronous>, transform_indices = @transform_6, window_bounds = array<i64: 1, 128>}, {transform_indices = @transform_7, window_bounds = array<i64: 104, 128>}]} {
    %c0 = arith.constant 0 : index
    %c0_0 = arith.constant 0 : index
    %0 = vector.load %arg1[%c0, %c0_0] : memref<104x128xbf16, #tpu.memory_space<vmem>>, vector<104x128xbf16>
    %1 = arith.extf %0 : vector<104x128xbf16> to vector<104x128xf32>
    %c0_1 = arith.constant 0 : index
    %c0_2 = arith.constant 0 : index
    %2 = vector.load %arg2[%c0_1, %c0_2] : memref<1x128xf32, #tpu.memory_space<vmem>>, vector<1x128xf32>
    %3 = vector.broadcast %2 : vector<1x128xf32> to vector<104x128xf32>
    %4 = arith.mulf %1, %3 : vector<104x128xf32>
    %c0_3 = arith.constant 0 : index
    %c0_4 = arith.constant 0 : index
    %5 = vector.load %arg3[%c0_3, %c0_4] : memref<1x128xf32, #tpu.memory_space<vmem>>, vector<1x128xf32>
    %6 = vector.broadcast %5 : vector<1x128xf32> to vector<104x128xf32>
    %7 = arith.addf %4, %6 : vector<104x128xf32>
    %c0_5 = arith.constant 0 : index
    %c0_6 = arith.constant 0 : index
    %8 = vector.load %arg4[%c0_5, %c0_6] : memref<104x128xbf16, #tpu.memory_space<vmem>>, vector<104x128xbf16>
    %c0_7 = arith.constant 0 : index
    %c0_8 = arith.constant 0 : index
    %9 = vector.load %arg5[%c0_7, %c0_8] : memref<128x128xbf16, #tpu.memory_space<vmem>>, vector<128x128xbf16>
    %cst = arith.constant dense<0.000000e+00> : vector<104x128xf32>
    %10 = tpu.matmul %8, %9, %cst {dimension_numbers = #tpu.dot_dimension_numbers<[1], [0], [0], [1], [0, 0, 1, 1], [], []>} : vector<104x128xbf16>, vector<128x128xbf16>, vector<104x128xf32> -> vector<104x128xf32>
    %c0_9 = arith.constant 0 : index
    %c0_10 = arith.constant 0 : index
    %11 = vector.load %arg6[%c0_9, %c0_10] : memref<1x128xf32, #tpu.memory_space<vmem>>, vector<1x128xf32>
    %12 = vector.broadcast %11 : vector<1x128xf32> to vector<104x128xf32>
    %13 = arith.mulf %10, %12 : vector<104x128xf32>
    %14 = arith.addf %7, %13 : vector<104x128xf32>
    %c0_11 = arith.constant 0 : index
    %c0_12 = arith.constant 0 : index
    %15 = vector.load %arg7[%c0_11, %c0_12] : memref<1x128xf32, #tpu.memory_space<vmem>>, vector<1x128xf32>
    %16 = vector.broadcast %15 : vector<1x128xf32> to vector<104x128xf32>
    %17 = arith.addf %14, %16 : vector<104x128xf32>
    %cst_13 = arith.constant 0.000000e+00 : f32
    %18 = vector.broadcast %cst_13 : f32 to vector<104x128xf32>
    %19 = arith.maximumf %17, %18 : vector<104x128xf32>
    %c0_14 = arith.constant 0 : index
    %c0_15 = arith.constant 0 : index
    %20 = vector.load %arg8[%c0_14, %c0_15] : memref<104x128xf32, #tpu.memory_space<vmem>>, vector<104x128xf32>
    tpu.vector_store %arg8[%c0_14, %c0_15], %19 {strides = array<i32>} : memref<104x128xf32, #tpu.memory_space<vmem>>, vector<104x128xf32>,
    return
  }
  func.func @transform_0(%arg0: i32) -> (i32, i32) {
    %c0_i32 = arith.constant 0 : i32
    %c0_i32_0 = arith.constant 0 : i32
    return %arg0, %c0_i32 : i32, i32
  }
  func.func @transform_1(%arg0: i32) -> (i32, i32) {
    %c0_i32 = arith.constant 0 : i32
    %c0_i32_0 = arith.constant 0 : i32
    %c0_i32_1 = arith.constant 0 : i32
    return %c0_i32, %c0_i32_0 : i32, i32
  }
  func.func @transform_2(%arg0: i32) -> (i32, i32) {
    %c0_i32 = arith.constant 0 : i32
    %c0_i32_0 = arith.constant 0 : i32
    %c0_i32_1 = arith.constant 0 : i32
    return %c0_i32, %c0_i32_0 : i32, i32
  }
  func.func @transform_3(%arg0: i32) -> (i32, i32) {
    %c0_i32 = arith.constant 0 : i32
    %c0_i32_0 = arith.constant 0 : i32
    return %arg0, %c0_i32 : i32, i32
  }
  func.func @transform_4(%arg0: i32) -> (i32, i32) {
    %c0_i32 = arith.constant 0 : i32
    %c0_i32_0 = arith.constant 0 : i32
    %c0_i32_1 = arith.constant 0 : i32
    return %c0_i32, %c0_i32_0 : i32, i32
  }
  func.func @transform_5(%arg0: i32) -> (i32, i32) {
    %c0_i32 = arith.constant 0 : i32
    %c0_i32_0 = arith.constant 0 : i32
    %c0_i32_1 = arith.constant 0 : i32
    return %c0_i32, %c0_i32_0 : i32, i32
  }
  func.func @transform_6(%arg0: i32) -> (i32, i32) {
    %c0_i32 = arith.constant 0 : i32
    %c0_i32_0 = arith.constant 0 : i32
    %c0_i32_1 = arith.constant 0 : i32
    return %c0_i32, %c0_i32_0 : i32, i32
  }
  func.func @transform_7(%arg0: i32) -> (i32, i32) {
    %c0_i32 = arith.constant 0 : i32
    %c0_i32_0 = arith.constant 0 : i32
    return %arg0, %c0_i32 : i32, i32
  }
}

</mosaic_0001>

<llo_original>
// kernel: residual_block_forward.5
$region0: #{residual_block_forward.5}
  #allocation0 [shape = 'u32[]', space=smem, size = 0x4, offset = 0x4, fixed_abs, tag = 'smem constant byte address 0x4 - core index']
  #allocation1 [shape = 'u32[144,128]{1,0:T(1,128)}', space=vmem, size = 0x12000, scoped, tag = 'internal scratch']
  %s0 = inlined_call_operand.vmem [shape: bf16[208,128], index: 0, kind: input, shape index: {}]
  %s1 = inlined_call_operand.vmem [shape: bf16[128,128], index: 1, kind: input, shape index: {}]
  %s2 = inlined_call_operand.vmem [shape: bf16[208,128], index: 2, kind: output, shape index: {0}]
  %s3 = inlined_call_operand.vmem [shape: f32[2,2,128], index: 3, kind: output, shape index: {1}]
  %4 = xla_tuple %s2, %s3
  %s5 = sld [smem:[#allocation0]]
  $region49: #{residual_block_forward.5} parent=0
    _
  %s7 = ssub.s32 1, %s5
  %s8 = scalar_select 0, %s7, %s5
  loop: start=0, step=1, limit=4
  $region2: #{residual_block_forward.5} parent=0 // loop_pre_header
    _
  $region3: #{residual_block_forward.5} parent=0 // loop_header
    %s10 = sphi 0, %s14
    %p11 = scmp.ge.s32.totalorder %s10, 4
    %s20 = sphi 0, %s22
    %s23 = sphi 0, %s20
    %s24 = sphi 0, %s23
    %s40 = sphi 0, %s24
    %s44 = sphi 0, %s44
    %s46 = sphi 0, %s44
    %s47 = sphi 0, %s46
    %s61 = sphi 0, %s47
    %s67 = sphi 0, %s69
    %s70 = sphi 0, %s67
    %s71 = sphi 0, %s70
    %s87 = sphi 0, %s71
    %s93 = sphi 0, %s95
    %s96 = sphi 0, %s93
    %s97 = sphi 0, %s96
    %s113 = sphi 0, %s97
  $region4: #{residual_block_forward.5} parent=0 // loop_header_branch
    %13 = sbr.rel (%p11) target = $region8
  $region5: #{residual_block_forward.5} parent=0 // loop_body
    %s15 = ssub.s32 %s10, 1
    %s16 = ssub.s32 %s10, 2
    %s17 = sadd.s32 %s10, 1
    %s18 = ssub.s32 %s10, %s17
    %p19 = scmp.eq.s32.totalorder %s18, 0
    %s21 = sadd.s32 %s20, 1
    %s22 = scalar_select %p19, %s20, %s21
    %p25 = pneg %p19
    %p26 = scmp.eq.s32.totalorder %s10, 1
    %p27 = por %p25, %p26
    %p28 = scmp.ne.s32.totalorder %s20, %s23
    %p29 = scmp.eq.s32.totalorder %s10, 0
    %p30 = por %p28, %p29
    %p31 = scmp.ne.s32.totalorder %s20, %s23
    %p32 = scmp.eq.s32.totalorder %s15, 1
    %p33 = por %p31, %p32
    %p34 = scmp.ne.s32.totalorder %s23, %s24
    %p35 = scmp.eq.s32.totalorder %s15, 0
    %p36 = por %p34, %p35
    %p37 = scmp.ne.s32.totalorder %s23, %s24
    %p38 = scmp.eq.s32.totalorder %s16, 1
    %p39 = por %p37, %p38
    %p41 = scmp.ne.s32.totalorder %s24, %s40
    %p42 = scmp.eq.s32.totalorder %s16, 0
    %p43 = por %p41, %p42
    %s45 = sadd.s32 %s44, 1
    %p48 = scmp.eq.s32.totalorder %s10, 1
    %p49 = scmp.ne.s32.totalorder %s44, %s46
    %p50 = scmp.eq.s32.totalorder %s10, 0
    %p51 = por %p49, %p50
    %p52 = scmp.ne.s32.totalorder %s44, %s46
    %p53 = scmp.eq.s32.totalorder %s15, 1
    %p54 = por %p52, %p53
    %p55 = scmp.ne.s32.totalorder %s46, %s47
    %p56 = scmp.eq.s32.totalorder %s15, 0
    %p57 = por %p55, %p56
    %p58 = scmp.ne.s32.totalorder %s46, %s47
    %p59 = scmp.eq.s32.totalorder %s16, 1
    %p60 = por %p58, %p59
    %p62 = scmp.ne.s32.totalorder %s47, %s61
    %p63 = scmp.eq.s32.totalorder %s16, 0
    %p64 = por %p62, %p63
    %s65 = ssub.s32 %s10, %s17
    %p66 = scmp.eq.s32.totalorder %s65, 0
    %s68 = sadd.s32 %s67, 1
    %s69 = scalar_select %p66, %s67, %s68
    %p72 = pneg %p66
    %p73 = scmp.eq.s32.totalorder %s10, 1
    %p74 = por %p72, %p73
    %p75 = scmp.ne.s32.totalorder %s67, %s70
    %p76 = scmp.eq.s32.totalorder %s10, 0
    %p77 = por %p75, %p76
    %p78 = scmp.ne.s32.totalorder %s67, %s70
    %p79 = scmp.eq.s32.totalorder %s15, 1
    %p80 = por %p78, %p79
    %p81 = scmp.ne.s32.totalorder %s70, %s71
    %p82 = scmp.eq.s32.totalorder %s15, 0
    %p83 = por %p81, %p82
    %p84 = scmp.ne.s32.totalorder %s70, %s71
    %p85 = scmp.eq.s32.totalorder %s16, 1
    %p86 = por %p84, %p85
    %p88 = scmp.ne.s32.totalorder %s71, %s87
    %p89 = scmp.eq.s32.totalorder %s16, 0
    %p90 = por %p88, %p89
    %s91 = ssub.s32 %s10, %s17
    %p92 = scmp.eq.s32.totalorder %s91, 0
    %s94 = sadd.s32 %s93, 1
    %s95 = scalar_select %p92, %s93, %s94
    %p98 = pneg %p92
    %p99 = scmp.eq.s32.totalorder %s10, 1
    %p100 = por %p98, %p99
    %p101 = scmp.ne.s32.totalorder %s93, %s96
    %p102 = scmp.eq.s32.totalorder %s10, 0
    %p103 = por %p101, %p102
    %p104 = scmp.ne.s32.totalorder %s93, %s96
    %p105 = scmp.eq.s32.totalorder %s15, 1
    %p106 = por %p104, %p105
    %p107 = scmp.ne.s32.totalorder %s96, %s97
    %p108 = scmp.eq.s32.totalorder %s15, 0
    %p109 = por %p107, %p108
    %p110 = scmp.ne.s32.totalorder %s96, %s97
    %p111 = scmp.eq.s32.totalorder %s16, 1
    %p112 = por %p110, %p111
    %p114 = scmp.ne.s32.totalorder %s97, %s113
    %p115 = scmp.eq.s32.totalorder %s16, 0
    %p116 = por %p114, %p115
    %p117 = scmp.le.s32.totalorder 1, %s10
    %p118 = scmp.lt.s32.totalorder %s10, 3
    %p119 = pnand %p117, %p118
    %p120 = pneg %p119
    // Predicated region
    $region9: #{residual_block_forward.5} parent=5 // pred_check
      _
    $region10: #{residual_block_forward.5} parent=5 // pred_check_branch
      %122 = sbr.rel (%p119) target = $region12
    $region11: #{residual_block_forward.5} parent=5 // pred_region
      %s123 = ssub.s32 %s10, 1
      // Predicated region
      $region13: #{residual_block_forward.5} parent=11 // pred_check
        %p124 = pneg %p57
      $region14: #{residual_block_forward.5} parent=11 // pred_check_branch
        %126 = sbr.rel (%p124) target = $region16
      $region15: #{residual_block_forward.5} parent=11 // pred_region
        _
      $region16: #{residual_block_forward.5} parent=11 // pred_fallthru
        _
    $region12: #{residual_block_forward.5} parent=5 // pred_fallthru
      _
    %p127 = scmp.lt.s32.totalorder %s10, 2
    // Predicated region
    $region17: #{residual_block_forward.5} parent=5 // pred_check
      %p128 = pneg %p127
    $region18: #{residual_block_forward.5} parent=5 // pred_check_branch
      %130 = sbr.rel (%p128) target = $region20
    $region19: #{residual_block_forward.5} parent=5 // pred_region
      // Predicated region
      $region21: #{residual_block_forward.5} parent=19 // pred_check
        %p131 = pneg %p30
      $region22: #{residual_block_forward.5} parent=19 // pred_check_branch
        %133 = sbr.rel (%p131) target = $region24
      $region23: #{residual_block_forward.5} parent=19 // pred_region
        %s134 = smul.u32 13, %s10
        %p135 = scmp.lt.s32.totalorder %s134, 25
        %s136 = scalar_select %p135, %s134, 25
        %s137 = smul.addr %s136, 4
        %s138 = scalar_lea.vmem %s0, %s137
        %s139 = smul.u32 13, %s10
      $region24: #{residual_block_forward.5} parent=19 // pred_fallthru
        _
    $region20: #{residual_block_forward.5} parent=5 // pred_fallthru
      _
    %p140 = scmp.le.s32.totalorder 1, %s10
    %p141 = scmp.lt.s32.totalorder %s10, 3
    %p142 = pnand %p140, %p141
    %p143 = pneg %p142
    // Predicated region
    $region25: #{residual_block_forward.5} parent=5 // pred_check
      _
    $region26: #{residual_block_forward.5} parent=5 // pred_check_branch
      %145 = sbr.rel (%p142) target = $region28
    $region27: #{residual_block_forward.5} parent=5 // pred_region
      %s146 = ssub.s32 %s10, 1
      %s147 = smul.u32 13, %s15
      %p148 = scmp.lt.s32.totalorder %s147, 25
      %s149 = scalar_select %p148, %s147, 25
      %s150 = smul.addr %s149, 4
      %s151 = scalar_lea.vmem %s0, %s150
      %p152 = pneg %p36
      %p153 = pneg %p33
      %p154 = pneg %p57
      %p155 = pneg %p54
      %p156 = pneg %p83
      %p157 = pneg %p80
      %s158 = smul.u32 13, %s15
      %p159 = scmp.lt.s32.totalorder %s158, 25
      %s160 = scalar_select %p159, %s158, 25
      %s161 = smul.addr %s160, 4
      %s162 = scalar_lea.vmem %s2, %s161
      %p163 = pneg %p109
      %p164 = pneg %p106
      %p165 = scmp.lt.s32.totalorder %s15, 1
      %s166 = scalar_select %p165, %s15, 1
      %s167 = smul.addr %s166, 2
      %s168 = scalar_lea.vmem %s3, %s167
      %s169 = smul.u32 13, %s15
      %p170 = scmp.lt.s32.totalorder %s169, 25
      %s171 = scalar_select %p170, %s169, 25
      %s172 = smul.addr %s171, 4
      %s173 = scalar_lea.vmem %s0, %s172
      %s174 = smul.u32 13, %s15
      %s175 = smul.u32 13, %s15
      %p176 = scmp.lt.s32.totalorder %s175, 25
      %s177 = scalar_select %p176, %s175, 25
      %s178 = smul.addr %s177, 4
      %s179 = scalar_lea.vmem %s2, %s178
      %s180 = smul.u32 13, %s15
      %p181 = scmp.lt.s32.totalorder %s15, 1
      %s182 = scalar_select %p181, %s15, 1
      %s183 = smul.addr %s182, 2
      %s184 = scalar_lea.vmem %s3, %s183
      %v186 = vld [vmem:[%s173] sm:$0xf]
      %v187 = vld [vmem:[%s173 + $0x4] sm:$0xf]
      %v188 = vld [vmem:[%s173 + $0x8] sm:$0xf]
      %v189 = vld [vmem:[%s173 + $0xc] sm:$0xf]
      %v190 = vld [vmem:[%s173 + $0x10] sm:$0xf]
      %v191 = vld [vmem:[%s173 + $0x14] sm:$0xf]
      %v192 = vld [vmem:[%s173 + $0x18] sm:$0xf]
      %v193 = vld [vmem:[%s173 + $0x1c] sm:$0xf]
      %v194 = vld [vmem:[%s173 + $0x20] sm:$0xf]
      %v195 = vld [vmem:[%s173 + $0x24] sm:$0xf]
      %v196 = vld [vmem:[%s173 + $0x28] sm:$0xf]
      %v197 = vld [vmem:[%s173 + $0x2c] sm:$0xf]
      %v198 = vld [vmem:[%s173 + $0x30] sm:$0xf]
      %v199 = vld [vmem:[%s1] sm:$0xf]
      %v200 = vld [vmem:[%s1 + $0x4] sm:$0xf]
      %v201 = vld [vmem:[%s1 + $0x8] sm:$0xf]
      %v202 = vld [vmem:[%s1 + $0xc] sm:$0xf]
      %v203 = vld [vmem:[%s1 + $0x10] sm:$0xf]
      %v204 = vld [vmem:[%s1 + $0x14] sm:$0xf]
      %v205 = vld [vmem:[%s1 + $0x18] sm:$0xf]
      %v206 = vld [vmem:[%s1 + $0x1c] sm:$0xf]
      %v207 = vld [vmem:[%s1 + $0x20] sm:$0xf]
      %v208 = vld [vmem:[%s1 + $0x24] sm:$0xf]
      %v209 = vld [vmem:[%s1 + $0x28] sm:$0xf]
      %v210 = vld [vmem:[%s1 + $0x2c] sm:$0xf]
      %v211 = vld [vmem:[%s1 + $0x30] sm:$0xf]
      %v212 = vld [vmem:[%s1 + $0x34] sm:$0xf]
      %v213 = vld [vmem:[%s1 + $0x38] sm:$0xf]
      %v214 = vld [vmem:[%s1 + $0x3c] sm:$0xf]
      %v228 = vunpack.c.l.b16 %v186
      %v229 = vunpack.c.l.b16 %v187
      %v230 = vunpack.c.l.b16 %v188
      %v231 = vunpack.c.l.b16 %v189
      %v232 = vunpack.c.l.b16 %v190
      %v233 = vunpack.c.l.b16 %v191
      %v234 = vunpack.c.l.b16 %v192
      %v235 = vunpack.c.l.b16 %v193
      %v236 = vunpack.c.l.b16 %v194
      %v237 = vunpack.c.l.b16 %v195
      %v238 = vunpack.c.l.b16 %v196
      %v239 = vunpack.c.l.b16 %v197
      %v240 = vunpack.c.l.b16 %v198
      %v241 = vpack.c.b16 %v229, %v228
      %v242 = vpack.c.b16 %v231, %v230
      %v243 = vpack.c.b16 %v233, %v232
      %v244 = vpack.c.b16 %v235, %v234
      %v245 = vpack.c.b16 %v237, %v236
      %v246 = vpack.c.b16 %v239, %v238
      %v247 = vpack.c.b16 %v240, %v240
      %v271 = vunpack.c.l.b16 %v199
      %v272 = vunpack.c.l.b16 %v200
      %v273 = vunpack.c.l.b16 %v201
      %v274 = vunpack.c.l.b16 %v202
      %v275 = vunpack.c.l.b16 %v203
      %v276 = vunpack.c.l.b16 %v204
      %v277 = vunpack.c.l.b16 %v205
      %v278 = vunpack.c.l.b16 %v206
      %v279 = vunpack.c.l.b16 %v207
      %v280 = vunpack.c.l.b16 %v208
      %v281 = vunpack.c.l.b16 %v209
      %v282 = vunpack.c.l.b16 %v210
      %v283 = vunpack.c.l.b16 %v211
      %v284 = vunpack.c.l.b16 %v212
      %v285 = vunpack.c.l.b16 %v213
      %v286 = vunpack.c.l.b16 %v214
      %v287 = vpack.c.b16 %v272, %v271
      %v288 = vpack.c.b16 %v274, %v273
      %v289 = vpack.c.b16 %v276, %v275
      %v290 = vpack.c.b16 %v278, %v277
      %v291 = vpack.c.b16 %v280, %v279
      %v292 = vpack.c.b16 %v282, %v281
      %v293 = vpack.c.b16 %v284, %v283
      %v294 = vpack.c.b16 %v286, %v285
      %303 = vmatprep.subr.bf16.mxu0 0
      %304 = vmatpush1.bf16.msra.mxu0 %v294
      %305 = vmatprep.subr.bf16.mxu0 0
      %306 = vmatpush1.bf16.msra.mxu0 %v293
      %307 = vmatprep.subr.bf16.mxu0 0
      %308 = vmatpush1.bf16.msra.mxu0 %v292
      %309 = vmatprep.subr.bf16.mxu0 0
      %310 = vmatpush1.bf16.msra.mxu0 %v291
      %311 = vmatprep.subr.bf16.mxu0 0
      %312 = vmatpush1.bf16.msra.mxu0 %v290
      %313 = vmatprep.subr.bf16.mxu0 0
      %314 = vmatpush1.bf16.msra.mxu0 %v289
      %315 = vmatprep.subr.bf16.mxu0 0
      %316 = vmatpush1.bf16.msra.mxu0 %v288
      %317 = vmatprep.subr.bf16.mxu0 0
      %318 = vmatpush1.bf16.msra.mxu0 %v287
      %319 = vmatprep.subr.bf16.mxu0 0
      %320 = vmatpush2.bf16.msra.mxu0 0
      %321 = vmatprep.subr.bf16.mxu0 0
      %322 = vmatpush2.bf16.msra.mxu0 0
      %323 = vmatprep.subr.bf16.mxu0 0
      %324 = vmatpush2.bf16.msra.mxu0 0
      %325 = vmatprep.subr.bf16.mxu0 0
      %326 = vmatpush2.bf16.msra.mxu0 0
      %327 = vmatprep.subr.bf16.mxu0 0
      %328 = vmatpush2.bf16.msra.mxu0 0
      %329 = vmatprep.subr.bf16.mxu0 0
      %330 = vmatpush2.bf16.msra.mxu0 0
      %331 = vmatprep.subr.bf16.mxu0 0
      %332 = vmatpush2.bf16.msra.mxu0 0
      %333 = vmatprep.subr.bf16.mxu0 0
      %334 = vmatpush2.bf16.msra.mxu0 0
      %335 = vmatprep.mubr.bf16.mxu0 0
      %336 = vmatmul.mubr.bf16.gmra.mxu0 %v241
      %v337 = vpop.f32.mrf.mxu0
      %v338 = vadd.f32 0.0, %v337
      %v339 = vpop.f32.mrf.mxu0
      %v340 = vpop.f32.mrf.mxu0
      %v341 = vadd.f32 0.0, %v340
      %v342 = vpop.f32.mrf.mxu0
      %343 = vmatprep.mubr.bf16.mxu0 0
      %344 = vmatmul.mubr.bf16.gmra.mxu0 %v242
      %v345 = vpop.f32.mrf.mxu0
      %v346 = vadd.f32 0.0, %v345
      %v347 = vpop.f32.mrf.mxu0
      %v348 = vpop.f32.mrf.mxu0
      %v349 = vadd.f32 0.0, %v348
      %v350 = vpop.f32.mrf.mxu0
      %351 = vmatprep.mubr.bf16.mxu0 0
      %352 = vmatmul.mubr.bf16.gmra.mxu0 %v243
      %v353 = vpop.f32.mrf.mxu0
      %v354 = vadd.f32 0.0, %v353
      %v355 = vpop.f32.mrf.mxu0
      %v356 = vpop.f32.mrf.mxu0
      %v357 = vadd.f32 0.0, %v356
      %v358 = vpop.f32.mrf.mxu0
      %359 = vmatprep.mubr.bf16.mxu0 0
      %360 = vmatmul.mubr.bf16.gmra.mxu0 %v244
      %v361 = vpop.f32.mrf.mxu0
      %v362 = vadd.f32 0.0, %v361
      %v363 = vpop.f32.mrf.mxu0
      %v364 = vpop.f32.mrf.mxu0
      %v365 = vadd.f32 0.0, %v364
      %v366 = vpop.f32.mrf.mxu0
      %367 = vmatprep.mubr.bf16.mxu0 0
      %368 = vmatmul.mubr.bf16.gmra.mxu0 %v245
      %v369 = vpop.f32.mrf.mxu0
      %v370 = vadd.f32 0.0, %v369
      %v371 = vpop.f32.mrf.mxu0
      %v372 = vpop.f32.mrf.mxu0
      %v373 = vadd.f32 0.0, %v372
      %v374 = vpop.f32.mrf.mxu0
      %375 = vmatprep.mubr.bf16.mxu0 0
      %376 = vmatmul.mubr.bf16.gmra.mxu0 %v246
      %v377 = vpop.f32.mrf.mxu0
      %v378 = vadd.f32 0.0, %v377
      %v379 = vpop.f32.mrf.mxu0
      %v380 = vpop.f32.mrf.mxu0
      %v381 = vadd.f32 0.0, %v380
      %v382 = vpop.f32.mrf.mxu0
      %383 = vmatprep.mubr.bf16.mxu0 0
      %384 = vmatmul.mubr.bf16.gmra.mxu0 %v247
      %v385 = vpop.f32.mrf.mxu0
      %v386 = vadd.f32 0.0, %v385
      %v387 = vpop.f32.mrf.mxu0
      %v388 = vpop.f32.mrf.mxu0
      %v389 = vpop.f32.mrf.mxu0
      %390 = vdwg.mxu0
      %v391 = vpack.c.bf16 %v341, %v338
      %v392 = vpack.c.bf16 %v349, %v346
      %v393 = vpack.c.bf16 %v357, %v354
      %v394 = vpack.c.bf16 %v365, %v362
      %v395 = vpack.c.bf16 %v373, %v370
      %v396 = vpack.c.bf16 %v381, %v378
      %v397 = vpack.c.bf16 %v386, %v386
      %v405 = vunpack.c.l.b16 %v391
      %v406 = vunpack.c.h.b16 %v391
      %v407 = vunpack.c.l.b16 %v392
      %v408 = vunpack.c.h.b16 %v392
      %v409 = vunpack.c.l.b16 %v393
      %v410 = vunpack.c.h.b16 %v393
      %v411 = vunpack.c.l.b16 %v394
      %v412 = vunpack.c.h.b16 %v394
      %v413 = vunpack.c.l.b16 %v395
      %v414 = vunpack.c.h.b16 %v395
      %v415 = vunpack.c.l.b16 %v396
      %v416 = vunpack.c.h.b16 %v396
      %v417 = vunpack.c.l.b16 %v397
      %v418 = vpack.c.b16 %v405, %v405
      %v419 = vpack.c.b16 %v406, %v406
      %v420 = vpack.c.b16 %v407, %v407
      %v421 = vpack.c.b16 %v408, %v408
      %v422 = vpack.c.b16 %v409, %v409
      %v423 = vpack.c.b16 %v410, %v410
      %v424 = vpack.c.b16 %v411, %v411
      %v425 = vpack.c.b16 %v412, %v412
      %v426 = vpack.c.b16 %v413, %v413
      %v427 = vpack.c.b16 %v414, %v414
      %v428 = vpack.c.b16 %v415, %v415
      %v429 = vpack.c.b16 %v416, %v416
      %v430 = vpack.c.b16 %v417, %v417
      %444 = vst [vmem:[%s179] sm:$0xf] %v418
      %445 = vst [vmem:[%s179 + $0x4] sm:$0xf] %v419
      %446 = vst [vmem:[%s179 + $0x8] sm:$0xf] %v420
      %447 = vst [vmem:[%s179 + $0xc] sm:$0xf] %v421
      %448 = vst [vmem:[%s179 + $0x10] sm:$0xf] %v422
      %449 = vst [vmem:[%s179 + $0x14] sm:$0xf] %v423
      %450 = vst [vmem:[%s179 + $0x18] sm:$0xf] %v424
      %451 = vst [vmem:[%s179 + $0x1c] sm:$0xf] %v425
      %452 = vst [vmem:[%s179 + $0x20] sm:$0xf] %v426
      %453 = vst [vmem:[%s179 + $0x24] sm:$0xf] %v427
      %454 = vst [vmem:[%s179 + $0x28] sm:$0xf] %v428
      %455 = vst [vmem:[%s179 + $0x2c] sm:$0xf] %v429
      %456 = vst [vmem:[%s179 + $0x30] sm:$0xf] %v430
      %v457 = vadd.f32 %v338, %v341
      %v458 = vadd.f32 %v457, %v346
      %v459 = vadd.f32 %v458, %v349
      %v460 = vadd.f32 %v459, %v354
      %v461 = vadd.f32 %v460, %v357
      %v462 = vadd.f32 %v461, %v362
      %v463 = vadd.f32 %v462, %v365
      %v464 = vadd.f32 %v463, %v370
      %v465 = vadd.f32 %v464, %v373
      %v466 = vadd.f32 %v465, %v378
      %v467 = vadd.f32 %v466, %v381
      %v468 = vadd.f32 %v467, %v386
      %v469 = vrot.slane %v468, 4
      %v470 = vadd.f32 %v468, %v469
      %v471 = vrot.slane %v470, 2
      %v472 = vadd.f32 %v470, %v471
      %v473 = vrot.slane %v472, 1
      %v474 = vadd.f32 %v472, %v473
      %v475 = vmul.f32 %v338, %v338
      %v476 = vmul.f32 %v341, %v341
      %v477 = vmul.f32 %v346, %v346
      %v478 = vmul.f32 %v349, %v349
      %v479 = vmul.f32 %v354, %v354
      %v480 = vmul.f32 %v357, %v357
      %v481 = vmul.f32 %v362, %v362
      %v482 = vmul.f32 %v365, %v365
      %v483 = vmul.f32 %v370, %v370
      %v484 = vmul.f32 %v373, %v373
      %v485 = vmul.f32 %v378, %v378
      %v486 = vmul.f32 %v381, %v381
      %v487 = vmul.f32 %v386, %v386
      %v488 = vadd.f32 %v475, %v476
      %v489 = vadd.f32 %v488, %v477
      %v490 = vadd.f32 %v489, %v478
      %v491 = vadd.f32 %v490, %v479
      %v492 = vadd.f32 %v491, %v480
      %v493 = vadd.f32 %v492, %v481
      %v494 = vadd.f32 %v493, %v482
      %v495 = vadd.f32 %v494, %v483
      %v496 = vadd.f32 %v495, %v484
      %v497 = vadd.f32 %v496, %v485
      %v498 = vadd.f32 %v497, %v486
      %v499 = vadd.f32 %v498, %v487
      %v500 = vrot.slane %v499, 4
      %v501 = vadd.f32 %v499, %v500
      %v502 = vrot.slane %v501, 2
      %v503 = vadd.f32 %v501, %v502
      %v504 = vrot.slane %v503, 1
      %v505 = vadd.f32 %v503, %v504
      %vm506 = vcmask 1040384
      %v507 = vsel %vm506, %v474, %v505
      %508 = vst [vmem:[%s184] sm:$0x3] %v507
      %s509 = smul.u32 13, %s15
      %p510 = scmp.lt.s32.totalorder %s509, 25
      %s511 = scalar_select %p510, %s509, 25
      %s512 = smul.addr %s511, 4
      %s513 = scalar_lea.vmem %s2, %s512
      %p514 = scmp.lt.s32.totalorder %s15, 1
      %s515 = scalar_select %p514, %s15, 1
      %s516 = smul.addr %s515, 2
      %s517 = scalar_lea.vmem %s3, %s516
      // Predicated region
      $region29: #{residual_block_forward.5} parent=27 // pred_check
        %p518 = pneg %p80
      $region30: #{residual_block_forward.5} parent=27 // pred_check_branch
        %520 = sbr.rel (%p518) target = $region32
      $region31: #{residual_block_forward.5} parent=27 // pred_region
        %s521 = smul.u32 13, %s15
      $region32: #{residual_block_forward.5} parent=27 // pred_fallthru
        _
      // Predicated region
      $region33: #{residual_block_forward.5} parent=27 // pred_check
        %p522 = pneg %p106
      $region34: #{residual_block_forward.5} parent=27 // pred_check_branch
        %524 = sbr.rel (%p522) target = $region36
      $region35: #{residual_block_forward.5} parent=27 // pred_region
        _
      $region36: #{residual_block_forward.5} parent=27 // pred_fallthru
        _
    $region28: #{residual_block_forward.5} parent=5 // pred_fallthru
      _
    %p525 = scmp.le.s32.totalorder 2, %s10
    // Predicated region
    $region37: #{residual_block_forward.5} parent=5 // pred_check
      %p526 = pneg %p525
    $region38: #{residual_block_forward.5} parent=5 // pred_check_branch
      %528 = sbr.rel (%p526) target = $region40
    $region39: #{residual_block_forward.5} parent=5 // pred_region
      %s529 = ssub.s32 %s10, 2
      // Predicated region
      $region41: #{residual_block_forward.5} parent=39 // pred_check
        %p530 = pneg %p86
      $region42: #{residual_block_forward.5} parent=39 // pred_check_branch
        %532 = sbr.rel (%p530) target = $region44
      $region43: #{residual_block_forward.5} parent=39 // pred_region
        %s533 = smul.u32 13, %s16
        %p534 = scmp.lt.s32.totalorder %s533, 25
        %s535 = scalar_select %p534, %s533, 25
        %s536 = smul.addr %s535, 4
        %s537 = scalar_lea.vmem %s2, %s536
      $region44: #{residual_block_forward.5} parent=39 // pred_fallthru
        _
      // Predicated region
      $region45: #{residual_block_forward.5} parent=39 // pred_check
        %p538 = pneg %p112
      $region46: #{residual_block_forward.5} parent=39 // pred_check_branch
        %540 = sbr.rel (%p538) target = $region48
      $region47: #{residual_block_forward.5} parent=39 // pred_region
        %p541 = scmp.lt.s32.totalorder %s16, 1
        %s542 = scalar_select %p541, %s16, 1
        %s543 = smul.addr %s542, 2
        %s544 = scalar_lea.vmem %s3, %s543
      $region48: #{residual_block_forward.5} parent=39 // pred_fallthru
        _
    $region40: #{residual_block_forward.5} parent=5 // pred_fallthru
      _
  $region6: #{residual_block_forward.5} parent=0 // loop_footer
    %s14 = sadd.s32 1, %s10
  $region7: #{residual_block_forward.5} parent=0 // loop_footer_branch
    %9 = sbr.rel target = $region3
  $region8: #{residual_block_forward.5} parent=0 // loop_exit
    _

// kernel: residual_block_forward.6
$region0: #{residual_block_forward.6}
  #allocation0 [shape = 'u32[]', space=smem, size = 0x4, offset = 0x4, fixed_abs, tag = 'smem constant byte address 0x4 - core index']
  #allocation1 [shape = 'u32[144,128]{1,0:T(1,128)}', space=vmem, size = 0x12000, scoped, tag = 'internal scratch']
  %s0 = inlined_call_operand.vmem [shape: bf16[208,128], index: 0, kind: input, shape index: {}]
  %s1 = inlined_call_operand.vmem [shape: f32[1,128], index: 1, kind: input, shape index: {}]
  %s2 = inlined_call_operand.vmem [shape: f32[1,128], index: 2, kind: input, shape index: {}]
  %s3 = inlined_call_operand.vmem [shape: f32[208,1], index: 3, kind: input, shape index: {}]
  %s4 = inlined_call_operand.vmem [shape: bf16[416,128], index: 4, kind: output, shape index: {}]
  %s5 = sld [smem:[#allocation0]]
  $region49: #{residual_block_forward.6} parent=0
    _
  %s7 = ssub.s32 1, %s5
  %s8 = scalar_select 0, %s7, %s5
  loop: start=0, step=1, limit=6
  $region2: #{residual_block_forward.6} parent=0 // loop_pre_header
    _
  $region3: #{residual_block_forward.6} parent=0 // loop_header
    %s10 = sphi 0, %s14
    %p11 = scmp.ge.s32.totalorder %s10, 6
    %s30 = sphi 0, %s32
    %s33 = sphi 0, %s30
    %s34 = sphi 0, %s33
    %s50 = sphi 0, %s34
    %s54 = sphi 0, %s54
    %s56 = sphi 0, %s54
    %s57 = sphi 0, %s56
    %s71 = sphi 0, %s57
    %s75 = sphi 0, %s75
    %s77 = sphi 0, %s75
    %s78 = sphi 0, %s77
    %s92 = sphi 0, %s78
    %s108 = sphi 0, %s110
    %s111 = sphi 0, %s108
    %s112 = sphi 0, %s111
    %s128 = sphi 0, %s112
    %s134 = sphi 0, %s136
    %s137 = sphi 0, %s134
    %s138 = sphi 0, %s137
    %s154 = sphi 0, %s138
  $region4: #{residual_block_forward.6} parent=0 // loop_header_branch
    %13 = sbr.rel (%p11) target = $region8
  $region5: #{residual_block_forward.6} parent=0 // loop_body
    %s15 = ssub.s32 %s10, 1
    %s16 = ssub.s32 %s10, 2
    %s17 = sadd.s32 %s10, 1
    %s18 = ssub.s32 %s10, 1
    %p19 = scmp.gt.s32.totalorder %s18, 0
    %s20 = scalar_select %p19, %s18, 0
    %p21 = scmp.lt.s32.totalorder %s20, 1
    %s22 = scalar_select %p21, %s20, 1
    %s23 = ssub.s32 %s17, 1
    %p24 = scmp.gt.s32.totalorder %s23, 0
    %s25 = scalar_select %p24, %s23, 0
    %p26 = scmp.lt.s32.totalorder %s25, 1
    %s27 = scalar_select %p26, %s25, 1
    %s28 = ssub.s32 %s22, %s27
    %p29 = scmp.eq.s32.totalorder %s28, 0
    %s31 = sadd.s32 %s30, 1
    %s32 = scalar_select %p29, %s30, %s31
    %p35 = pneg %p29
    %p36 = scmp.eq.s32.totalorder %s10, 3
    %p37 = por %p35, %p36
    %p38 = scmp.ne.s32.totalorder %s30, %s33
    %p39 = scmp.eq.s32.totalorder %s10, 0
    %p40 = por %p38, %p39
    %p41 = scmp.ne.s32.totalorder %s30, %s33
    %p42 = scmp.eq.s32.totalorder %s15, 3
    %p43 = por %p41, %p42
    %p44 = scmp.ne.s32.totalorder %s33, %s34
    %p45 = scmp.eq.s32.totalorder %s15, 0
    %p46 = por %p44, %p45
    %p47 = scmp.ne.s32.totalorder %s33, %s34
    %p48 = scmp.eq.s32.totalorder %s16, 3
    %p49 = por %p47, %p48
    %p51 = scmp.ne.s32.totalorder %s34, %s50
    %p52 = scmp.eq.s32.totalorder %s16, 0
    %p53 = por %p51, %p52
    %s55 = sadd.s32 %s54, 1
    %p58 = scmp.eq.s32.totalorder %s10, 3
    %p59 = scmp.ne.s32.totalorder %s54, %s56
    %p60 = scmp.eq.s32.totalorder %s10, 0
    %p61 = por %p59, %p60
    %p62 = scmp.ne.s32.totalorder %s54, %s56
    %p63 = scmp.eq.s32.totalorder %s15, 3
    %p64 = por %p62, %p63
    %p65 = scmp.ne.s32.totalorder %s56, %s57
    %p66 = scmp.eq.s32.totalorder %s15, 0
    %p67 = por %p65, %p66
    %p68 = scmp.ne.s32.totalorder %s56, %s57
    %p69 = scmp.eq.s32.totalorder %s16, 3
    %p70 = por %p68, %p69
    %p72 = scmp.ne.s32.totalorder %s57, %s71
    %p73 = scmp.eq.s32.totalorder %s16, 0
    %p74 = por %p72, %p73
    %s76 = sadd.s32 %s75, 1
    %p79 = scmp.eq.s32.totalorder %s10, 3
    %p80 = scmp.ne.s32.totalorder %s75, %s77
    %p81 = scmp.eq.s32.totalorder %s10, 0
    %p82 = por %p80, %p81
    %p83 = scmp.ne.s32.totalorder %s75, %s77
    %p84 = scmp.eq.s32.totalorder %s15, 3
    %p85 = por %p83, %p84
    %p86 = scmp.ne.s32.totalorder %s77, %s78
    %p87 = scmp.eq.s32.totalorder %s15, 0
    %p88 = por %p86, %p87
    %p89 = scmp.ne.s32.totalorder %s77, %s78
    %p90 = scmp.eq.s32.totalorder %s16, 3
    %p91 = por %p89, %p90
    %p93 = scmp.ne.s32.totalorder %s78, %s92
    %p94 = scmp.eq.s32.totalorder %s16, 0
    %p95 = por %p93, %p94
    %s96 = ssub.s32 %s10, 1
    %p97 = scmp.gt.s32.totalorder %s96, 0
    %s98 = scalar_select %p97, %s96, 0
    %p99 = scmp.lt.s32.totalorder %s98, 1
    %s100 = scalar_select %p99, %s98, 1
    %s101 = ssub.s32 %s17, 1
    %p102 = scmp.gt.s32.totalorder %s101, 0
    %s103 = scalar_select %p102, %s101, 0
    %p104 = scmp.lt.s32.totalorder %s103, 1
    %s105 = scalar_select %p104, %s103, 1
    %s106 = ssub.s32 %s100, %s105
    %p107 = scmp.eq.s32.totalorder %s106, 0
    %s109 = sadd.s32 %s108, 1
    %s110 = scalar_select %p107, %s108, %s109
    %p113 = pneg %p107
    %p114 = scmp.eq.s32.totalorder %s10, 3
    %p115 = por %p113, %p114
    %p116 = scmp.ne.s32.totalorder %s108, %s111
    %p117 = scmp.eq.s32.totalorder %s10, 0
    %p118 = por %p116, %p117
    %p119 = scmp.ne.s32.totalorder %s108, %s111
    %p120 = scmp.eq.s32.totalorder %s15, 3
    %p121 = por %p119, %p120
    %p122 = scmp.ne.s32.totalorder %s111, %s112
    %p123 = scmp.eq.s32.totalorder %s15, 0
    %p124 = por %p122, %p123
    %p125 = scmp.ne.s32.totalorder %s111, %s112
    %p126 = scmp.eq.s32.totalorder %s16, 3
    %p127 = por %p125, %p126
    %p129 = scmp.ne.s32.totalorder %s112, %s128
    %p130 = scmp.eq.s32.totalorder %s16, 0
    %p131 = por %p129, %p130
    %s132 = ssub.s32 %s10, %s17
    %p133 = scmp.eq.s32.totalorder %s132, 0
    %s135 = sadd.s32 %s134, 1
    %s136 = scalar_select %p133, %s134, %s135
    %p139 = pneg %p133
    %p140 = scmp.eq.s32.totalorder %s10, 3
    %p141 = por %p139, %p140
    %p142 = scmp.ne.s32.totalorder %s134, %s137
    %p143 = scmp.eq.s32.totalorder %s10, 0
    %p144 = por %p142, %p143
    %p145 = scmp.ne.s32.totalorder %s134, %s137
    %p146 = scmp.eq.s32.totalorder %s15, 3
    %p147 = por %p145, %p146
    %p148 = scmp.ne.s32.totalorder %s137, %s138
    %p149 = scmp.eq.s32.totalorder %s15, 0
    %p150 = por %p148, %p149
    %p151 = scmp.ne.s32.totalorder %s137, %s138
    %p152 = scmp.eq.s32.totalorder %s16, 3
    %p153 = por %p151, %p152
    %p155 = scmp.ne.s32.totalorder %s138, %s154
    %p156 = scmp.eq.s32.totalorder %s16, 0
    %p157 = por %p155, %p156
    %p158 = scmp.le.s32.totalorder 1, %s10
    %p159 = scmp.lt.s32.totalorder %s10, 5
    %p160 = pnand %p158, %p159
    %p161 = pneg %p160
    // Predicated region
    $region9: #{residual_block_forward.6} parent=5 // pred_check
      _
    $region10: #{residual_block_forward.6} parent=5 // pred_check_branch
      %163 = sbr.rel (%p160) target = $region12
    $region11: #{residual_block_forward.6} parent=5 // pred_region
      %s164 = ssub.s32 %s10, 1
      // Predicated region
      $region13: #{residual_block_forward.6} parent=11 // pred_check
        %p165 = pneg %p67
      $region14: #{residual_block_forward.6} parent=11 // pred_check_branch
        %167 = sbr.rel (%p165) target = $region16
      $region15: #{residual_block_forward.6} parent=11 // pred_region
        _
      $region16: #{residual_block_forward.6} parent=11 // pred_fallthru
        _
      // Predicated region
      $region17: #{residual_block_forward.6} parent=11 // pred_check
        %p168 = pneg %p88
      $region18: #{residual_block_forward.6} parent=11 // pred_check_branch
        %170 = sbr.rel (%p168) target = $region20
      $region19: #{residual_block_forward.6} parent=11 // pred_region
        _
      $region20: #{residual_block_forward.6} parent=11 // pred_fallthru
        _
    $region12: #{residual_block_forward.6} parent=5 // pred_fallthru
      _
    %p171 = scmp.lt.s32.totalorder %s10, 4
    // Predicated region
    $region21: #{residual_block_forward.6} parent=5 // pred_check
      %p172 = pneg %p171
    $region22: #{residual_block_forward.6} parent=5 // pred_check_branch
      %174 = sbr.rel (%p172) target = $region24
    $region23: #{residual_block_forward.6} parent=5 // pred_region
      // Predicated region
      $region25: #{residual_block_forward.6} parent=23 // pred_check
        %p175 = pneg %p40
      $region26: #{residual_block_forward.6} parent=23 // pred_check_branch
        %177 = sbr.rel (%p175) target = $region28
      $region27: #{residual_block_forward.6} parent=23 // pred_region
        %s178 = ssub.s32 %s10, 1
        %p179 = scmp.gt.s32.totalorder %s178, 0
        %s180 = scalar_select %p179, %s178, 0
        %p181 = scmp.lt.s32.totalorder %s180, 1
        %s182 = scalar_select %p181, %s180, 1
        %s183 = smul.u32 13, %s182
        %p184 = scmp.lt.s32.totalorder %s183, 25
        %s185 = scalar_select %p184, %s183, 25
        %s186 = smul.addr %s185, 4
        %s187 = scalar_lea.vmem %s0, %s186
        %s188 = ssub.s32 %s10, 1
        %p189 = scmp.gt.s32.totalorder %s188, 0
        %s190 = scalar_select %p189, %s188, 0
        %p191 = scmp.lt.s32.totalorder %s190, 1
        %s192 = scalar_select %p191, %s190, 1
        %s193 = smul.u32 13, %s192
      $region28: #{residual_block_forward.6} parent=23 // pred_fallthru
        _
      // Predicated region
      $region29: #{residual_block_forward.6} parent=23 // pred_check
        %p194 = pneg %p118
      $region30: #{residual_block_forward.6} parent=23 // pred_check_branch
        %196 = sbr.rel (%p194) target = $region32
      $region31: #{residual_block_forward.6} parent=23 // pred_region
        %s197 = ssub.s32 %s10, 1
        %p198 = scmp.gt.s32.totalorder %s197, 0
        %s199 = scalar_select %p198, %s197, 0
        %p200 = scmp.lt.s32.totalorder %s199, 1
        %s201 = scalar_select %p200, %s199, 1
        %s202 = smul.u32 13, %s201
        %p203 = scmp.lt.s32.totalorder %s202, 25
        %s204 = scalar_select %p203, %s202, 25
        %s205 = smul.addr %s204, 8
        %s206 = scalar_lea.vmem %s3, %s205
        %s207 = ssub.s32 %s10, 1
        %p208 = scmp.gt.s32.totalorder %s207, 0
        %s209 = scalar_select %p208, %s207, 0
        %p210 = scmp.lt.s32.totalorder %s209, 1
        %s211 = scalar_select %p210, %s209, 1
        %s212 = smul.u32 13, %s211
      $region32: #{residual_block_forward.6} parent=23 // pred_fallthru
        _
    $region24: #{residual_block_forward.6} parent=5 // pred_fallthru
      _
    %p213 = scmp.le.s32.totalorder 1, %s10
    %p214 = scmp.lt.s32.totalorder %s10, 5
    %p215 = pnand %p213, %p214
    %p216 = pneg %p215
    // Predicated region
    $region33: #{residual_block_forward.6} parent=5 // pred_check
      _
    $region34: #{residual_block_forward.6} parent=5 // pred_check_branch
      %218 = sbr.rel (%p215) target = $region36
    $region35: #{residual_block_forward.6} parent=5 // pred_region
      %s219 = ssub.s32 %s10, 1
      %s220 = ssub.s32 %s15, 1
      %p221 = scmp.gt.s32.totalorder %s220, 0
      %s222 = scalar_select %p221, %s220, 0
      %p223 = scmp.lt.s32.totalorder %s222, 1
      %s224 = scalar_select %p223, %s222, 1
      %s225 = smul.u32 13, %s224
      %p226 = scmp.lt.s32.totalorder %s225, 25
      %s227 = scalar_select %p226, %s225, 25
      %s228 = smul.addr %s227, 4
      %s229 = scalar_lea.vmem %s0, %s228
      %p230 = pneg %p46
      %p231 = pneg %p43
      %p232 = pneg %p67
      %p233 = pneg %p64
      %p234 = pneg %p88
      %p235 = pneg %p85
      %s236 = ssub.s32 %s15, 1
      %p237 = scmp.gt.s32.totalorder %s236, 0
      %s238 = scalar_select %p237, %s236, 0
      %p239 = scmp.lt.s32.totalorder %s238, 1
      %s240 = scalar_select %p239, %s238, 1
      %s241 = smul.u32 13, %s240
      %p242 = scmp.lt.s32.totalorder %s241, 25
      %s243 = scalar_select %p242, %s241, 25
      %s244 = smul.addr %s243, 8
      %s245 = scalar_lea.vmem %s3, %s244
      %p246 = pneg %p124
      %p247 = pneg %p121
      %p248 = pneg %p150
      %p249 = pneg %p147
      %s250 = smul.u32 13, %s15
      %p251 = scmp.lt.s32.totalorder %s250, 51
      %s252 = scalar_select %p251, %s250, 51
      %s253 = smul.addr %s252, 4
      %s254 = scalar_lea.vmem %s4, %s253
      %s255 = ssub.s32 %s15, 1
      %p256 = scmp.gt.s32.totalorder %s255, 0
      %s257 = scalar_select %p256, %s255, 0
      %p258 = scmp.lt.s32.totalorder %s257, 1
      %s259 = scalar_select %p258, %s257, 1
      %s260 = smul.u32 13, %s259
      %p261 = scmp.lt.s32.totalorder %s260, 25
      %s262 = scalar_select %p261, %s260, 25
      %s263 = smul.addr %s262, 4
      %s264 = scalar_lea.vmem %s0, %s263
      %s265 = ssub.s32 %s15, 1
      %p266 = scmp.gt.s32.totalorder %s265, 0
      %s267 = scalar_select %p266, %s265, 0
      %p268 = scmp.lt.s32.totalorder %s267, 1
      %s269 = scalar_select %p268, %s267, 1
      %s270 = smul.u32 13, %s269
      %s271 = ssub.s32 %s15, 1
      %p272 = scmp.gt.s32.totalorder %s271, 0
      %s273 = scalar_select %p272, %s271, 0
      %p274 = scmp.lt.s32.totalorder %s273, 1
      %s275 = scalar_select %p274, %s273, 1
      %s276 = smul.u32 13, %s275
      %p277 = scmp.lt.s32.totalorder %s276, 25
      %s278 = scalar_select %p277, %s276, 25
      %s279 = smul.addr %s278, 8
      %s280 = scalar_lea.vmem %s3, %s279
      %s281 = ssub.s32 %s15, 1
      %p282 = scmp.gt.s32.totalorder %s281, 0
      %s283 = scalar_select %p282, %s281, 0
      %p284 = scmp.lt.s32.totalorder %s283, 1
      %s285 = scalar_select %p284, %s283, 1
      %s286 = smul.u32 13, %s285
      %s287 = smul.u32 13, %s15
      %p288 = scmp.lt.s32.totalorder %s287, 51
      %s289 = scalar_select %p288, %s287, 51
      %s290 = smul.addr %s289, 4
      %s291 = scalar_lea.vmem %s4, %s290
      %s292 = smul.u32 13, %s15
      %p293 = scmp.ge.s32.totalorder %s15, 1
      %p294 = scmp.lt.s32.totalorder %s15, 3
      %p295 = pnand %p293, %p294
      %p296 = pneg %p295
      %v297 = vld [vmem:[%s264] sm:$0xf]
      %v298 = vld [vmem:[%s264 + $0x4] sm:$0xf]
      %v299 = vld [vmem:[%s264 + $0x8] sm:$0xf]
      %v300 = vld [vmem:[%s264 + $0xc] sm:$0xf]
      %v301 = vld [vmem:[%s264 + $0x10] sm:$0xf]
      %v302 = vld [vmem:[%s264 + $0x14] sm:$0xf]
      %v303 = vld [vmem:[%s264 + $0x18] sm:$0xf]
      %v304 = vld [vmem:[%s264 + $0x1c] sm:$0xf]
      %v305 = vld [vmem:[%s264 + $0x20] sm:$0xf]
      %v306 = vld [vmem:[%s264 + $0x24] sm:$0xf]
      %v307 = vld [vmem:[%s264 + $0x28] sm:$0xf]
      %v308 = vld [vmem:[%s264 + $0x2c] sm:$0xf]
      %v309 = vld [vmem:[%s264 + $0x30] sm:$0xf]
      %v310 = vunpack.c.l.bf16 %v297
      %v311 = vunpack.c.l.bf16 %v298
      %v312 = vunpack.c.l.bf16 %v299
      %v313 = vunpack.c.l.bf16 %v300
      %v314 = vunpack.c.l.bf16 %v301
      %v315 = vunpack.c.l.bf16 %v302
      %v316 = vunpack.c.l.bf16 %v303
      %v317 = vunpack.c.l.bf16 %v304
      %v318 = vunpack.c.l.bf16 %v305
      %v319 = vunpack.c.l.bf16 %v306
      %v320 = vunpack.c.l.bf16 %v307
      %v321 = vunpack.c.l.bf16 %v308
      %v322 = vunpack.c.l.bf16 %v309
      %v323 = vld [vmem:[%s1] sm:$0x1]
      %v325 = vlaneseq
      %v326 = vshrl.u32 %v325, 7
      %v327 = vsub.s32 0, %v326
      %v328 = vrot.slane %v323, %v327
      %v330 = vmul.f32 %v310, %v328
      %v331 = vmul.f32 %v311, %v328
      %v332 = vmul.f32 %v312, %v328
      %v333 = vmul.f32 %v313, %v328
      %v334 = vmul.f32 %v314, %v328
      %v335 = vmul.f32 %v315, %v328
      %v336 = vmul.f32 %v316, %v328
      %v337 = vmul.f32 %v317, %v328
      %v338 = vmul.f32 %v318, %v328
      %v339 = vmul.f32 %v319, %v328
      %v340 = vmul.f32 %v320, %v328
      %v341 = vmul.f32 %v321, %v328
      %v342 = vmul.f32 %v322, %v328
      %v343 = vld [vmem:[%s2] sm:$0x1]
      %v345 = vlaneseq
      %v346 = vshrl.u32 %v345, 7
      %v347 = vsub.s32 0, %v346
      %v348 = vrot.slane %v343, %v347
      %v350 = vadd.f32 %v330, %v348
      %v351 = vadd.f32 %v331, %v348
      %v352 = vadd.f32 %v332, %v348
      %v353 = vadd.f32 %v333, %v348
      %v354 = vadd.f32 %v334, %v348
      %v355 = vadd.f32 %v335, %v348
      %v356 = vadd.f32 %v336, %v348
      %v357 = vadd.f32 %v337, %v348
      %v358 = vadd.f32 %v338, %v348
      %v359 = vadd.f32 %v339, %v348
      %v360 = vadd.f32 %v340, %v348
      %v361 = vadd.f32 %v341, %v348
      %v362 = vadd.f32 %v342, %v348
      %v363 = vmax.f32 %v350, 0.0
      %v364 = vmax.f32 %v351, 0.0
      %v365 = vmax.f32 %v352, 0.0
      %v366 = vmax.f32 %v353, 0.0
      %v367 = vmax.f32 %v354, 0.0
      %v368 = vmax.f32 %v355, 0.0
      %v369 = vmax.f32 %v356, 0.0
      %v370 = vmax.f32 %v357, 0.0
      %v371 = vmax.f32 %v358, 0.0
      %v372 = vmax.f32 %v359, 0.0
      %v373 = vmax.f32 %v360, 0.0
      %v374 = vmax.f32 %v361, 0.0
      %v375 = vmax.f32 %v362, 0.0
      %v376 = vld [vmem:[%s280] sm:$0xff]
      %v377 = vld [vmem:[%s280 + $0x8] sm:$0xff]
      %v378 = vld [vmem:[%s280 + $0x10] sm:$0xff]
      %v379 = vld [vmem:[%s280 + $0x18] sm:$0xff]
      %v380 = vld [vmem:[%s280 + $0x20] sm:$0xff]
      %v381 = vld [vmem:[%s280 + $0x28] sm:$0xff]
      %v382 = vld [vmem:[%s280 + $0x30] sm:$0xff]
      %v383 = vld [vmem:[%s280 + $0x38] sm:$0xff]
      %v384 = vld [vmem:[%s280 + $0x40] sm:$0xff]
      %v385 = vld [vmem:[%s280 + $0x48] sm:$0xff]
      %v386 = vld [vmem:[%s280 + $0x50] sm:$0xff]
      %v387 = vld [vmem:[%s280 + $0x58] sm:$0xff]
      %v388 = vld [vmem:[%s280 + $0x60] sm:$0xff]
      %vm389 = vcmp.gt.f32.partialorder %v376, 0.5
      %vm390 = vcmp.gt.f32.partialorder %v377, 0.5
      %vm391 = vcmp.gt.f32.partialorder %v378, 0.5
      %vm392 = vcmp.gt.f32.partialorder %v379, 0.5
      %vm393 = vcmp.gt.f32.partialorder %v380, 0.5
      %vm394 = vcmp.gt.f32.partialorder %v381, 0.5
      %vm395 = vcmp.gt.f32.partialorder %v382, 0.5
      %vm396 = vcmp.gt.f32.partialorder %v383, 0.5
      %vm397 = vcmp.gt.f32.partialorder %v384, 0.5
      %vm398 = vcmp.gt.f32.partialorder %v385, 0.5
      %vm399 = vcmp.gt.f32.partialorder %v386, 0.5
      %vm400 = vcmp.gt.f32.partialorder %v387, 0.5
      %vm401 = vcmp.gt.f32.partialorder %v388, 0.5
      %s402 = scalar_select %p296, 1, 0
      %v403 = vstv %s402
      %vm404 = vcmp.eq.s32.totalorder %v403, 1
      %vm405 = vmand %vm389, %vm404
      %vm406 = vmand %vm390, %vm404
      %vm407 = vmand %vm391, %vm404
      %vm408 = vmand %vm392, %vm404
      %vm409 = vmand %vm393, %vm404
      %vm410 = vmand %vm394, %vm404
      %vm411 = vmand %vm395, %vm404
      %vm412 = vmand %vm396, %vm404
      %vm413 = vmand %vm397, %vm404
      %vm414 = vmand %vm398, %vm404
      %vm415 = vmand %vm399, %vm404
      %vm416 = vmand %vm400, %vm404
      %vm417 = vmand %vm401, %vm404
      %v418 = vsel %vm405, 1, 0
      %v419 = vsel %vm406, 1, 0
      %v420 = vsel %vm407, 1, 0
      %v421 = vsel %vm408, 1, 0
      %v422 = vsel %vm409, 1, 0
      %v423 = vsel %vm410, 1, 0
      %v424 = vsel %vm411, 1, 0
      %v425 = vsel %vm412, 1, 0
      %v426 = vsel %vm413, 1, 0
      %v427 = vsel %vm414, 1, 0
      %v428 = vsel %vm415, 1, 0
      %v429 = vsel %vm416, 1, 0
      %v430 = vsel %vm417, 1, 0
      %431 = vset.pattern.permute.xlu0 0
      %432 = vperm.xlu0 %431, %v418
      %v433 = vpop.permute.xlu0 %432
      %434 = vset.pattern.permute.xlu0 0
      %435 = vperm.xlu0 %434, %v419
      %v436 = vpop.permute.xlu0 %435
      %437 = vset.pattern.permute.xlu0 0
      %438 = vperm.xlu0 %437, %v420
      %v439 = vpop.permute.xlu0 %438
      %440 = vset.pattern.permute.xlu0 0
      %441 = vperm.xlu0 %440, %v421
      %v442 = vpop.permute.xlu0 %441
      %443 = vset.pattern.permute.xlu0 0
      %444 = vperm.xlu0 %443, %v422
      %v445 = vpop.permute.xlu0 %444
      %446 = vset.pattern.permute.xlu0 0
      %447 = vperm.xlu0 %446, %v423
      %v448 = vpop.permute.xlu0 %447
      %449 = vset.pattern.permute.xlu0 0
      %450 = vperm.xlu0 %449, %v424
      %v451 = vpop.permute.xlu0 %450
      %452 = vset.pattern.permute.xlu0 0
      %453 = vperm.xlu0 %452, %v425
      %v454 = vpop.permute.xlu0 %453
      %455 = vset.pattern.permute.xlu0 0
      %456 = vperm.xlu0 %455, %v426
      %v457 = vpop.permute.xlu0 %456
      %458 = vset.pattern.permute.xlu0 0
      %459 = vperm.xlu0 %458, %v427
      %v460 = vpop.permute.xlu0 %459
      %461 = vset.pattern.permute.xlu0 0
      %462 = vperm.xlu0 %461, %v428
      %v463 = vpop.permute.xlu0 %462
      %464 = vset.pattern.permute.xlu0 0
      %465 = vperm.xlu0 %464, %v429
      %v466 = vpop.permute.xlu0 %465
      %467 = vset.pattern.permute.xlu0 0
      %468 = vperm.xlu0 %467, %v430
      %v469 = vpop.permute.xlu0 %468
      %vm470 = vcmp.eq.s32.totalorder %v433, 1
      %vm471 = vcmp.eq.s32.totalorder %v436, 1
      %vm472 = vcmp.eq.s32.totalorder %v439, 1
      %vm473 = vcmp.eq.s32.totalorder %v442, 1
      %vm474 = vcmp.eq.s32.totalorder %v445, 1
      %vm475 = vcmp.eq.s32.totalorder %v448, 1
      %vm476 = vcmp.eq.s32.totalorder %v451, 1
      %vm477 = vcmp.eq.s32.totalorder %v454, 1
      %vm478 = vcmp.eq.s32.totalorder %v457, 1
      %vm479 = vcmp.eq.s32.totalorder %v460, 1
      %vm480 = vcmp.eq.s32.totalorder %v463, 1
      %vm481 = vcmp.eq.s32.totalorder %v466, 1
      %vm482 = vcmp.eq.s32.totalorder %v469, 1
      %v483 = vsel %vm470, %v363, 0.0
      %v484 = vsel %vm471, %v364, 0.0
      %v485 = vsel %vm472, %v365, 0.0
      %v486 = vsel %vm473, %v366, 0.0
      %v487 = vsel %vm474, %v367, 0.0
      %v488 = vsel %vm475, %v368, 0.0
      %v489 = vsel %vm476, %v369, 0.0
      %v490 = vsel %vm477, %v370, 0.0
      %v491 = vsel %vm478, %v371, 0.0
      %v492 = vsel %vm479, %v372, 0.0
      %v493 = vsel %vm480, %v373, 0.0
      %v494 = vsel %vm481, %v374, 0.0
      %v495 = vsel %vm482, %v375, 0.0
      %v496 = vpack.c.bf16 %v484, %v483
      %v497 = vpack.c.bf16 %v486, %v485
      %v498 = vpack.c.bf16 %v488, %v487
      %v499 = vpack.c.bf16 %v490, %v489
      %v500 = vpack.c.bf16 %v492, %v491
      %v501 = vpack.c.bf16 %v494, %v493
      %v502 = vpack.c.bf16 %v495, %v495
      %v510 = vunpack.c.l.b16 %v496
      %v511 = vunpack.c.h.b16 %v496
      %v512 = vunpack.c.l.b16 %v497
      %v513 = vunpack.c.h.b16 %v497
      %v514 = vunpack.c.l.b16 %v498
      %v515 = vunpack.c.h.b16 %v498
      %v516 = vunpack.c.l.b16 %v499
      %v517 = vunpack.c.h.b16 %v499
      %v518 = vunpack.c.l.b16 %v500
      %v519 = vunpack.c.h.b16 %v500
      %v520 = vunpack.c.l.b16 %v501
      %v521 = vunpack.c.h.b16 %v501
      %v522 = vunpack.c.l.b16 %v502
      %v523 = vpack.c.b16 %v510, %v510
      %v524 = vpack.c.b16 %v511, %v511
      %v525 = vpack.c.b16 %v512, %v512
      %v526 = vpack.c.b16 %v513, %v513
      %v527 = vpack.c.b16 %v514, %v514
      %v528 = vpack.c.b16 %v515, %v515
      %v529 = vpack.c.b16 %v516, %v516
      %v530 = vpack.c.b16 %v517, %v517
      %v531 = vpack.c.b16 %v518, %v518
      %v532 = vpack.c.b16 %v519, %v519
      %v533 = vpack.c.b16 %v520, %v520
      %v534 = vpack.c.b16 %v521, %v521
      %v535 = vpack.c.b16 %v522, %v522
      %549 = vst [vmem:[%s291] sm:$0xf] %v523
      %550 = vst [vmem:[%s291 + $0x4] sm:$0xf] %v524
      %551 = vst [vmem:[%s291 + $0x8] sm:$0xf] %v525
      %552 = vst [vmem:[%s291 + $0xc] sm:$0xf] %v526
      %553 = vst [vmem:[%s291 + $0x10] sm:$0xf] %v527
      %554 = vst [vmem:[%s291 + $0x14] sm:$0xf] %v528
      %555 = vst [vmem:[%s291 + $0x18] sm:$0xf] %v529
      %556 = vst [vmem:[%s291 + $0x1c] sm:$0xf] %v530
      %557 = vst [vmem:[%s291 + $0x20] sm:$0xf] %v531
      %558 = vst [vmem:[%s291 + $0x24] sm:$0xf] %v532
      %559 = vst [vmem:[%s291 + $0x28] sm:$0xf] %v533
      %560 = vst [vmem:[%s291 + $0x2c] sm:$0xf] %v534
      %561 = vst [vmem:[%s291 + $0x30] sm:$0xf] %v535
      %s562 = smul.u32 13, %s15
      %p563 = scmp.lt.s32.totalorder %s562, 51
      %s564 = scalar_select %p563, %s562, 51
      %s565 = smul.addr %s564, 4
      %s566 = scalar_lea.vmem %s4, %s565
      // Predicated region
      $region37: #{residual_block_forward.6} parent=35 // pred_check
        %p567 = pneg %p147
      $region38: #{residual_block_forward.6} parent=35 // pred_check_branch
        %569 = sbr.rel (%p567) target = $region40
      $region39: #{residual_block_forward.6} parent=35 // pred_region
        %s570 = smul.u32 13, %s15
      $region40: #{residual_block_forward.6} parent=35 // pred_fallthru
        _
    $region36: #{residual_block_forward.6} parent=5 // pred_fallthru
      _
    %p571 = scmp.le.s32.totalorder 2, %s10
    // Predicated region
    $region41: #{residual_block_forward.6} parent=5 // pred_check
      %p572 = pneg %p571
    $region42: #{residual_block_forward.6} parent=5 // pred_check_branch
      %574 = sbr.rel (%p572) target = $region44
    $region43: #{residual_block_forward.6} parent=5 // pred_region
      %s575 = ssub.s32 %s10, 2
      // Predicated region
      $region45: #{residual_block_forward.6} parent=43 // pred_check
        %p576 = pneg %p153
      $region46: #{residual_block_forward.6} parent=43 // pred_check_branch
        %578 = sbr.rel (%p576) target = $region48
      $region47: #{residual_block_forward.6} parent=43 // pred_region
        %s579 = smul.u32 13, %s16
        %p580 = scmp.lt.s32.totalorder %s579, 51
        %s581 = scalar_select %p580, %s579, 51
        %s582 = smul.addr %s581, 4
        %s583 = scalar_lea.vmem %s4, %s582
      $region48: #{residual_block_forward.6} parent=43 // pred_fallthru
        _
    $region44: #{residual_block_forward.6} parent=5 // pred_fallthru
      _
  $region6: #{residual_block_forward.6} parent=0 // loop_footer
    %s14 = sadd.s32 1, %s10
  $region7: #{residual_block_forward.6} parent=0 // loop_footer_branch
    %9 = sbr.rel target = $region3
  $region8: #{residual_block_forward.6} parent=0 // loop_exit
    _

// kernel: residual_block_forward.8
$region0: #{residual_block_forward.8}
  #allocation0 [shape = 'u32[]', space=smem, size = 0x4, offset = 0x4, fixed_abs, tag = 'smem constant byte address 0x4 - core index']
  #allocation1 [shape = 'u32[144,128]{1,0:T(1,128)}', space=vmem, size = 0x12000, scoped, tag = 'internal scratch']
  %s0 = inlined_call_operand.vmem [shape: bf16[208,128], index: 0, kind: input, shape index: {}]
  %s1 = inlined_call_operand.vmem [shape: bf16[128,128], index: 1, kind: input, shape index: {}]
  %s2 = inlined_call_operand.vmem [shape: f32[2,2,128], index: 2, kind: output, shape index: {}]
  %s3 = sld [smem:[#allocation0]]
  $region41: #{residual_block_forward.8} parent=0
    _
  %s5 = ssub.s32 1, %s3
  %s6 = scalar_select 0, %s5, %s3
  loop: start=0, step=1, limit=4
  $region2: #{residual_block_forward.8} parent=0 // loop_pre_header
    _
  $region3: #{residual_block_forward.8} parent=0 // loop_header
    %s8 = sphi 0, %s12
    %p9 = scmp.ge.s32.totalorder %s8, 4
    %s18 = sphi 0, %s20
    %s21 = sphi 0, %s18
    %s22 = sphi 0, %s21
    %s38 = sphi 0, %s22
    %s42 = sphi 0, %s42
    %s44 = sphi 0, %s42
    %s45 = sphi 0, %s44
    %s59 = sphi 0, %s45
    %s65 = sphi 0, %s67
    %s68 = sphi 0, %s65
    %s69 = sphi 0, %s68
    %s85 = sphi 0, %s69
  $region4: #{residual_block_forward.8} parent=0 // loop_header_branch
    %11 = sbr.rel (%p9) target = $region8
  $region5: #{residual_block_forward.8} parent=0 // loop_body
    %s13 = ssub.s32 %s8, 1
    %s14 = ssub.s32 %s8, 2
    %s15 = sadd.s32 %s8, 1
    %s16 = ssub.s32 %s8, %s15
    %p17 = scmp.eq.s32.totalorder %s16, 0
    %s19 = sadd.s32 %s18, 1
    %s20 = scalar_select %p17, %s18, %s19
    %p23 = pneg %p17
    %p24 = scmp.eq.s32.totalorder %s8, 1
    %p25 = por %p23, %p24
    %p26 = scmp.ne.s32.totalorder %s18, %s21
    %p27 = scmp.eq.s32.totalorder %s8, 0
    %p28 = por %p26, %p27
    %p29 = scmp.ne.s32.totalorder %s18, %s21
    %p30 = scmp.eq.s32.totalorder %s13, 1
    %p31 = por %p29, %p30
    %p32 = scmp.ne.s32.totalorder %s21, %s22
    %p33 = scmp.eq.s32.totalorder %s13, 0
    %p34 = por %p32, %p33
    %p35 = scmp.ne.s32.totalorder %s21, %s22
    %p36 = scmp.eq.s32.totalorder %s14, 1
    %p37 = por %p35, %p36
    %p39 = scmp.ne.s32.totalorder %s22, %s38
    %p40 = scmp.eq.s32.totalorder %s14, 0
    %p41 = por %p39, %p40
    %s43 = sadd.s32 %s42, 1
    %p46 = scmp.eq.s32.totalorder %s8, 1
    %p47 = scmp.ne.s32.totalorder %s42, %s44
    %p48 = scmp.eq.s32.totalorder %s8, 0
    %p49 = por %p47, %p48
    %p50 = scmp.ne.s32.totalorder %s42, %s44
    %p51 = scmp.eq.s32.totalorder %s13, 1
    %p52 = por %p50, %p51
    %p53 = scmp.ne.s32.totalorder %s44, %s45
    %p54 = scmp.eq.s32.totalorder %s13, 0
    %p55 = por %p53, %p54
    %p56 = scmp.ne.s32.totalorder %s44, %s45
    %p57 = scmp.eq.s32.totalorder %s14, 1
    %p58 = por %p56, %p57
    %p60 = scmp.ne.s32.totalorder %s45, %s59
    %p61 = scmp.eq.s32.totalorder %s14, 0
    %p62 = por %p60, %p61
    %s63 = ssub.s32 %s8, %s15
    %p64 = scmp.eq.s32.totalorder %s63, 0
    %s66 = sadd.s32 %s65, 1
    %s67 = scalar_select %p64, %s65, %s66
    %p70 = pneg %p64
    %p71 = scmp.eq.s32.totalorder %s8, 1
    %p72 = por %p70, %p71
    %p73 = scmp.ne.s32.totalorder %s65, %s68
    %p74 = scmp.eq.s32.totalorder %s8, 0
    %p75 = por %p73, %p74
    %p76 = scmp.ne.s32.totalorder %s65, %s68
    %p77 = scmp.eq.s32.totalorder %s13, 1
    %p78 = por %p76, %p77
    %p79 = scmp.ne.s32.totalorder %s68, %s69
    %p80 = scmp.eq.s32.totalorder %s13, 0
    %p81 = por %p79, %p80
    %p82 = scmp.ne.s32.totalorder %s68, %s69
    %p83 = scmp.eq.s32.totalorder %s14, 1
    %p84 = por %p82, %p83
    %p86 = scmp.ne.s32.totalorder %s69, %s85
    %p87 = scmp.eq.s32.totalorder %s14, 0
    %p88 = por %p86, %p87
    %p89 = scmp.le.s32.totalorder 1, %s8
    %p90 = scmp.lt.s32.totalorder %s8, 3
    %p91 = pnand %p89, %p90
    %p92 = pneg %p91
    // Predicated region
    $region9: #{residual_block_forward.8} parent=5 // pred_check
      _
    $region10: #{residual_block_forward.8} parent=5 // pred_check_branch
      %94 = sbr.rel (%p91) target = $region12
    $region11: #{residual_block_forward.8} parent=5 // pred_region
      %s95 = ssub.s32 %s8, 1
      // Predicated region
      $region13: #{residual_block_forward.8} parent=11 // pred_check
        %p96 = pneg %p55
      $region14: #{residual_block_forward.8} parent=11 // pred_check_branch
        %98 = sbr.rel (%p96) target = $region16
      $region15: #{residual_block_forward.8} parent=11 // pred_region
        _
      $region16: #{residual_block_forward.8} parent=11 // pred_fallthru
        _
    $region12: #{residual_block_forward.8} parent=5 // pred_fallthru
      _
    %p99 = scmp.lt.s32.totalorder %s8, 2
    // Predicated region
    $region17: #{residual_block_forward.8} parent=5 // pred_check
      %p100 = pneg %p99
    $region18: #{residual_block_forward.8} parent=5 // pred_check_branch
      %102 = sbr.rel (%p100) target = $region20
    $region19: #{residual_block_forward.8} parent=5 // pred_region
      // Predicated region
      $region21: #{residual_block_forward.8} parent=19 // pred_check
        %p103 = pneg %p28
      $region22: #{residual_block_forward.8} parent=19 // pred_check_branch
        %105 = sbr.rel (%p103) target = $region24
      $region23: #{residual_block_forward.8} parent=19 // pred_region
        %s106 = smul.u32 13, %s8
        %p107 = scmp.lt.s32.totalorder %s106, 25
        %s108 = scalar_select %p107, %s106, 25
        %s109 = smul.addr %s108, 4
        %s110 = scalar_lea.vmem %s0, %s109
        %s111 = smul.u32 13, %s8
      $region24: #{residual_block_forward.8} parent=19 // pred_fallthru
        _
    $region20: #{residual_block_forward.8} parent=5 // pred_fallthru
      _
    %p112 = scmp.le.s32.totalorder 1, %s8
    %p113 = scmp.lt.s32.totalorder %s8, 3
    %p114 = pnand %p112, %p113
    %p115 = pneg %p114
    // Predicated region
    $region25: #{residual_block_forward.8} parent=5 // pred_check
      _
    $region26: #{residual_block_forward.8} parent=5 // pred_check_branch
      %117 = sbr.rel (%p114) target = $region28
    $region27: #{residual_block_forward.8} parent=5 // pred_region
      %s118 = ssub.s32 %s8, 1
      %s119 = smul.u32 13, %s13
      %p120 = scmp.lt.s32.totalorder %s119, 25
      %s121 = scalar_select %p120, %s119, 25
      %s122 = smul.addr %s121, 4
      %s123 = scalar_lea.vmem %s0, %s122
      %p124 = pneg %p34
      %p125 = pneg %p31
      %p126 = pneg %p55
      %p127 = pneg %p52
      %p128 = pneg %p81
      %p129 = pneg %p78
      %p130 = scmp.lt.s32.totalorder %s13, 1
      %s131 = scalar_select %p130, %s13, 1
      %s132 = smul.addr %s131, 2
      %s133 = scalar_lea.vmem %s2, %s132
      %s134 = smul.u32 13, %s13
      %p135 = scmp.lt.s32.totalorder %s134, 25
      %s136 = scalar_select %p135, %s134, 25
      %s137 = smul.addr %s136, 4
      %s138 = scalar_lea.vmem %s0, %s137
      %s139 = smul.u32 13, %s13
      %p140 = scmp.lt.s32.totalorder %s13, 1
      %s141 = scalar_select %p140, %s13, 1
      %s142 = smul.addr %s141, 2
      %s143 = scalar_lea.vmem %s2, %s142
      %v145 = vld [vmem:[%s138] sm:$0xf]
      %v146 = vld [vmem:[%s138 + $0x4] sm:$0xf]
      %v147 = vld [vmem:[%s138 + $0x8] sm:$0xf]
      %v148 = vld [vmem:[%s138 + $0xc] sm:$0xf]
      %v149 = vld [vmem:[%s138 + $0x10] sm:$0xf]
      %v150 = vld [vmem:[%s138 + $0x14] sm:$0xf]
      %v151 = vld [vmem:[%s138 + $0x18] sm:$0xf]
      %v152 = vld [vmem:[%s138 + $0x1c] sm:$0xf]
      %v153 = vld [vmem:[%s138 + $0x20] sm:$0xf]
      %v154 = vld [vmem:[%s138 + $0x24] sm:$0xf]
      %v155 = vld [vmem:[%s138 + $0x28] sm:$0xf]
      %v156 = vld [vmem:[%s138 + $0x2c] sm:$0xf]
      %v157 = vld [vmem:[%s138 + $0x30] sm:$0xf]
      %v158 = vld [vmem:[%s1] sm:$0xf]
      %v159 = vld [vmem:[%s1 + $0x4] sm:$0xf]
      %v160 = vld [vmem:[%s1 + $0x8] sm:$0xf]
      %v161 = vld [vmem:[%s1 + $0xc] sm:$0xf]
      %v162 = vld [vmem:[%s1 + $0x10] sm:$0xf]
      %v163 = vld [vmem:[%s1 + $0x14] sm:$0xf]
      %v164 = vld [vmem:[%s1 + $0x18] sm:$0xf]
      %v165 = vld [vmem:[%s1 + $0x1c] sm:$0xf]
      %v166 = vld [vmem:[%s1 + $0x20] sm:$0xf]
      %v167 = vld [vmem:[%s1 + $0x24] sm:$0xf]
      %v168 = vld [vmem:[%s1 + $0x28] sm:$0xf]
      %v169 = vld [vmem:[%s1 + $0x2c] sm:$0xf]
      %v170 = vld [vmem:[%s1 + $0x30] sm:$0xf]
      %v171 = vld [vmem:[%s1 + $0x34] sm:$0xf]
      %v172 = vld [vmem:[%s1 + $0x38] sm:$0xf]
      %v173 = vld [vmem:[%s1 + $0x3c] sm:$0xf]
      %v187 = vunpack.c.l.b16 %v145
      %v188 = vunpack.c.l.b16 %v146
      %v189 = vunpack.c.l.b16 %v147
      %v190 = vunpack.c.l.b16 %v148
      %v191 = vunpack.c.l.b16 %v149
      %v192 = vunpack.c.l.b16 %v150
      %v193 = vunpack.c.l.b16 %v151
      %v194 = vunpack.c.l.b16 %v152
      %v195 = vunpack.c.l.b16 %v153
      %v196 = vunpack.c.l.b16 %v154
      %v197 = vunpack.c.l.b16 %v155
      %v198 = vunpack.c.l.b16 %v156
      %v199 = vunpack.c.l.b16 %v157
      %v200 = vpack.c.b16 %v188, %v187
      %v201 = vpack.c.b16 %v190, %v189
      %v202 = vpack.c.b16 %v192, %v191
      %v203 = vpack.c.b16 %v194, %v193
      %v204 = vpack.c.b16 %v196, %v195
      %v205 = vpack.c.b16 %v198, %v197
      %v206 = vpack.c.b16 %v199, %v199
      %v230 = vunpack.c.l.b16 %v158
      %v231 = vunpack.c.l.b16 %v159
      %v232 = vunpack.c.l.b16 %v160
      %v233 = vunpack.c.l.b16 %v161
      %v234 = vunpack.c.l.b16 %v162
      %v235 = vunpack.c.l.b16 %v163
      %v236 = vunpack.c.l.b16 %v164
      %v237 = vunpack.c.l.b16 %v165
      %v238 = vunpack.c.l.b16 %v166
      %v239 = vunpack.c.l.b16 %v167
      %v240 = vunpack.c.l.b16 %v168
      %v241 = vunpack.c.l.b16 %v169
      %v242 = vunpack.c.l.b16 %v170
      %v243 = vunpack.c.l.b16 %v171
      %v244 = vunpack.c.l.b16 %v172
      %v245 = vunpack.c.l.b16 %v173
      %v246 = vpack.c.b16 %v231, %v230
      %v247 = vpack.c.b16 %v233, %v232
      %v248 = vpack.c.b16 %v235, %v234
      %v249 = vpack.c.b16 %v237, %v236
      %v250 = vpack.c.b16 %v239, %v238
      %v251 = vpack.c.b16 %v241, %v240
      %v252 = vpack.c.b16 %v243, %v242
      %v253 = vpack.c.b16 %v245, %v244
      %262 = vmatprep.subr.bf16.mxu0 0
      %263 = vmatpush1.bf16.msra.mxu0 %v253
      %264 = vmatprep.subr.bf16.mxu0 0
      %265 = vmatpush1.bf16.msra.mxu0 %v252
      %266 = vmatprep.subr.bf16.mxu0 0
      %267 = vmatpush1.bf16.msra.mxu0 %v251
      %268 = vmatprep.subr.bf16.mxu0 0
      %269 = vmatpush1.bf16.msra.mxu0 %v250
      %270 = vmatprep.subr.bf16.mxu0 0
      %271 = vmatpush1.bf16.msra.mxu0 %v249
      %272 = vmatprep.subr.bf16.mxu0 0
      %273 = vmatpush1.bf16.msra.mxu0 %v248
      %274 = vmatprep.subr.bf16.mxu0 0
      %275 = vmatpush1.bf16.msra.mxu0 %v247
      %276 = vmatprep.subr.bf16.mxu0 0
      %277 = vmatpush1.bf16.msra.mxu0 %v246
      %278 = vmatprep.subr.bf16.mxu0 0
      %279 = vmatpush2.bf16.msra.mxu0 0
      %280 = vmatprep.subr.bf16.mxu0 0
      %281 = vmatpush2.bf16.msra.mxu0 0
      %282 = vmatprep.subr.bf16.mxu0 0
      %283 = vmatpush2.bf16.msra.mxu0 0
      %284 = vmatprep.subr.bf16.mxu0 0
      %285 = vmatpush2.bf16.msra.mxu0 0
      %286 = vmatprep.subr.bf16.mxu0 0
      %287 = vmatpush2.bf16.msra.mxu0 0
      %288 = vmatprep.subr.bf16.mxu0 0
      %289 = vmatpush2.bf16.msra.mxu0 0
      %290 = vmatprep.subr.bf16.mxu0 0
      %291 = vmatpush2.bf16.msra.mxu0 0
      %292 = vmatprep.subr.bf16.mxu0 0
      %293 = vmatpush2.bf16.msra.mxu0 0
      %294 = vmatprep.mubr.bf16.mxu0 0
      %295 = vmatmul.mubr.bf16.gmra.mxu0 %v200
      %v296 = vpop.f32.mrf.mxu0
      %v297 = vadd.f32 0.0, %v296
      %v298 = vpop.f32.mrf.mxu0
      %v299 = vpop.f32.mrf.mxu0
      %v300 = vadd.f32 0.0, %v299
      %v301 = vpop.f32.mrf.mxu0
      %302 = vmatprep.mubr.bf16.mxu0 0
      %303 = vmatmul.mubr.bf16.gmra.mxu0 %v201
      %v304 = vpop.f32.mrf.mxu0
      %v305 = vadd.f32 0.0, %v304
      %v306 = vpop.f32.mrf.mxu0
      %v307 = vpop.f32.mrf.mxu0
      %v308 = vadd.f32 0.0, %v307
      %v309 = vpop.f32.mrf.mxu0
      %310 = vmatprep.mubr.bf16.mxu0 0
      %311 = vmatmul.mubr.bf16.gmra.mxu0 %v202
      %v312 = vpop.f32.mrf.mxu0
      %v313 = vadd.f32 0.0, %v312
      %v314 = vpop.f32.mrf.mxu0
      %v315 = vpop.f32.mrf.mxu0
      %v316 = vadd.f32 0.0, %v315
      %v317 = vpop.f32.mrf.mxu0
      %318 = vmatprep.mubr.bf16.mxu0 0
      %319 = vmatmul.mubr.bf16.gmra.mxu0 %v203
      %v320 = vpop.f32.mrf.mxu0
      %v321 = vadd.f32 0.0, %v320
      %v322 = vpop.f32.mrf.mxu0
      %v323 = vpop.f32.mrf.mxu0
      %v324 = vadd.f32 0.0, %v323
      %v325 = vpop.f32.mrf.mxu0
      %326 = vmatprep.mubr.bf16.mxu0 0
      %327 = vmatmul.mubr.bf16.gmra.mxu0 %v204
      %v328 = vpop.f32.mrf.mxu0
      %v329 = vadd.f32 0.0, %v328
      %v330 = vpop.f32.mrf.mxu0
      %v331 = vpop.f32.mrf.mxu0
      %v332 = vadd.f32 0.0, %v331
      %v333 = vpop.f32.mrf.mxu0
      %334 = vmatprep.mubr.bf16.mxu0 0
      %335 = vmatmul.mubr.bf16.gmra.mxu0 %v205
      %v336 = vpop.f32.mrf.mxu0
      %v337 = vadd.f32 0.0, %v336
      %v338 = vpop.f32.mrf.mxu0
      %v339 = vpop.f32.mrf.mxu0
      %v340 = vadd.f32 0.0, %v339
      %v341 = vpop.f32.mrf.mxu0
      %342 = vmatprep.mubr.bf16.mxu0 0
      %343 = vmatmul.mubr.bf16.gmra.mxu0 %v206
      %v344 = vpop.f32.mrf.mxu0
      %v345 = vadd.f32 0.0, %v344
      %v346 = vpop.f32.mrf.mxu0
      %v347 = vpop.f32.mrf.mxu0
      %v348 = vpop.f32.mrf.mxu0
      %349 = vdwg.mxu0
      %v350 = vadd.f32 %v297, %v300
      %v351 = vadd.f32 %v350, %v305
      %v352 = vadd.f32 %v351, %v308
      %v353 = vadd.f32 %v352, %v313
      %v354 = vadd.f32 %v353, %v316
      %v355 = vadd.f32 %v354, %v321
      %v356 = vadd.f32 %v355, %v324
      %v357 = vadd.f32 %v356, %v329
      %v358 = vadd.f32 %v357, %v332
      %v359 = vadd.f32 %v358, %v337
      %v360 = vadd.f32 %v359, %v340
      %v361 = vadd.f32 %v360, %v345
      %v362 = vrot.slane %v361, 4
      %v363 = vadd.f32 %v361, %v362
      %v364 = vrot.slane %v363, 2
      %v365 = vadd.f32 %v363, %v364
      %v366 = vrot.slane %v365, 1
      %v367 = vadd.f32 %v365, %v366
      %v368 = vmul.f32 %v297, %v297
      %v369 = vmul.f32 %v300, %v300
      %v370 = vmul.f32 %v305, %v305
      %v371 = vmul.f32 %v308, %v308
      %v372 = vmul.f32 %v313, %v313
      %v373 = vmul.f32 %v316, %v316
      %v374 = vmul.f32 %v321, %v321
      %v375 = vmul.f32 %v324, %v324
      %v376 = vmul.f32 %v329, %v329
      %v377 = vmul.f32 %v332, %v332
      %v378 = vmul.f32 %v337, %v337
      %v379 = vmul.f32 %v340, %v340
      %v380 = vmul.f32 %v345, %v345
      %v381 = vadd.f32 %v368, %v369
      %v382 = vadd.f32 %v381, %v370
      %v383 = vadd.f32 %v382, %v371
      %v384 = vadd.f32 %v383, %v372
      %v385 = vadd.f32 %v384, %v373
      %v386 = vadd.f32 %v385, %v374
      %v387 = vadd.f32 %v386, %v375
      %v388 = vadd.f32 %v387, %v376
      %v389 = vadd.f32 %v388, %v377
      %v390 = vadd.f32 %v389, %v378
      %v391 = vadd.f32 %v390, %v379
      %v392 = vadd.f32 %v391, %v380
      %v393 = vrot.slane %v392, 4
      %v394 = vadd.f32 %v392, %v393
      %v395 = vrot.slane %v394, 2
      %v396 = vadd.f32 %v394, %v395
      %v397 = vrot.slane %v396, 1
      %v398 = vadd.f32 %v396, %v397
      %vm399 = vcmask 1040384
      %v400 = vsel %vm399, %v367, %v398
      %401 = vst [vmem:[%s143] sm:$0x3] %v400
      %p402 = scmp.lt.s32.totalorder %s13, 1
      %s403 = scalar_select %p402, %s13, 1
      %s404 = smul.addr %s403, 2
      %s405 = scalar_lea.vmem %s2, %s404
      // Predicated region
      $region29: #{residual_block_forward.8} parent=27 // pred_check
        %p406 = pneg %p78
      $region30: #{residual_block_forward.8} parent=27 // pred_check_branch
        %408 = sbr.rel (%p406) target = $region32
      $region31: #{residual_block_forward.8} parent=27 // pred_region
        _
      $region32: #{residual_block_forward.8} parent=27 // pred_fallthru
        _
    $region28: #{residual_block_forward.8} parent=5 // pred_fallthru
      _
    %p409 = scmp.le.s32.totalorder 2, %s8
    // Predicated region
    $region33: #{residual_block_forward.8} parent=5 // pred_check
      %p410 = pneg %p409
    $region34: #{residual_block_forward.8} parent=5 // pred_check_branch
      %412 = sbr.rel (%p410) target = $region36
    $region35: #{residual_block_forward.8} parent=5 // pred_region
      %s413 = ssub.s32 %s8, 2
      // Predicated region
      $region37: #{residual_block_forward.8} parent=35 // pred_check
        %p414 = pneg %p84
      $region38: #{residual_block_forward.8} parent=35 // pred_check_branch
        %416 = sbr.rel (%p414) target = $region40
      $region39: #{residual_block_forward.8} parent=35 // pred_region
        %p417 = scmp.lt.s32.totalorder %s14, 1
        %s418 = scalar_select %p417, %s14, 1
        %s419 = smul.addr %s418, 2
        %s420 = scalar_lea.vmem %s2, %s419
      $region40: #{residual_block_forward.8} parent=35 // pred_fallthru
        _
    $region36: #{residual_block_forward.8} parent=5 // pred_fallthru
      _
  $region6: #{residual_block_forward.8} parent=0 // loop_footer
    %s12 = sadd.s32 1, %s8
  $region7: #{residual_block_forward.8} parent=0 // loop_footer_branch
    %7 = sbr.rel target = $region3
  $region8: #{residual_block_forward.8} parent=0 // loop_exit
    _

// kernel: residual_block_forward.9
$region0: #{residual_block_forward.9}
  #allocation0 [shape = 'u32[]', space=smem, size = 0x4, offset = 0x4, fixed_abs, tag = 'smem constant byte address 0x4 - core index']
  #allocation1 [shape = 'u32[144,128]{1,0:T(1,128)}', space=vmem, size = 0x12000, scoped, tag = 'internal scratch']
  %s0 = inlined_call_operand.vmem [shape: bf16[208,128], index: 0, kind: input, shape index: {}]
  %s1 = inlined_call_operand.vmem [shape: f32[1,128], index: 1, kind: input, shape index: {}]
  %s2 = inlined_call_operand.vmem [shape: f32[1,128], index: 2, kind: input, shape index: {}]
  %s3 = inlined_call_operand.vmem [shape: bf16[208,128], index: 3, kind: input, shape index: {}]
  %s4 = inlined_call_operand.vmem [shape: bf16[128,128], index: 4, kind: input, shape index: {}]
  %s5 = inlined_call_operand.vmem [shape: f32[1,128], index: 5, kind: input, shape index: {}]
  %s6 = inlined_call_operand.vmem [shape: f32[1,128], index: 6, kind: input, shape index: {}]
  %s7 = inlined_call_operand.vmem [shape: f32[208,128], index: 7, kind: output, shape index: {}]
  %s8 = sld [smem:[#allocation0]]
  $region61: #{residual_block_forward.9} parent=0
    _
  %s10 = ssub.s32 1, %s8
  %s11 = scalar_select 0, %s10, %s8
  loop: start=0, step=1, limit=4
  $region2: #{residual_block_forward.9} parent=0 // loop_pre_header
    _
  $region3: #{residual_block_forward.9} parent=0 // loop_header
    %s13 = sphi 0, %s17
    %p14 = scmp.ge.s32.totalorder %s13, 4
    %s23 = sphi 0, %s25
    %s26 = sphi 0, %s23
    %s27 = sphi 0, %s26
    %s43 = sphi 0, %s27
    %s47 = sphi 0, %s47
    %s49 = sphi 0, %s47
    %s50 = sphi 0, %s49
    %s64 = sphi 0, %s50
    %s68 = sphi 0, %s68
    %s70 = sphi 0, %s68
    %s71 = sphi 0, %s70
    %s85 = sphi 0, %s71
    %s91 = sphi 0, %s93
    %s94 = sphi 0, %s91
    %s95 = sphi 0, %s94
    %s111 = sphi 0, %s95
    %s115 = sphi 0, %s115
    %s117 = sphi 0, %s115
    %s118 = sphi 0, %s117
    %s132 = sphi 0, %s118
    %s136 = sphi 0, %s136
    %s138 = sphi 0, %s136
    %s139 = sphi 0, %s138
    %s153 = sphi 0, %s139
    %s157 = sphi 0, %s157
    %s159 = sphi 0, %s157
    %s160 = sphi 0, %s159
    %s174 = sphi 0, %s160
    %s180 = sphi 0, %s182
    %s183 = sphi 0, %s180
    %s184 = sphi 0, %s183
    %s200 = sphi 0, %s184
  $region4: #{residual_block_forward.9} parent=0 // loop_header_branch
    %16 = sbr.rel (%p14) target = $region8
  $region5: #{residual_block_forward.9} parent=0 // loop_body
    %s18 = ssub.s32 %s13, 1
    %s19 = ssub.s32 %s13, 2
    %s20 = sadd.s32 %s13, 1
    %s21 = ssub.s32 %s13, %s20
    %p22 = scmp.eq.s32.totalorder %s21, 0
    %s24 = sadd.s32 %s23, 1
    %s25 = scalar_select %p22, %s23, %s24
    %p28 = pneg %p22
    %p29 = scmp.eq.s32.totalorder %s13, 1
    %p30 = por %p28, %p29
    %p31 = scmp.ne.s32.totalorder %s23, %s26
    %p32 = scmp.eq.s32.totalorder %s13, 0
    %p33 = por %p31, %p32
    %p34 = scmp.ne.s32.totalorder %s23, %s26
    %p35 = scmp.eq.s32.totalorder %s18, 1
    %p36 = por %p34, %p35
    %p37 = scmp.ne.s32.totalorder %s26, %s27
    %p38 = scmp.eq.s32.totalorder %s18, 0
    %p39 = por %p37, %p38
    %p40 = scmp.ne.s32.totalorder %s26, %s27
    %p41 = scmp.eq.s32.totalorder %s19, 1
    %p42 = por %p40, %p41
    %p44 = scmp.ne.s32.totalorder %s27, %s43
    %p45 = scmp.eq.s32.totalorder %s19, 0
    %p46 = por %p44, %p45
    %s48 = sadd.s32 %s47, 1
    %p51 = scmp.eq.s32.totalorder %s13, 1
    %p52 = scmp.ne.s32.totalorder %s47, %s49
    %p53 = scmp.eq.s32.totalorder %s13, 0
    %p54 = por %p52, %p53
    %p55 = scmp.ne.s32.totalorder %s47, %s49
    %p56 = scmp.eq.s32.totalorder %s18, 1
    %p57 = por %p55, %p56
    %p58 = scmp.ne.s32.totalorder %s49, %s50
    %p59 = scmp.eq.s32.totalorder %s18, 0
    %p60 = por %p58, %p59
    %p61 = scmp.ne.s32.totalorder %s49, %s50
    %p62 = scmp.eq.s32.totalorder %s19, 1
    %p63 = por %p61, %p62
    %p65 = scmp.ne.s32.totalorder %s50, %s64
    %p66 = scmp.eq.s32.totalorder %s19, 0
    %p67 = por %p65, %p66
    %s69 = sadd.s32 %s68, 1
    %p72 = scmp.eq.s32.totalorder %s13, 1
    %p73 = scmp.ne.s32.totalorder %s68, %s70
    %p74 = scmp.eq.s32.totalorder %s13, 0
    %p75 = por %p73, %p74
    %p76 = scmp.ne.s32.totalorder %s68, %s70
    %p77 = scmp.eq.s32.totalorder %s18, 1
    %p78 = por %p76, %p77
    %p79 = scmp.ne.s32.totalorder %s70, %s71
    %p80 = scmp.eq.s32.totalorder %s18, 0
    %p81 = por %p79, %p80
    %p82 = scmp.ne.s32.totalorder %s70, %s71
    %p83 = scmp.eq.s32.totalorder %s19, 1
    %p84 = por %p82, %p83
    %p86 = scmp.ne.s32.totalorder %s71, %s85
    %p87 = scmp.eq.s32.totalorder %s19, 0
    %p88 = por %p86, %p87
    %s89 = ssub.s32 %s13, %s20
    %p90 = scmp.eq.s32.totalorder %s89, 0
    %s92 = sadd.s32 %s91, 1
    %s93 = scalar_select %p90, %s91, %s92
    %p96 = pneg %p90
    %p97 = scmp.eq.s32.totalorder %s13, 1
    %p98 = por %p96, %p97
    %p99 = scmp.ne.s32.totalorder %s91, %s94
    %p100 = scmp.eq.s32.totalorder %s13, 0
    %p101 = por %p99, %p100
    %p102 = scmp.ne.s32.totalorder %s91, %s94
    %p103 = scmp.eq.s32.totalorder %s18, 1
    %p104 = por %p102, %p103
    %p105 = scmp.ne.s32.totalorder %s94, %s95
    %p106 = scmp.eq.s32.totalorder %s18, 0
    %p107 = por %p105, %p106
    %p108 = scmp.ne.s32.totalorder %s94, %s95
    %p109 = scmp.eq.s32.totalorder %s19, 1
    %p110 = por %p108, %p109
    %p112 = scmp.ne.s32.totalorder %s95, %s111
    %p113 = scmp.eq.s32.totalorder %s19, 0
    %p114 = por %p112, %p113
    %s116 = sadd.s32 %s115, 1
    %p119 = scmp.eq.s32.totalorder %s13, 1
    %p120 = scmp.ne.s32.totalorder %s115, %s117
    %p121 = scmp.eq.s32.totalorder %s13, 0
    %p122 = por %p120, %p121
    %p123 = scmp.ne.s32.totalorder %s115, %s117
    %p124 = scmp.eq.s32.totalorder %s18, 1
    %p125 = por %p123, %p124
    %p126 = scmp.ne.s32.totalorder %s117, %s118
    %p127 = scmp.eq.s32.totalorder %s18, 0
    %p128 = por %p126, %p127
    %p129 = scmp.ne.s32.totalorder %s117, %s118
    %p130 = scmp.eq.s32.totalorder %s19, 1
    %p131 = por %p129, %p130
    %p133 = scmp.ne.s32.totalorder %s118, %s132
    %p134 = scmp.eq.s32.totalorder %s19, 0
    %p135 = por %p133, %p134
    %s137 = sadd.s32 %s136, 1
    %p140 = scmp.eq.s32.totalorder %s13, 1
    %p141 = scmp.ne.s32.totalorder %s136, %s138
    %p142 = scmp.eq.s32.totalorder %s13, 0
    %p143 = por %p141, %p142
    %p144 = scmp.ne.s32.totalorder %s136, %s138
    %p145 = scmp.eq.s32.totalorder %s18, 1
    %p146 = por %p144, %p145
    %p147 = scmp.ne.s32.totalorder %s138, %s139
    %p148 = scmp.eq.s32.totalorder %s18, 0
    %p149 = por %p147, %p148
    %p150 = scmp.ne.s32.totalorder %s138, %s139
    %p151 = scmp.eq.s32.totalorder %s19, 1
    %p152 = por %p150, %p151
    %p154 = scmp.ne.s32.totalorder %s139, %s153
    %p155 = scmp.eq.s32.totalorder %s19, 0
    %p156 = por %p154, %p155
    %s158 = sadd.s32 %s157, 1
    %p161 = scmp.eq.s32.totalorder %s13, 1
    %p162 = scmp.ne.s32.totalorder %s157, %s159
    %p163 = scmp.eq.s32.totalorder %s13, 0
    %p164 = por %p162, %p163
    %p165 = scmp.ne.s32.totalorder %s157, %s159
    %p166 = scmp.eq.s32.totalorder %s18, 1
    %p167 = por %p165, %p166
    %p168 = scmp.ne.s32.totalorder %s159, %s160
    %p169 = scmp.eq.s32.totalorder %s18, 0
    %p170 = por %p168, %p169
    %p171 = scmp.ne.s32.totalorder %s159, %s160
    %p172 = scmp.eq.s32.totalorder %s19, 1
    %p173 = por %p171, %p172
    %p175 = scmp.ne.s32.totalorder %s160, %s174
    %p176 = scmp.eq.s32.totalorder %s19, 0
    %p177 = por %p175, %p176
    %s178 = ssub.s32 %s13, %s20
    %p179 = scmp.eq.s32.totalorder %s178, 0
    %s181 = sadd.s32 %s180, 1
    %s182 = scalar_select %p179, %s180, %s181
    %p185 = pneg %p179
    %p186 = scmp.eq.s32.totalorder %s13, 1
    %p187 = por %p185, %p186
    %p188 = scmp.ne.s32.totalorder %s180, %s183
    %p189 = scmp.eq.s32.totalorder %s13, 0
    %p190 = por %p188, %p189
    %p191 = scmp.ne.s32.totalorder %s180, %s183
    %p192 = scmp.eq.s32.totalorder %s18, 1
    %p193 = por %p191, %p192
    %p194 = scmp.ne.s32.totalorder %s183, %s184
    %p195 = scmp.eq.s32.totalorder %s18, 0
    %p196 = por %p194, %p195
    %p197 = scmp.ne.s32.totalorder %s183, %s184
    %p198 = scmp.eq.s32.totalorder %s19, 1
    %p199 = por %p197, %p198
    %p201 = scmp.ne.s32.totalorder %s184, %s200
    %p202 = scmp.eq.s32.totalorder %s19, 0
    %p203 = por %p201, %p202
    %p204 = scmp.le.s32.totalorder 1, %s13
    %p205 = scmp.lt.s32.totalorder %s13, 3
    %p206 = pnand %p204, %p205
    %p207 = pneg %p206
    // Predicated region
    $region9: #{residual_block_forward.9} parent=5 // pred_check
      _
    $region10: #{residual_block_forward.9} parent=5 // pred_check_branch
      %209 = sbr.rel (%p206) target = $region12
    $region11: #{residual_block_forward.9} parent=5 // pred_region
      %s210 = ssub.s32 %s13, 1
      // Predicated region
      $region13: #{residual_block_forward.9} parent=11 // pred_check
        %p211 = pneg %p60
      $region14: #{residual_block_forward.9} parent=11 // pred_check_branch
        %213 = sbr.rel (%p211) target = $region16
      $region15: #{residual_block_forward.9} parent=11 // pred_region
        _
      $region16: #{residual_block_forward.9} parent=11 // pred_fallthru
        _
      // Predicated region
      $region17: #{residual_block_forward.9} parent=11 // pred_check
        %p214 = pneg %p81
      $region18: #{residual_block_forward.9} parent=11 // pred_check_branch
        %216 = sbr.rel (%p214) target = $region20
      $region19: #{residual_block_forward.9} parent=11 // pred_region
        _
      $region20: #{residual_block_forward.9} parent=11 // pred_fallthru
        _
      // Predicated region
      $region21: #{residual_block_forward.9} parent=11 // pred_check
        %p217 = pneg %p128
      $region22: #{residual_block_forward.9} parent=11 // pred_check_branch
        %219 = sbr.rel (%p217) target = $region24
      $region23: #{residual_block_forward.9} parent=11 // pred_region
        _
      $region24: #{residual_block_forward.9} parent=11 // pred_fallthru
        _
      // Predicated region
      $region25: #{residual_block_forward.9} parent=11 // pred_check
        %p220 = pneg %p149
      $region26: #{residual_block_forward.9} parent=11 // pred_check_branch
        %222 = sbr.rel (%p220) target = $region28
      $region27: #{residual_block_forward.9} parent=11 // pred_region
        _
      $region28: #{residual_block_forward.9} parent=11 // pred_fallthru
        _
      // Predicated region
      $region29: #{residual_block_forward.9} parent=11 // pred_check
        %p223 = pneg %p170
      $region30: #{residual_block_forward.9} parent=11 // pred_check_branch
        %225 = sbr.rel (%p223) target = $region32
      $region31: #{residual_block_forward.9} parent=11 // pred_region
        _
      $region32: #{residual_block_forward.9} parent=11 // pred_fallthru
        _
    $region12: #{residual_block_forward.9} parent=5 // pred_fallthru
      _
    %p226 = scmp.lt.s32.totalorder %s13, 2
    // Predicated region
    $region33: #{residual_block_forward.9} parent=5 // pred_check
      %p227 = pneg %p226
    $region34: #{residual_block_forward.9} parent=5 // pred_check_branch
      %229 = sbr.rel (%p227) target = $region36
    $region35: #{residual_block_forward.9} parent=5 // pred_region
      // Predicated region
      $region37: #{residual_block_forward.9} parent=35 // pred_check
        %p230 = pneg %p33
      $region38: #{residual_block_forward.9} parent=35 // pred_check_branch
        %232 = sbr.rel (%p230) target = $region40
      $region39: #{residual_block_forward.9} parent=35 // pred_region
        %s233 = smul.u32 13, %s13
        %p234 = scmp.lt.s32.totalorder %s233, 25
        %s235 = scalar_select %p234, %s233, 25
        %s236 = smul.addr %s235, 4
        %s237 = scalar_lea.vmem %s0, %s236
        %s238 = smul.u32 13, %s13
      $region40: #{residual_block_forward.9} parent=35 // pred_fallthru
        _
      // Predicated region
      $region41: #{residual_block_forward.9} parent=35 // pred_check
        %p239 = pneg %p101
      $region42: #{residual_block_forward.9} parent=35 // pred_check_branch
        %241 = sbr.rel (%p239) target = $region44
      $region43: #{residual_block_forward.9} parent=35 // pred_region
        %s242 = smul.u32 13, %s13
        %p243 = scmp.lt.s32.totalorder %s242, 25
        %s244 = scalar_select %p243, %s242, 25
        %s245 = smul.addr %s244, 4
        %s246 = scalar_lea.vmem %s3, %s245
        %s247 = smul.u32 13, %s13
      $region44: #{residual_block_forward.9} parent=35 // pred_fallthru
        _
    $region36: #{residual_block_forward.9} parent=5 // pred_fallthru
      _
    %p248 = scmp.le.s32.totalorder 1, %s13
    %p249 = scmp.lt.s32.totalorder %s13, 3
    %p250 = pnand %p248, %p249
    %p251 = pneg %p250
    // Predicated region
    $region45: #{residual_block_forward.9} parent=5 // pred_check
      _
    $region46: #{residual_block_forward.9} parent=5 // pred_check_branch
      %253 = sbr.rel (%p250) target = $region48
    $region47: #{residual_block_forward.9} parent=5 // pred_region
      %s254 = ssub.s32 %s13, 1
      %s255 = smul.u32 13, %s18
      %p256 = scmp.lt.s32.totalorder %s255, 25
      %s257 = scalar_select %p256, %s255, 25
      %s258 = smul.addr %s257, 4
      %s259 = scalar_lea.vmem %s0, %s258
      %p260 = pneg %p39
      %p261 = pneg %p36
      %p262 = pneg %p60
      %p263 = pneg %p57
      %p264 = pneg %p81
      %p265 = pneg %p78
      %s266 = smul.u32 13, %s18
      %p267 = scmp.lt.s32.totalorder %s266, 25
      %s268 = scalar_select %p267, %s266, 25
      %s269 = smul.addr %s268, 4
      %s270 = scalar_lea.vmem %s3, %s269
      %p271 = pneg %p107
      %p272 = pneg %p104
      %p273 = pneg %p128
      %p274 = pneg %p125
      %p275 = pneg %p149
      %p276 = pneg %p146
      %p277 = pneg %p170
      %p278 = pneg %p167
      %p279 = pneg %p196
      %p280 = pneg %p193
      %s281 = smul.u32 13, %s18
      %p282 = scmp.lt.s32.totalorder %s281, 25
      %s283 = scalar_select %p282, %s281, 25
      %s284 = smul.addr %s283, 8
      %s285 = scalar_lea.vmem %s7, %s284
      %s286 = smul.u32 13, %s18
      %p287 = scmp.lt.s32.totalorder %s286, 25
      %s288 = scalar_select %p287, %s286, 25
      %s289 = smul.addr %s288, 4
      %s290 = scalar_lea.vmem %s0, %s289
      %s291 = smul.u32 13, %s18
      %s292 = smul.u32 13, %s18
      %p293 = scmp.lt.s32.totalorder %s292, 25
      %s294 = scalar_select %p293, %s292, 25
      %s295 = smul.addr %s294, 4
      %s296 = scalar_lea.vmem %s3, %s295
      %s297 = smul.u32 13, %s18
      %s298 = smul.u32 13, %s18
      %p299 = scmp.lt.s32.totalorder %s298, 25
      %s300 = scalar_select %p299, %s298, 25
      %s301 = smul.addr %s300, 8
      %s302 = scalar_lea.vmem %s7, %s301
      %s303 = smul.u32 13, %s18
      %v305 = vld [vmem:[%s290] sm:$0xf]
      %v306 = vld [vmem:[%s290 + $0x4] sm:$0xf]
      %v307 = vld [vmem:[%s290 + $0x8] sm:$0xf]
      %v308 = vld [vmem:[%s290 + $0xc] sm:$0xf]
      %v309 = vld [vmem:[%s290 + $0x10] sm:$0xf]
      %v310 = vld [vmem:[%s290 + $0x14] sm:$0xf]
      %v311 = vld [vmem:[%s290 + $0x18] sm:$0xf]
      %v312 = vld [vmem:[%s290 + $0x1c] sm:$0xf]
      %v313 = vld [vmem:[%s290 + $0x20] sm:$0xf]
      %v314 = vld [vmem:[%s290 + $0x24] sm:$0xf]
      %v315 = vld [vmem:[%s290 + $0x28] sm:$0xf]
      %v316 = vld [vmem:[%s290 + $0x2c] sm:$0xf]
      %v317 = vld [vmem:[%s290 + $0x30] sm:$0xf]
      %v318 = vunpack.c.l.bf16 %v305
      %v319 = vunpack.c.l.bf16 %v306
      %v320 = vunpack.c.l.bf16 %v307
      %v321 = vunpack.c.l.bf16 %v308
      %v322 = vunpack.c.l.bf16 %v309
      %v323 = vunpack.c.l.bf16 %v310
      %v324 = vunpack.c.l.bf16 %v311
      %v325 = vunpack.c.l.bf16 %v312
      %v326 = vunpack.c.l.bf16 %v313
      %v327 = vunpack.c.l.bf16 %v314
      %v328 = vunpack.c.l.bf16 %v315
      %v329 = vunpack.c.l.bf16 %v316
      %v330 = vunpack.c.l.bf16 %v317
      %v331 = vld [vmem:[%s1] sm:$0x1]
      %v333 = vlaneseq
      %v334 = vshrl.u32 %v333, 7
      %v335 = vsub.s32 0, %v334
      %v336 = vrot.slane %v331, %v335
      %v338 = vmul.f32 %v318, %v336
      %v339 = vmul.f32 %v319, %v336
      %v340 = vmul.f32 %v320, %v336
      %v341 = vmul.f32 %v321, %v336
      %v342 = vmul.f32 %v322, %v336
      %v343 = vmul.f32 %v323, %v336
      %v344 = vmul.f32 %v324, %v336
      %v345 = vmul.f32 %v325, %v336
      %v346 = vmul.f32 %v326, %v336
      %v347 = vmul.f32 %v327, %v336
      %v348 = vmul.f32 %v328, %v336
      %v349 = vmul.f32 %v329, %v336
      %v350 = vmul.f32 %v330, %v336
      %v351 = vld [vmem:[%s2] sm:$0x1]
      %v353 = vlaneseq
      %v354 = vshrl.u32 %v353, 7
      %v355 = vsub.s32 0, %v354
      %v356 = vrot.slane %v351, %v355
      %v358 = vadd.f32 %v338, %v356
      %v359 = vadd.f32 %v339, %v356
      %v360 = vadd.f32 %v340, %v356
      %v361 = vadd.f32 %v341, %v356
      %v362 = vadd.f32 %v342, %v356
      %v363 = vadd.f32 %v343, %v356
      %v364 = vadd.f32 %v344, %v356
      %v365 = vadd.f32 %v345, %v356
      %v366 = vadd.f32 %v346, %v356
      %v367 = vadd.f32 %v347, %v356
      %v368 = vadd.f32 %v348, %v356
      %v369 = vadd.f32 %v349, %v356
      %v370 = vadd.f32 %v350, %v356
      %v371 = vld [vmem:[%s296] sm:$0xf]
      %v372 = vld [vmem:[%s296 + $0x4] sm:$0xf]
      %v373 = vld [vmem:[%s296 + $0x8] sm:$0xf]
      %v374 = vld [vmem:[%s296 + $0xc] sm:$0xf]
      %v375 = vld [vmem:[%s296 + $0x10] sm:$0xf]
      %v376 = vld [vmem:[%s296 + $0x14] sm:$0xf]
      %v377 = vld [vmem:[%s296 + $0x18] sm:$0xf]
      %v378 = vld [vmem:[%s296 + $0x1c] sm:$0xf]
      %v379 = vld [vmem:[%s296 + $0x20] sm:$0xf]
      %v380 = vld [vmem:[%s296 + $0x24] sm:$0xf]
      %v381 = vld [vmem:[%s296 + $0x28] sm:$0xf]
      %v382 = vld [vmem:[%s296 + $0x2c] sm:$0xf]
      %v383 = vld [vmem:[%s296 + $0x30] sm:$0xf]
      %v384 = vld [vmem:[%s4] sm:$0xf]
      %v385 = vld [vmem:[%s4 + $0x4] sm:$0xf]
      %v386 = vld [vmem:[%s4 + $0x8] sm:$0xf]
      %v387 = vld [vmem:[%s4 + $0xc] sm:$0xf]
      %v388 = vld [vmem:[%s4 + $0x10] sm:$0xf]
      %v389 = vld [vmem:[%s4 + $0x14] sm:$0xf]
      %v390 = vld [vmem:[%s4 + $0x18] sm:$0xf]
      %v391 = vld [vmem:[%s4 + $0x1c] sm:$0xf]
      %v392 = vld [vmem:[%s4 + $0x20] sm:$0xf]
      %v393 = vld [vmem:[%s4 + $0x24] sm:$0xf]
      %v394 = vld [vmem:[%s4 + $0x28] sm:$0xf]
      %v395 = vld [vmem:[%s4 + $0x2c] sm:$0xf]
      %v396 = vld [vmem:[%s4 + $0x30] sm:$0xf]
      %v397 = vld [vmem:[%s4 + $0x34] sm:$0xf]
      %v398 = vld [vmem:[%s4 + $0x38] sm:$0xf]
      %v399 = vld [vmem:[%s4 + $0x3c] sm:$0xf]
      %v413 = vunpack.c.l.b16 %v371
      %v414 = vunpack.c.l.b16 %v372
      %v415 = vunpack.c.l.b16 %v373
      %v416 = vunpack.c.l.b16 %v374
      %v417 = vunpack.c.l.b16 %v375
      %v418 = vunpack.c.l.b16 %v376
      %v419 = vunpack.c.l.b16 %v377
      %v420 = vunpack.c.l.b16 %v378
      %v421 = vunpack.c.l.b16 %v379
      %v422 = vunpack.c.l.b16 %v380
      %v423 = vunpack.c.l.b16 %v381
      %v424 = vunpack.c.l.b16 %v382
      %v425 = vunpack.c.l.b16 %v383
      %v426 = vpack.c.b16 %v414, %v413
      %v427 = vpack.c.b16 %v416, %v415
      %v428 = vpack.c.b16 %v418, %v417
      %v429 = vpack.c.b16 %v420, %v419
      %v430 = vpack.c.b16 %v422, %v421
      %v431 = vpack.c.b16 %v424, %v423
      %v432 = vpack.c.b16 %v425, %v425
      %v456 = vunpack.c.l.b16 %v384
      %v457 = vunpack.c.l.b16 %v385
      %v458 = vunpack.c.l.b16 %v386
      %v459 = vunpack.c.l.b16 %v387
      %v460 = vunpack.c.l.b16 %v388
      %v461 = vunpack.c.l.b16 %v389
      %v462 = vunpack.c.l.b16 %v390
      %v463 = vunpack.c.l.b16 %v391
      %v464 = vunpack.c.l.b16 %v392
      %v465 = vunpack.c.l.b16 %v393
      %v466 = vunpack.c.l.b16 %v394
      %v467 = vunpack.c.l.b16 %v395
      %v468 = vunpack.c.l.b16 %v396
      %v469 = vunpack.c.l.b16 %v397
      %v470 = vunpack.c.l.b16 %v398
      %v471 = vunpack.c.l.b16 %v399
      %v472 = vpack.c.b16 %v457, %v456
      %v473 = vpack.c.b16 %v459, %v458
      %v474 = vpack.c.b16 %v461, %v460
      %v475 = vpack.c.b16 %v463, %v462
      %v476 = vpack.c.b16 %v465, %v464
      %v477 = vpack.c.b16 %v467, %v466
      %v478 = vpack.c.b16 %v469, %v468
      %v479 = vpack.c.b16 %v471, %v470
      %488 = vmatprep.subr.bf16.mxu0 0
      %489 = vmatpush1.bf16.msra.mxu0 %v479
      %490 = vmatprep.subr.bf16.mxu0 0
      %491 = vmatpush1.bf16.msra.mxu0 %v478
      %492 = vmatprep.subr.bf16.mxu0 0
      %493 = vmatpush1.bf16.msra.mxu0 %v477
      %494 = vmatprep.subr.bf16.mxu0 0
      %495 = vmatpush1.bf16.msra.mxu0 %v476
      %496 = vmatprep.subr.bf16.mxu0 0
      %497 = vmatpush1.bf16.msra.mxu0 %v475
      %498 = vmatprep.subr.bf16.mxu0 0
      %499 = vmatpush1.bf16.msra.mxu0 %v474
      %500 = vmatprep.subr.bf16.mxu0 0
      %501 = vmatpush1.bf16.msra.mxu0 %v473
      %502 = vmatprep.subr.bf16.mxu0 0
      %503 = vmatpush1.bf16.msra.mxu0 %v472
      %504 = vmatprep.subr.bf16.mxu0 0
      %505 = vmatpush2.bf16.msra.mxu0 0
      %506 = vmatprep.subr.bf16.mxu0 0
      %507 = vmatpush2.bf16.msra.mxu0 0
      %508 = vmatprep.subr.bf16.mxu0 0
      %509 = vmatpush2.bf16.msra.mxu0 0
      %510 = vmatprep.subr.bf16.mxu0 0
      %511 = vmatpush2.bf16.msra.mxu0 0
      %512 = vmatprep.subr.bf16.mxu0 0
      %513 = vmatpush2.bf16.msra.mxu0 0
      %514 = vmatprep.subr.bf16.mxu0 0
      %515 = vmatpush2.bf16.msra.mxu0 0
      %516 = vmatprep.subr.bf16.mxu0 0
      %517 = vmatpush2.bf16.msra.mxu0 0
      %518 = vmatprep.subr.bf16.mxu0 0
      %519 = vmatpush2.bf16.msra.mxu0 0
      %520 = vmatprep.mubr.bf16.mxu0 0
      %521 = vmatmul.mubr.bf16.gmra.mxu0 %v426
      %v522 = vpop.f32.mrf.mxu0
      %v523 = vadd.f32 0.0, %v522
      %v524 = vpop.f32.mrf.mxu0
      %v525 = vpop.f32.mrf.mxu0
      %v526 = vadd.f32 0.0, %v525
      %v527 = vpop.f32.mrf.mxu0
      %528 = vmatprep.mubr.bf16.mxu0 0
      %529 = vmatmul.mubr.bf16.gmra.mxu0 %v427
      %v530 = vpop.f32.mrf.mxu0
      %v531 = vadd.f32 0.0, %v530
      %v532 = vpop.f32.mrf.mxu0
      %v533 = vpop.f32.mrf.mxu0
      %v534 = vadd.f32 0.0, %v533
      %v535 = vpop.f32.mrf.mxu0
      %536 = vmatprep.mubr.bf16.mxu0 0
      %537 = vmatmul.mubr.bf16.gmra.mxu0 %v428
      %v538 = vpop.f32.mrf.mxu0
      %v539 = vadd.f32 0.0, %v538
      %v540 = vpop.f32.mrf.mxu0
      %v541 = vpop.f32.mrf.mxu0
      %v542 = vadd.f32 0.0, %v541
      %v543 = vpop.f32.mrf.mxu0
      %544 = vmatprep.mubr.bf16.mxu0 0
      %545 = vmatmul.mubr.bf16.gmra.mxu0 %v429
      %v546 = vpop.f32.mrf.mxu0
      %v547 = vadd.f32 0.0, %v546
      %v548 = vpop.f32.mrf.mxu0
      %v549 = vpop.f32.mrf.mxu0
      %v550 = vadd.f32 0.0, %v549
      %v551 = vpop.f32.mrf.mxu0
      %552 = vmatprep.mubr.bf16.mxu0 0
      %553 = vmatmul.mubr.bf16.gmra.mxu0 %v430
      %v554 = vpop.f32.mrf.mxu0
      %v555 = vadd.f32 0.0, %v554
      %v556 = vpop.f32.mrf.mxu0
      %v557 = vpop.f32.mrf.mxu0
      %v558 = vadd.f32 0.0, %v557
      %v559 = vpop.f32.mrf.mxu0
      %560 = vmatprep.mubr.bf16.mxu0 0
      %561 = vmatmul.mubr.bf16.gmra.mxu0 %v431
      %v562 = vpop.f32.mrf.mxu0
      %v563 = vadd.f32 0.0, %v562
      %v564 = vpop.f32.mrf.mxu0
      %v565 = vpop.f32.mrf.mxu0
      %v566 = vadd.f32 0.0, %v565
      %v567 = vpop.f32.mrf.mxu0
      %568 = vmatprep.mubr.bf16.mxu0 0
      %569 = vmatmul.mubr.bf16.gmra.mxu0 %v432
      %v570 = vpop.f32.mrf.mxu0
      %v571 = vadd.f32 0.0, %v570
      %v572 = vpop.f32.mrf.mxu0
      %v573 = vpop.f32.mrf.mxu0
      %v574 = vpop.f32.mrf.mxu0
      %575 = vdwg.mxu0
      %v576 = vld [vmem:[%s5] sm:$0x1]
      %v578 = vlaneseq
      %v579 = vshrl.u32 %v578, 7
      %v580 = vsub.s32 0, %v579
      %v581 = vrot.slane %v576, %v580
      %v583 = vmul.f32 %v523, %v581
      %v584 = vmul.f32 %v526, %v581
      %v585 = vmul.f32 %v531, %v581
      %v586 = vmul.f32 %v534, %v581
      %v587 = vmul.f32 %v539, %v581
      %v588 = vmul.f32 %v542, %v581
      %v589 = vmul.f32 %v547, %v581
      %v590 = vmul.f32 %v550, %v581
      %v591 = vmul.f32 %v555, %v581
      %v592 = vmul.f32 %v558, %v581
      %v593 = vmul.f32 %v563, %v581
      %v594 = vmul.f32 %v566, %v581
      %v595 = vmul.f32 %v571, %v581
      %v596 = vadd.f32 %v358, %v583
      %v597 = vadd.f32 %v359, %v584
      %v598 = vadd.f32 %v360, %v585
      %v599 = vadd.f32 %v361, %v586
      %v600 = vadd.f32 %v362, %v587
      %v601 = vadd.f32 %v363, %v588
      %v602 = vadd.f32 %v364, %v589
      %v603 = vadd.f32 %v365, %v590
      %v604 = vadd.f32 %v366, %v591
      %v605 = vadd.f32 %v367, %v592
      %v606 = vadd.f32 %v368, %v593
      %v607 = vadd.f32 %v369, %v594
      %v608 = vadd.f32 %v370, %v595
      %v609 = vld [vmem:[%s6] sm:$0x1]
      %v611 = vlaneseq
      %v612 = vshrl.u32 %v611, 7
      %v613 = vsub.s32 0, %v612
      %v614 = vrot.slane %v609, %v613
      %v616 = vadd.f32 %v596, %v614
      %v617 = vadd.f32 %v597, %v614
      %v618 = vadd.f32 %v598, %v614
      %v619 = vadd.f32 %v599, %v614
      %v620 = vadd.f32 %v600, %v614
      %v621 = vadd.f32 %v601, %v614
      %v622 = vadd.f32 %v602, %v614
      %v623 = vadd.f32 %v603, %v614
      %v624 = vadd.f32 %v604, %v614
      %v625 = vadd.f32 %v605, %v614
      %v626 = vadd.f32 %v606, %v614
      %v627 = vadd.f32 %v607, %v614
      %v628 = vadd.f32 %v608, %v614
      %v629 = vmax.f32 %v616, 0.0
      %v630 = vmax.f32 %v617, 0.0
      %v631 = vmax.f32 %v618, 0.0
      %v632 = vmax.f32 %v619, 0.0
      %v633 = vmax.f32 %v620, 0.0
      %v634 = vmax.f32 %v621, 0.0
      %v635 = vmax.f32 %v622, 0.0
      %v636 = vmax.f32 %v623, 0.0
      %v637 = vmax.f32 %v624, 0.0
      %v638 = vmax.f32 %v625, 0.0
      %v639 = vmax.f32 %v626, 0.0
      %v640 = vmax.f32 %v627, 0.0
      %v641 = vmax.f32 %v628, 0.0
      %642 = vst [vmem:[%s302] sm:$0xff] %v629
      %643 = vst [vmem:[%s302 + $0x8] sm:$0xff] %v630
      %644 = vst [vmem:[%s302 + $0x10] sm:$0xff] %v631
      %645 = vst [vmem:[%s302 + $0x18] sm:$0xff] %v632
      %646 = vst [vmem:[%s302 + $0x20] sm:$0xff] %v633
      %647 = vst [vmem:[%s302 + $0x28] sm:$0xff] %v634
      %648 = vst [vmem:[%s302 + $0x30] sm:$0xff] %v635
      %649 = vst [vmem:[%s302 + $0x38] sm:$0xff] %v636
      %650 = vst [vmem:[%s302 + $0x40] sm:$0xff] %v637
      %651 = vst [vmem:[%s302 + $0x48] sm:$0xff] %v638
      %652 = vst [vmem:[%s302 + $0x50] sm:$0xff] %v639
      %653 = vst [vmem:[%s302 + $0x58] sm:$0xff] %v640
      %654 = vst [vmem:[%s302 + $0x60] sm:$0xff] %v641
      %s655 = smul.u32 13, %s18
      %p656 = scmp.lt.s32.totalorder %s655, 25
      %s657 = scalar_select %p656, %s655, 25
      %s658 = smul.addr %s657, 8
      %s659 = scalar_lea.vmem %s7, %s658
      // Predicated region
      $region49: #{residual_block_forward.9} parent=47 // pred_check
        %p660 = pneg %p193
      $region50: #{residual_block_forward.9} parent=47 // pred_check_branch
        %662 = sbr.rel (%p660) target = $region52
      $region51: #{residual_block_forward.9} parent=47 // pred_region
        %s663 = smul.u32 13, %s18
      $region52: #{residual_block_forward.9} parent=47 // pred_fallthru
        _
    $region48: #{residual_block_forward.9} parent=5 // pred_fallthru
      _
    %p664 = scmp.le.s32.totalorder 2, %s13
    // Predicated region
    $region53: #{residual_block_forward.9} parent=5 // pred_check
      %p665 = pneg %p664
    $region54: #{residual_block_forward.9} parent=5 // pred_check_branch
      %667 = sbr.rel (%p665) target = $region56
    $region55: #{residual_block_forward.9} parent=5 // pred_region
      %s668 = ssub.s32 %s13, 2
      // Predicated region
      $region57: #{residual_block_forward.9} parent=55 // pred_check
        %p669 = pneg %p199
      $region58: #{residual_block_forward.9} parent=55 // pred_check_branch
        %671 = sbr.rel (%p669) target = $region60
      $region59: #{residual_block_forward.9} parent=55 // pred_region
        %s672 = smul.u32 13, %s19
        %p673 = scmp.lt.s32.totalorder %s672, 25
        %s674 = scalar_select %p673, %s672, 25
        %s675 = smul.addr %s674, 8
        %s676 = scalar_lea.vmem %s7, %s675
      $region60: #{residual_block_forward.9} parent=55 // pred_fallthru
        _
    $region56: #{residual_block_forward.9} parent=5 // pred_fallthru
      _
  $region6: #{residual_block_forward.9} parent=0 // loop_footer
    %s17 = sadd.s32 1, %s13
  $region7: #{residual_block_forward.9} parent=0 // loop_footer_branch
    %12 = sbr.rel target = $region3
  $region8: #{residual_block_forward.9} parent=0 // loop_exit
    _

// kernel: residual_block_forward.7
$region0: #{residual_block_forward.7}
  #allocation0 [shape = 'u32[]', space=smem, size = 0x4, offset = 0x4, fixed_abs, tag = 'smem constant byte address 0x4 - core index']
  #allocation1 [shape = 'u32[144,128]{1,0:T(1,128)}', space=vmem, size = 0x12000, scoped, tag = 'internal scratch']
  #allocation2 [shape = 'bf16[2,136,128]{2,1,0:T(8,128)(2,1)}', space=vmem, size = 0x11000, scoped, tag = 'scratch operand']
  #allocation3 [shape = 's32[2]{0}', space=sflag, size = 0x8, scoped, tag = 'scratch operand']
  #allocation4 [shape = 's32[]', space=sflag, size = 0x4, offset = 0, fixed_abs, tag = 'sflag constant byte address 0x0 - dummy sync flag']
  #allocation5 [shape = 's32[]', space=sflag, size = 0x4, offset = 0, fixed_abs, tag = 'sflag constant byte address 0x0 - dummy sync flag']
  %s0 = inlined_call_operand.vmem [shape: f32[208,1], index: 0, kind: input, shape index: {}]
  %s1 = inlined_call_operand.vmem [shape: bf16[1152,128], index: 1, kind: input, shape index: {}]
  %s2 = inlined_call_operand.vmem [shape: bf16[416,128], index: 2, kind: input, shape index: {}]
  %s3 = inlined_call_operand.vmem [shape: bf16[208,128], index: 3, kind: output, shape index: {0}]
  %s4 = inlined_call_operand.vmem [shape: f32[2,2,128], index: 4, kind: output, shape index: {1}]
  %5 = xla_tuple %s3, %s4
  %s6 = sld [smem:[#allocation0]]
  $region131: #{residual_block_forward.7} parent=0
    _
  %s8 = ssub.s32 1, %s6
  %s9 = scalar_select 0, %s8, %s6
  loop: start=0, step=1, limit=4
  $region2: #{residual_block_forward.7} parent=0 // loop_pre_header
    _
  $region3: #{residual_block_forward.7} parent=0 // loop_header
    %s11 = sphi 0, %s15
    %p12 = scmp.ge.s32.totalorder %s11, 4
    %s21 = sphi 0, %s23
    %s24 = sphi 0, %s21
    %s25 = sphi 0, %s24
    %s41 = sphi 0, %s25
    %s45 = sphi 0, %s45
    %s47 = sphi 0, %s45
    %s48 = sphi 0, %s47
    %s62 = sphi 0, %s48
    %s68 = sphi 0, %s70
    %s71 = sphi 0, %s68
    %s72 = sphi 0, %s71
    %s88 = sphi 0, %s72
    %s94 = sphi 0, %s96
    %s97 = sphi 0, %s94
    %s98 = sphi 0, %s97
    %s114 = sphi 0, %s98
  $region4: #{residual_block_forward.7} parent=0 // loop_header_branch
    %14 = sbr.rel (%p12) target = $region8
  $region5: #{residual_block_forward.7} parent=0 // loop_body
    %s16 = ssub.s32 %s11, 1
    %s17 = ssub.s32 %s11, 2
    %s18 = sadd.s32 %s11, 1
    %s19 = ssub.s32 %s11, %s18
    %p20 = scmp.eq.s32.totalorder %s19, 0
    %s22 = sadd.s32 %s21, 1
    %s23 = scalar_select %p20, %s21, %s22
    %p26 = pneg %p20
    %p27 = scmp.eq.s32.totalorder %s11, 1
    %p28 = por %p26, %p27
    %p29 = scmp.ne.s32.totalorder %s21, %s24
    %p30 = scmp.eq.s32.totalorder %s11, 0
    %p31 = por %p29, %p30
    %p32 = scmp.ne.s32.totalorder %s21, %s24
    %p33 = scmp.eq.s32.totalorder %s16, 1
    %p34 = por %p32, %p33
    %p35 = scmp.ne.s32.totalorder %s24, %s25
    %p36 = scmp.eq.s32.totalorder %s16, 0
    %p37 = por %p35, %p36
    %p38 = scmp.ne.s32.totalorder %s24, %s25
    %p39 = scmp.eq.s32.totalorder %s17, 1
    %p40 = por %p38, %p39
    %p42 = scmp.ne.s32.totalorder %s25, %s41
    %p43 = scmp.eq.s32.totalorder %s17, 0
    %p44 = por %p42, %p43
    %s46 = sadd.s32 %s45, 1
    %p49 = scmp.eq.s32.totalorder %s11, 1
    %p50 = scmp.ne.s32.totalorder %s45, %s47
    %p51 = scmp.eq.s32.totalorder %s11, 0
    %p52 = por %p50, %p51
    %p53 = scmp.ne.s32.totalorder %s45, %s47
    %p54 = scmp.eq.s32.totalorder %s16, 1
    %p55 = por %p53, %p54
    %p56 = scmp.ne.s32.totalorder %s47, %s48
    %p57 = scmp.eq.s32.totalorder %s16, 0
    %p58 = por %p56, %p57
    %p59 = scmp.ne.s32.totalorder %s47, %s48
    %p60 = scmp.eq.s32.totalorder %s17, 1
    %p61 = por %p59, %p60
    %p63 = scmp.ne.s32.totalorder %s48, %s62
    %p64 = scmp.eq.s32.totalorder %s17, 0
    %p65 = por %p63, %p64
    %s66 = ssub.s32 %s11, %s18
    %p67 = scmp.eq.s32.totalorder %s66, 0
    %s69 = sadd.s32 %s68, 1
    %s70 = scalar_select %p67, %s68, %s69
    %p73 = pneg %p67
    %p74 = scmp.eq.s32.totalorder %s11, 1
    %p75 = por %p73, %p74
    %p76 = scmp.ne.s32.totalorder %s68, %s71
    %p77 = scmp.eq.s32.totalorder %s11, 0
    %p78 = por %p76, %p77
    %p79 = scmp.ne.s32.totalorder %s68, %s71
    %p80 = scmp.eq.s32.totalorder %s16, 1
    %p81 = por %p79, %p80
    %p82 = scmp.ne.s32.totalorder %s71, %s72
    %p83 = scmp.eq.s32.totalorder %s16, 0
    %p84 = por %p82, %p83
    %p85 = scmp.ne.s32.totalorder %s71, %s72
    %p86 = scmp.eq.s32.totalorder %s17, 1
    %p87 = por %p85, %p86
    %p89 = scmp.ne.s32.totalorder %s72, %s88
    %p90 = scmp.eq.s32.totalorder %s17, 0
    %p91 = por %p89, %p90
    %s92 = ssub.s32 %s11, %s18
    %p93 = scmp.eq.s32.totalorder %s92, 0
    %s95 = sadd.s32 %s94, 1
    %s96 = scalar_select %p93, %s94, %s95
    %p99 = pneg %p93
    %p100 = scmp.eq.s32.totalorder %s11, 1
    %p101 = por %p99, %p100
    %p102 = scmp.ne.s32.totalorder %s94, %s97
    %p103 = scmp.eq.s32.totalorder %s11, 0
    %p104 = por %p102, %p103
    %p105 = scmp.ne.s32.totalorder %s94, %s97
    %p106 = scmp.eq.s32.totalorder %s16, 1
    %p107 = por %p105, %p106
    %p108 = scmp.ne.s32.totalorder %s97, %s98
    %p109 = scmp.eq.s32.totalorder %s16, 0
    %p110 = por %p108, %p109
    %p111 = scmp.ne.s32.totalorder %s97, %s98
    %p112 = scmp.eq.s32.totalorder %s17, 1
    %p113 = por %p111, %p112
    %p115 = scmp.ne.s32.totalorder %s98, %s114
    %p116 = scmp.eq.s32.totalorder %s17, 0
    %p117 = por %p115, %p116
    %p118 = scmp.le.s32.totalorder 1, %s11
    %p119 = scmp.lt.s32.totalorder %s11, 3
    %p120 = pnand %p118, %p119
    %p121 = pneg %p120
    // Predicated region
    $region9: #{residual_block_forward.7} parent=5 // pred_check
      _
    $region10: #{residual_block_forward.7} parent=5 // pred_check_branch
      %123 = sbr.rel (%p120) target = $region12
    $region11: #{residual_block_forward.7} parent=5 // pred_region
      %s124 = ssub.s32 %s11, 1
      // Predicated region
      $region13: #{residual_block_forward.7} parent=11 // pred_check
        %p125 = pneg %p58
      $region14: #{residual_block_forward.7} parent=11 // pred_check_branch
        %127 = sbr.rel (%p125) target = $region16
      $region15: #{residual_block_forward.7} parent=11 // pred_region
        _
      $region16: #{residual_block_forward.7} parent=11 // pred_fallthru
        _
    $region12: #{residual_block_forward.7} parent=5 // pred_fallthru
      _
    %p128 = scmp.lt.s32.totalorder %s11, 2
    // Predicated region
    $region17: #{residual_block_forward.7} parent=5 // pred_check
      %p129 = pneg %p128
    $region18: #{residual_block_forward.7} parent=5 // pred_check_branch
      %131 = sbr.rel (%p129) target = $region20
    $region19: #{residual_block_forward.7} parent=5 // pred_region
      // Predicated region
      $region21: #{residual_block_forward.7} parent=19 // pred_check
        %p132 = pneg %p31
      $region22: #{residual_block_forward.7} parent=19 // pred_check_branch
        %134 = sbr.rel (%p132) target = $region24
      $region23: #{residual_block_forward.7} parent=19 // pred_region
        %s135 = smul.u32 13, %s11
        %p136 = scmp.lt.s32.totalorder %s135, 25
        %s137 = scalar_select %p136, %s135, 25
        %s138 = smul.addr %s137, 8
        %s139 = scalar_lea.vmem %s0, %s138
        %s140 = smul.u32 13, %s11
      $region24: #{residual_block_forward.7} parent=19 // pred_fallthru
        _
    $region20: #{residual_block_forward.7} parent=5 // pred_fallthru
      _
    %p141 = scmp.le.s32.totalorder 1, %s11
    %p142 = scmp.lt.s32.totalorder %s11, 3
    %p143 = pnand %p141, %p142
    %p144 = pneg %p143
    // Predicated region
    $region25: #{residual_block_forward.7} parent=5 // pred_check
      _
    $region26: #{residual_block_forward.7} parent=5 // pred_check_branch
      %146 = sbr.rel (%p143) target = $region28
    $region27: #{residual_block_forward.7} parent=5 // pred_region
      %s147 = ssub.s32 %s11, 1
      %s148 = smul.u32 13, %s16
      %p149 = scmp.lt.s32.totalorder %s148, 25
      %s150 = scalar_select %p149, %s148, 25
      %s151 = smul.addr %s150, 8
      %s152 = scalar_lea.vmem %s0, %s151
      %p153 = pneg %p37
      %p154 = pneg %p34
      %p155 = pneg %p58
      %p156 = pneg %p55
      %p157 = pneg %p84
      %p158 = pneg %p81
      %s159 = smul.u32 13, %s16
      %p160 = scmp.lt.s32.totalorder %s159, 25
      %s161 = scalar_select %p160, %s159, 25
      %s162 = smul.addr %s161, 4
      %s163 = scalar_lea.vmem %s3, %s162
      %p164 = pneg %p110
      %p165 = pneg %p107
      %p166 = scmp.lt.s32.totalorder %s16, 1
      %s167 = scalar_select %p166, %s16, 1
      %s168 = smul.addr %s167, 2
      %s169 = scalar_lea.vmem %s4, %s168
      %s170 = smul.u32 13, %s16
      %p171 = scmp.lt.s32.totalorder %s170, 25
      %s172 = scalar_select %p171, %s170, 25
      %s173 = smul.addr %s172, 8
      %s174 = scalar_lea.vmem %s0, %s173
      %s175 = smul.u32 13, %s16
      %s176 = smul.u32 13, %s16
      %p177 = scmp.lt.s32.totalorder %s176, 25
      %s178 = scalar_select %p177, %s176, 25
      %s179 = smul.addr %s178, 4
      %s180 = scalar_lea.vmem %s3, %s179
      %s181 = smul.u32 13, %s16
      %p182 = scmp.lt.s32.totalorder %s16, 1
      %s183 = scalar_select %p182, %s16, 1
      %s184 = smul.addr %s183, 2
      %s185 = scalar_lea.vmem %s4, %s184
      %p187 = scmp.eq.s32.totalorder %s16, 0
      // Predicated region
      $region29: #{residual_block_forward.7} parent=27 // pred_check
        %p188 = pneg %p187
      $region30: #{residual_block_forward.7} parent=27 // pred_check_branch
        %190 = sbr.rel (%p188) target = $region32
      $region31: #{residual_block_forward.7} parent=27 // pred_region
        %s191 = scalar_lea.vmem %s2, 44
        %p193 = scmp.lt.u32.totalorder 68, 8
        %p194 = pneg %p193
        // Predicated region
        $region33: #{residual_block_forward.7} parent=31 // pred_check
          _
        $region34: #{residual_block_forward.7} parent=31 // pred_check_branch
          %196 = sbr.rel (%p193) target = $region36
        $region35: #{residual_block_forward.7} parent=31 // pred_region
          %s212 = sand.u32 68, 7
          %p213 = scmp.eq.s32.totalorder %s212, 0
          %p214 = pneg %p213
          // Predicated region
          $region48: #{residual_block_forward.7} parent=35 // pred_check
            _
          $region49: #{residual_block_forward.7} parent=35 // pred_check_branch
            %216 = sbr.rel (%p213) target = $region51
          $region50: #{residual_block_forward.7} parent=35 // pred_region
            %s217 = sand.u32 68, 7
            %s218 = ssub.s32 68, %s217
            %s219 = scalar_lea.vmem %s191, %s218
            %s220 = ssub.s32 68, %s217
            %s221 = scalar_lea.vmem [#allocation2], %s220
            loop: start=0, step=1, limit=1
            $region52: #{residual_block_forward.7} parent=50 // loop_pre_header
              _
            $region53: #{residual_block_forward.7} parent=50 // loop_header
              %s223 = sphi 0, %s227
              %p224 = scmp.ge.s32.totalorder %s223, 1
              %s228 = sphi %s191, %s191
              %s229 = sphi [#allocation2], [#allocation2]
            $region54: #{residual_block_forward.7} parent=50 // loop_header_branch
              %226 = sbr.rel (%p224) target = $region58
            $region55: #{residual_block_forward.7} parent=50 // loop_body
              %v230 = vld [vmem:[%s228] sm:$0xff]
              %231 = vst [vmem:[%s229] sm:$0xff] %v230
              %v232 = vld [vmem:[%s228 + $0x8] sm:$0xff]
              %233 = vst [vmem:[%s229 + $0x8] sm:$0xff] %v232
              %v234 = vld [vmem:[%s228 + $0x10] sm:$0xff]
              %235 = vst [vmem:[%s229 + $0x10] sm:$0xff] %v234
              %v236 = vld [vmem:[%s228 + $0x18] sm:$0xff]
              %237 = vst [vmem:[%s229 + $0x18] sm:$0xff] %v236
              %v238 = vld [vmem:[%s228 + $0x20] sm:$0xff]
              %239 = vst [vmem:[%s229 + $0x20] sm:$0xff] %v238
              %v240 = vld [vmem:[%s228 + $0x28] sm:$0xff]
              %241 = vst [vmem:[%s229 + $0x28] sm:$0xff] %v240
              %v242 = vld [vmem:[%s228 + $0x30] sm:$0xff]
              %243 = vst [vmem:[%s229 + $0x30] sm:$0xff] %v242
              %v244 = vld [vmem:[%s228 + $0x38] sm:$0xff]
              %245 = vst [vmem:[%s229 + $0x38] sm:$0xff] %v244
            $region56: #{residual_block_forward.7} parent=50 // loop_footer
              %s227 = sadd.s32 1, %s223
            $region57: #{residual_block_forward.7} parent=50 // loop_footer_branch
              %222 = sbr.rel target = $region53
            $region58: #{residual_block_forward.7} parent=50 // loop_exit
              _
            %s246 = sshll.u32 1, %s217
            %s247 = ssub.s32 %s246, 1
            loop: start=0, step=1, limit=1
            $region59: #{residual_block_forward.7} parent=50 // loop_pre_header
              _
            $region60: #{residual_block_forward.7} parent=50 // loop_header
              %s249 = sphi 0, %s253
              %p250 = scmp.ge.s32.totalorder %s249, 1
              %s254 = sphi %s219, %s219
              %s255 = sphi %s221, %s221
            $region61: #{residual_block_forward.7} parent=50 // loop_header_branch
              %252 = sbr.rel (%p250) target = $region65
            $region62: #{residual_block_forward.7} parent=50 // loop_body
              %v256 = vld [vmem:[%s254] sm:%s247]
              %257 = vst [vmem:[%s255] sm:%s247] %v256
            $region63: #{residual_block_forward.7} parent=50 // loop_footer
              %s253 = sadd.s32 1, %s249
            $region64: #{residual_block_forward.7} parent=50 // loop_footer_branch
              %248 = sbr.rel target = $region60
            $region65: #{residual_block_forward.7} parent=50 // loop_exit
              _
          $region51: #{residual_block_forward.7} parent=35 // pred_fallthru
            _
        $region36: #{residual_block_forward.7} parent=31 // pred_fallthru
          _
        // Predicated region
        $region37: #{residual_block_forward.7} parent=31 // pred_check
          %p197 = pneg %p193
        $region38: #{residual_block_forward.7} parent=31 // pred_check_branch
          %199 = sbr.rel (%p197) target = $region40
        $region39: #{residual_block_forward.7} parent=31 // pred_region
          %s200 = sshll.u32 1, 68
          %s201 = ssub.s32 %s200, 1
          loop: start=0, step=1, limit=1
          $region41: #{residual_block_forward.7} parent=39 // loop_pre_header
            _
          $region42: #{residual_block_forward.7} parent=39 // loop_header
            %s203 = sphi 0, %s207
            %p204 = scmp.ge.s32.totalorder %s203, 1
            %s208 = sphi %s191, %s191
            %s209 = sphi [#allocation2], [#allocation2]
          $region43: #{residual_block_forward.7} parent=39 // loop_header_branch
            %206 = sbr.rel (%p204) target = $region47
          $region44: #{residual_block_forward.7} parent=39 // loop_body
            %v210 = vld [vmem:[%s208] sm:%s201]
            %211 = vst [vmem:[%s209] sm:%s201] %v210
          $region45: #{residual_block_forward.7} parent=39 // loop_footer
            %s207 = sadd.s32 1, %s203
          $region46: #{residual_block_forward.7} parent=39 // loop_footer_branch
            %202 = sbr.rel target = $region42
          $region47: #{residual_block_forward.7} parent=39 // loop_exit
            _
        $region40: #{residual_block_forward.7} parent=31 // pred_fallthru
          _
        // Predicated region
        $region66: #{residual_block_forward.7} parent=31 // pred_check
          _
        $region67: #{residual_block_forward.7} parent=31 // pred_check_branch
          %260 = sbr.rel (0) target = $region69
        $region68: #{residual_block_forward.7} parent=31 // pred_region
          %261 = vsyncadd [#allocation3], 1088
        $region69: #{residual_block_forward.7} parent=31 // pred_fallthru
          _
      $region32: #{residual_block_forward.7} parent=27 // pred_fallthru
        _
      %p262 = scmp.lt.s32.totalorder %s16, 0
      %s263 = ssub.s32 0, %s16
      %s264 = scalar_select %p262, %s263, %s16
      %s265 = sand.u32 %s264, 1
      %s266 = ssub.s32 0, %s265
      %s267 = scalar_select %p262, %s266, %s265
      %s268 = smul.u32 %s267, 17
      %s269 = smul.addr %s268, 4
      %s270 = scalar_lea.vmem [#allocation2], %s269
      %s271 = scalar_lea.sflag [#allocation3], %s267
      %s272 = smul.u32 4, 17
      %s273 = smul.u32 %s272, 1
      %s274 = sshll.u32 %s273, 4
      %275 = dma.done %s271, %s274
      %s276 = sadd.s32 %s16, 1
      %p277 = scmp.lt.s32.totalorder %s276, 2
      // Predicated region
      $region70: #{residual_block_forward.7} parent=27 // pred_check
        %p278 = pneg %p277
      $region71: #{residual_block_forward.7} parent=27 // pred_check_branch
        %280 = sbr.rel (%p278) target = $region73
      $region72: #{residual_block_forward.7} parent=27 // pred_region
        %s281 = ssub.s32 1, %s267
        %s282 = smul.u32 %s276, 104
        %s283 = sadd.s32 %s282, 88
        %s284 = sshra.s32 %s283, 3
        %s285 = sand.u32 %s283, 7
        %s286 = smul.addr %s284, 4
        %s287 = scalar_lea.vmem %s2, %s286
        %s288 = smul.u32 %s281, 17
        %s289 = smul.addr %s288, 4
        %s290 = scalar_lea.vmem [#allocation2], %s289
        %s291 = scalar_lea.sflag [#allocation3], %s281
        %p293 = scmp.lt.u32.totalorder 68, 8
        %p294 = pneg %p293
        // Predicated region
        $region74: #{residual_block_forward.7} parent=72 // pred_check
          _
        $region75: #{residual_block_forward.7} parent=72 // pred_check_branch
          %296 = sbr.rel (%p293) target = $region77
        $region76: #{residual_block_forward.7} parent=72 // pred_region
          %s312 = sand.u32 68, 7
          %p313 = scmp.eq.s32.totalorder %s312, 0
          %p314 = pneg %p313
          // Predicated region
          $region89: #{residual_block_forward.7} parent=76 // pred_check
            _
          $region90: #{residual_block_forward.7} parent=76 // pred_check_branch
            %316 = sbr.rel (%p313) target = $region92
          $region91: #{residual_block_forward.7} parent=76 // pred_region
            %s317 = sand.u32 68, 7
            %s318 = ssub.s32 68, %s317
            %s319 = scalar_lea.vmem %s287, %s318
            %s320 = ssub.s32 68, %s317
            %s321 = scalar_lea.vmem %s290, %s320 [#allocation2]
            loop: start=0, step=1, limit=1
            $region93: #{residual_block_forward.7} parent=91 // loop_pre_header
              _
            $region94: #{residual_block_forward.7} parent=91 // loop_header
              %s323 = sphi 0, %s327
              %p324 = scmp.ge.s32.totalorder %s323, 1
              %s328 = sphi %s287, %s287
              %s329 = sphi %s290, %s290
            $region95: #{residual_block_forward.7} parent=91 // loop_header_branch
              %326 = sbr.rel (%p324) target = $region99
            $region96: #{residual_block_forward.7} parent=91 // loop_body
              %v330 = vld [vmem:[%s328] sm:$0xff]
              %331 = vst [vmem:[%s329] sm:$0xff] %v330
              %v332 = vld [vmem:[%s328 + $0x8] sm:$0xff]
              %333 = vst [vmem:[%s329 + $0x8] sm:$0xff] %v332
              %v334 = vld [vmem:[%s328 + $0x10] sm:$0xff]
              %335 = vst [vmem:[%s329 + $0x10] sm:$0xff] %v334
              %v336 = vld [vmem:[%s328 + $0x18] sm:$0xff]
              %337 = vst [vmem:[%s329 + $0x18] sm:$0xff] %v336
              %v338 = vld [vmem:[%s328 + $0x20] sm:$0xff]
              %339 = vst [vmem:[%s329 + $0x20] sm:$0xff] %v338
              %v340 = vld [vmem:[%s328 + $0x28] sm:$0xff]
              %341 = vst [vmem:[%s329 + $0x28] sm:$0xff] %v340
              %v342 = vld [vmem:[%s328 + $0x30] sm:$0xff]
              %343 = vst [vmem:[%s329 + $0x30] sm:$0xff] %v342
              %v344 = vld [vmem:[%s328 + $0x38] sm:$0xff]
              %345 = vst [vmem:[%s329 + $0x38] sm:$0xff] %v344
            $region97: #{residual_block_forward.7} parent=91 // loop_footer
              %s327 = sadd.s32 1, %s323
            $region98: #{residual_block_forward.7} parent=91 // loop_footer_branch
              %322 = sbr.rel target = $region94
            $region99: #{residual_block_forward.7} parent=91 // loop_exit
              _
            %s346 = sshll.u32 1, %s317
            %s347 = ssub.s32 %s346, 1
            loop: start=0, step=1, limit=1
            $region100: #{residual_block_forward.7} parent=91 // loop_pre_header
              _
            $region101: #{residual_block_forward.7} parent=91 // loop_header
              %s349 = sphi 0, %s353
              %p350 = scmp.ge.s32.totalorder %s349, 1
              %s354 = sphi %s319, %s319
              %s355 = sphi %s321, %s321
            $region102: #{residual_block_forward.7} parent=91 // loop_header_branch
              %352 = sbr.rel (%p350) target = $region106
            $region103: #{residual_block_forward.7} parent=91 // loop_body
              %v356 = vld [vmem:[%s354] sm:%s347]
              %357 = vst [vmem:[%s355] sm:%s347] %v356
            $region104: #{residual_block_forward.7} parent=91 // loop_footer
              %s353 = sadd.s32 1, %s349
            $region105: #{residual_block_forward.7} parent=91 // loop_footer_branch
              %348 = sbr.rel target = $region101
            $region106: #{residual_block_forward.7} parent=91 // loop_exit
              _
          $region92: #{residual_block_forward.7} parent=76 // pred_fallthru
            _
        $region77: #{residual_block_forward.7} parent=72 // pred_fallthru
          _
        // Predicated region
        $region78: #{residual_block_forward.7} parent=72 // pred_check
          %p297 = pneg %p293
        $region79: #{residual_block_forward.7} parent=72 // pred_check_branch
          %299 = sbr.rel (%p297) target = $region81
        $region80: #{residual_block_forward.7} parent=72 // pred_region
          %s300 = sshll.u32 1, 68
          %s301 = ssub.s32 %s300, 1
          loop: start=0, step=1, limit=1
          $region82: #{residual_block_forward.7} parent=80 // loop_pre_header
            _
          $region83: #{residual_block_forward.7} parent=80 // loop_header
            %s303 = sphi 0, %s307
            %p304 = scmp.ge.s32.totalorder %s303, 1
            %s308 = sphi %s287, %s287
            %s309 = sphi %s290, %s290
          $region84: #{residual_block_forward.7} parent=80 // loop_header_branch
            %306 = sbr.rel (%p304) target = $region88
          $region85: #{residual_block_forward.7} parent=80 // loop_body
            %v310 = vld [vmem:[%s308] sm:%s301]
            %311 = vst [vmem:[%s309] sm:%s301] %v310
          $region86: #{residual_block_forward.7} parent=80 // loop_footer
            %s307 = sadd.s32 1, %s303
          $region87: #{residual_block_forward.7} parent=80 // loop_footer_branch
            %302 = sbr.rel target = $region83
          $region88: #{residual_block_forward.7} parent=80 // loop_exit
            _
        $region81: #{residual_block_forward.7} parent=72 // pred_fallthru
          _
        // Predicated region
        $region107: #{residual_block_forward.7} parent=72 // pred_check
          _
        $region108: #{residual_block_forward.7} parent=72 // pred_check_branch
          %360 = sbr.rel (0) target = $region110
        $region109: #{residual_block_forward.7} parent=72 // pred_region
          %361 = vsyncadd %s291, 1088
        $region110: #{residual_block_forward.7} parent=72 // pred_fallthru
          _
      $region73: #{residual_block_forward.7} parent=27 // pred_fallthru
        _
      %v362 = vld [vmem:[%s270] sm:$0xc]
      %v363 = vld [vmem:[%s270 + $0x4] sm:$0xf]
      %v364 = vld [vmem:[%s270 + $0x8] sm:$0xf]
      %v365 = vld [vmem:[%s270 + $0xc] sm:$0xf]
      %v366 = vld [vmem:[%s270 + $0x10] sm:$0xf]
      %v367 = vld [vmem:[%s270 + $0x14] sm:$0xf]
      %v368 = vld [vmem:[%s270 + $0x18] sm:$0xf]
      %v369 = vld [vmem:[%s270 + $0x1c] sm:$0xf]
      %v370 = vld [vmem:[%s270 + $0x20] sm:$0xf]
      %v371 = vld [vmem:[%s270 + $0x24] sm:$0xf]
      %v372 = vld [vmem:[%s270 + $0x28] sm:$0xf]
      %v373 = vld [vmem:[%s270 + $0x2c] sm:$0xf]
      %v374 = vld [vmem:[%s270 + $0x30] sm:$0xf]
      %v375 = vld [vmem:[%s270 + $0x34] sm:$0x7]
      %v376 = vld [vmem:[%s1] sm:$0xf]
      %v377 = vld [vmem:[%s1 + $0x4] sm:$0xf]
      %v378 = vld [vmem:[%s1 + $0x8] sm:$0xf]
      %v379 = vld [vmem:[%s1 + $0xc] sm:$0xf]
      %v380 = vld [vmem:[%s1 + $0x10] sm:$0xf]
      %v381 = vld [vmem:[%s1 + $0x14] sm:$0xf]
      %v382 = vld [vmem:[%s1 + $0x18] sm:$0xf]
      %v383 = vld [vmem:[%s1 + $0x1c] sm:$0xf]
      %v384 = vld [vmem:[%s1 + $0x20] sm:$0xf]
      %v385 = vld [vmem:[%s1 + $0x24] sm:$0xf]
      %v386 = vld [vmem:[%s1 + $0x28] sm:$0xf]
      %v387 = vld [vmem:[%s1 + $0x2c] sm:$0xf]
      %v388 = vld [vmem:[%s1 + $0x30] sm:$0xf]
      %v389 = vld [vmem:[%s1 + $0x34] sm:$0xf]
      %v390 = vld [vmem:[%s1 + $0x38] sm:$0xf]
      %v391 = vld [vmem:[%s1 + $0x3c] sm:$0xf]
      %v392 = vld [vmem:[%s270] sm:$0x8]
      %v393 = vld [vmem:[%s1 + $0x40] sm:$0xf]
      %v394 = vld [vmem:[%s1 + $0x44] sm:$0xf]
      %v395 = vld [vmem:[%s1 + $0x48] sm:$0xf]
      %v396 = vld [vmem:[%s1 + $0x4c] sm:$0xf]
      %v397 = vld [vmem:[%s1 + $0x50] sm:$0xf]
      %v398 = vld [vmem:[%s1 + $0x54] sm:$0xf]
      %v399 = vld [vmem:[%s1 + $0x58] sm:$0xf]
      %v400 = vld [vmem:[%s1 + $0x5c] sm:$0xf]
      %v401 = vld [vmem:[%s1 + $0x60] sm:$0xf]
      %v402 = vld [vmem:[%s1 + $0x64] sm:$0xf]
      %v403 = vld [vmem:[%s1 + $0x68] sm:$0xf]
      %v404 = vld [vmem:[%s1 + $0x6c] sm:$0xf]
      %v405 = vld [vmem:[%s1 + $0x70] sm:$0xf]
      %v406 = vld [vmem:[%s1 + $0x74] sm:$0xf]
      %v407 = vld [vmem:[%s1 + $0x78] sm:$0xf]
      %v408 = vld [vmem:[%s1 + $0x7c] sm:$0xf]
      %v423 = vunpack.c.l.b16 %v392
      %v424 = vunpack.c.l.b16 %v363
      %v425 = vunpack.c.l.b16 %v364
      %v426 = vunpack.c.l.b16 %v365
      %v427 = vunpack.c.l.b16 %v366
      %v428 = vunpack.c.l.b16 %v367
      %v429 = vunpack.c.l.b16 %v368
      %v430 = vunpack.c.l.b16 %v369
      %v431 = vunpack.c.l.b16 %v370
      %v432 = vunpack.c.l.b16 %v371
      %v433 = vunpack.c.l.b16 %v372
      %v434 = vunpack.c.l.b16 %v373
      %v435 = vunpack.c.l.b16 %v374
      %v436 = vunpack.c.l.b16 %v375
      %v437 = vpack.c.b16 %v424, %v423
      %v438 = vpack.c.b16 %v426, %v425
      %v439 = vpack.c.b16 %v428, %v427
      %v440 = vpack.c.b16 %v430, %v429
      %v441 = vpack.c.b16 %v432, %v431
      %v442 = vpack.c.b16 %v434, %v433
      %v443 = vpack.c.b16 %v436, %v435
      %vm444 = vcmask 1044480
      %v445 = vrot.slane %v437, 3
      %v446 = vrot.slane %v438, 3
      %v447 = vsel %vm444, %v445, %v446
      %v448 = vrot.slane %v439, 3
      %v449 = vsel %vm444, %v446, %v448
      %v450 = vrot.slane %v440, 3
      %v451 = vsel %vm444, %v448, %v450
      %v452 = vrot.slane %v441, 3
      %v453 = vsel %vm444, %v450, %v452
      %v454 = vrot.slane %v442, 3
      %v455 = vsel %vm444, %v452, %v454
      %v456 = vrot.slane %v443, 3
      %v457 = vsel %vm444, %v454, %v456
      %v481 = vunpack.c.l.b16 %v393
      %v482 = vunpack.c.l.b16 %v394
      %v483 = vunpack.c.l.b16 %v395
      %v484 = vunpack.c.l.b16 %v396
      %v485 = vunpack.c.l.b16 %v397
      %v486 = vunpack.c.l.b16 %v398
      %v487 = vunpack.c.l.b16 %v399
      %v488 = vunpack.c.l.b16 %v400
      %v489 = vunpack.c.l.b16 %v401
      %v490 = vunpack.c.l.b16 %v402
      %v491 = vunpack.c.l.b16 %v403
      %v492 = vunpack.c.l.b16 %v404
      %v493 = vunpack.c.l.b16 %v405
      %v494 = vunpack.c.l.b16 %v406
      %v495 = vunpack.c.l.b16 %v407
      %v496 = vunpack.c.l.b16 %v408
      %v497 = vpack.c.b16 %v482, %v481
      %v498 = vpack.c.b16 %v484, %v483
      %v499 = vpack.c.b16 %v486, %v485
      %v500 = vpack.c.b16 %v488, %v487
      %v501 = vpack.c.b16 %v490, %v489
      %v502 = vpack.c.b16 %v492, %v491
      %v503 = vpack.c.b16 %v494, %v493
      %v504 = vpack.c.b16 %v496, %v495
      %513 = vmatprep.subr.bf16.mxu0 0
      %514 = vmatpush1.bf16.msra.mxu0 %v504
      %515 = vmatprep.subr.bf16.mxu0 0
      %516 = vmatpush1.bf16.msra.mxu0 %v503
      %517 = vmatprep.subr.bf16.mxu0 0
      %518 = vmatpush1.bf16.msra.mxu0 %v502
      %519 = vmatprep.subr.bf16.mxu0 0
      %520 = vmatpush1.bf16.msra.mxu0 %v501
      %521 = vmatprep.subr.bf16.mxu0 0
      %522 = vmatpush1.bf16.msra.mxu0 %v500
      %523 = vmatprep.subr.bf16.mxu0 0
      %524 = vmatpush1.bf16.msra.mxu0 %v499
      %525 = vmatprep.subr.bf16.mxu0 0
      %526 = vmatpush1.bf16.msra.mxu0 %v498
      %527 = vmatprep.subr.bf16.mxu0 0
      %528 = vmatpush1.bf16.msra.mxu0 %v497
      %529 = vmatprep.subr.bf16.mxu0 0
      %530 = vmatpush2.bf16.msra.mxu0 0
      %531 = vmatprep.subr.bf16.mxu0 0
      %532 = vmatpush2.bf16.msra.mxu0 0
      %533 = vmatprep.subr.bf16.mxu0 0
      %534 = vmatpush2.bf16.msra.mxu0 0
      %535 = vmatprep.subr.bf16.mxu0 0
      %536 = vmatpush2.bf16.msra.mxu0 0
      %537 = vmatprep.subr.bf16.mxu0 0
      %538 = vmatpush2.bf16.msra.mxu0 0
      %539 = vmatprep.subr.bf16.mxu0 0
      %540 = vmatpush2.bf16.msra.mxu0 0
      %541 = vmatprep.subr.bf16.mxu0 0
      %542 = vmatpush2.bf16.msra.mxu0 0
      %543 = vmatprep.subr.bf16.mxu0 0
      %544 = vmatpush2.bf16.msra.mxu0 0
      %545 = vmatprep.mubr.bf16.mxu0 0
      %546 = vmatmul.mubr.bf16.gmra.mxu0 %v447
      %v547 = vpop.f32.mrf.mxu0
      %v548 = vadd.f32 0.0, %v547
      %v549 = vpop.f32.mrf.mxu0
      %v550 = vpop.f32.mrf.mxu0
      %v551 = vadd.f32 0.0, %v550
      %v552 = vpop.f32.mrf.mxu0
      %553 = vmatprep.mubr.bf16.mxu0 0
      %554 = vmatmul.mubr.bf16.gmra.mxu0 %v449
      %v555 = vpop.f32.mrf.mxu0
      %v556 = vadd.f32 0.0, %v555
      %v557 = vpop.f32.mrf.mxu0
      %v558 = vpop.f32.mrf.mxu0
      %v559 = vadd.f32 0.0, %v558
      %v560 = vpop.f32.mrf.mxu0
      %561 = vmatprep.mubr.bf16.mxu0 0
      %562 = vmatmul.mubr.bf16.gmra.mxu0 %v451
      %v563 = vpop.f32.mrf.mxu0
      %v564 = vadd.f32 0.0, %v563
      %v565 = vpop.f32.mrf.mxu0
      %v566 = vpop.f32.mrf.mxu0
      %v567 = vadd.f32 0.0, %v566
      %v568 = vpop.f32.mrf.mxu0
      %569 = vmatprep.mubr.bf16.mxu0 0
      %570 = vmatmul.mubr.bf16.gmra.mxu0 %v453
      %v571 = vpop.f32.mrf.mxu0
      %v572 = vadd.f32 0.0, %v571
      %v573 = vpop.f32.mrf.mxu0
      %v574 = vpop.f32.mrf.mxu0
      %v575 = vadd.f32 0.0, %v574
      %v576 = vpop.f32.mrf.mxu0
      %577 = vmatprep.mubr.bf16.mxu0 0
      %578 = vmatmul.mubr.bf16.gmra.mxu0 %v455
      %v579 = vpop.f32.mrf.mxu0
      %v580 = vadd.f32 0.0, %v579
      %v581 = vpop.f32.mrf.mxu0
      %v582 = vpop.f32.mrf.mxu0
      %v583 = vadd.f32 0.0, %v582
      %v584 = vpop.f32.mrf.mxu0
      %585 = vmatprep.mubr.bf16.mxu0 0
      %586 = vmatmul.mubr.bf16.gmra.mxu0 %v457
      %v587 = vpop.f32.mrf.mxu0
      %v588 = vadd.f32 0.0, %v587
      %v589 = vpop.f32.mrf.mxu0
      %v590 = vpop.f32.mrf.mxu0
      %v591 = vadd.f32 0.0, %v590
      %v592 = vpop.f32.mrf.mxu0
      %593 = vmatprep.mubr.bf16.mxu0 0
      %594 = vmatmul.mubr.bf16.gmra.mxu0 %v456
      %v595 = vpop.f32.mrf.mxu0
      %v596 = vadd.f32 0.0, %v595
      %v597 = vpop.f32.mrf.mxu0
      %v598 = vpop.f32.mrf.mxu0
      %v599 = vpop.f32.mrf.mxu0
      %600 = vdwg.mxu0
      %v602 = vunpack.c.l.b16 %v362
      %v603 = vpack.c.b16 %v424, %v602
      %vm604 = vsmask.f32 5376
      %v606 = vshrl.u32 %v603, 16
      %v608 = vrot.slane %v606, 2
      %v609 = vshll.u32 %v603, 16
      %v611 = vrot.slane %v609, 3
      %v612 = vor.u32 %v608, %v611
      %v614 = vshrl.u32 %v438, 16
      %v616 = vrot.slane %v614, 2
      %v617 = vshll.u32 %v438, 16
      %v619 = vrot.slane %v617, 3
      %v620 = vor.u32 %v616, %v619
      %v621 = vsel %vm604, %v612, %v620
      %v623 = vshrl.u32 %v439, 16
      %v625 = vrot.slane %v623, 2
      %v626 = vshll.u32 %v439, 16
      %v628 = vrot.slane %v626, 3
      %v629 = vor.u32 %v625, %v628
      %v630 = vsel %vm604, %v620, %v629
      %v632 = vshrl.u32 %v440, 16
      %v634 = vrot.slane %v632, 2
      %v635 = vshll.u32 %v440, 16
      %v637 = vrot.slane %v635, 3
      %v638 = vor.u32 %v634, %v637
      %v639 = vsel %vm604, %v629, %v638
      %v641 = vshrl.u32 %v441, 16
      %v643 = vrot.slane %v641, 2
      %v644 = vshll.u32 %v441, 16
      %v646 = vrot.slane %v644, 3
      %v647 = vor.u32 %v643, %v646
      %v648 = vsel %vm604, %v638, %v647
      %v650 = vshrl.u32 %v442, 16
      %v652 = vrot.slane %v650, 2
      %v653 = vshll.u32 %v442, 16
      %v655 = vrot.slane %v653, 3
      %v656 = vor.u32 %v652, %v655
      %v657 = vsel %vm604, %v647, %v656
      %v659 = vshrl.u32 %v443, 16
      %v661 = vrot.slane %v659, 2
      %v662 = vshll.u32 %v443, 16
      %v664 = vrot.slane %v662, 3
      %v665 = vor.u32 %v661, %v664
      %v666 = vsel %vm604, %v656, %v665
      %v690 = vunpack.c.l.b16 %v376
      %v691 = vunpack.c.l.b16 %v377
      %v692 = vunpack.c.l.b16 %v378
      %v693 = vunpack.c.l.b16 %v379
      %v694 = vunpack.c.l.b16 %v380
      %v695 = vunpack.c.l.b16 %v381
      %v696 = vunpack.c.l.b16 %v382
      %v697 = vunpack.c.l.b16 %v383
      %v698 = vunpack.c.l.b16 %v384
      %v699 = vunpack.c.l.b16 %v385
      %v700 = vunpack.c.l.b16 %v386
      %v701 = vunpack.c.l.b16 %v387
      %v702 = vunpack.c.l.b16 %v388
      %v703 = vunpack.c.l.b16 %v389
      %v704 = vunpack.c.l.b16 %v390
      %v705 = vunpack.c.l.b16 %v391
      %v706 = vpack.c.b16 %v691, %v690
      %v707 = vpack.c.b16 %v693, %v692
      %v708 = vpack.c.b16 %v695, %v694
      %v709 = vpack.c.b16 %v697, %v696
      %v710 = vpack.c.b16 %v699, %v698
      %v711 = vpack.c.b16 %v701, %v700
      %v712 = vpack.c.b16 %v703, %v702
      %v713 = vpack.c.b16 %v705, %v704
      %722 = vmatprep.subr.bf16.mxu0 0
      %723 = vmatpush1.bf16.msra.mxu0 %v713
      %724 = vmatprep.subr.bf16.mxu0 0
      %725 = vmatpush1.bf16.msra.mxu0 %v712
      %726 = vmatprep.subr.bf16.mxu0 0
      %727 = vmatpush1.bf16.msra.mxu0 %v711
      %728 = vmatprep.subr.bf16.mxu0 0
      %729 = vmatpush1.bf16.msra.mxu0 %v710
      %730 = vmatprep.subr.bf16.mxu0 0
      %731 = vmatpush1.bf16.msra.mxu0 %v709
      %732 = vmatprep.subr.bf16.mxu0 0
      %733 = vmatpush1.bf16.msra.mxu0 %v708
      %734 = vmatprep.subr.bf16.mxu0 0
      %735 = vmatpush1.bf16.msra.mxu0 %v707
      %736 = vmatprep.subr.bf16.mxu0 0
      %737 = vmatpush1.bf16.msra.mxu0 %v706
      %738 = vmatprep.subr.bf16.mxu0 0
      %739 = vmatpush2.bf16.msra.mxu0 0
      %740 = vmatprep.subr.bf16.mxu0 0
      %741 = vmatpush2.bf16.msra.mxu0 0
      %742 = vmatprep.subr.bf16.mxu0 0
      %743 = vmatpush2.bf16.msra.mxu0 0
      %744 = vmatprep.subr.bf16.mxu0 0
      %745 = vmatpush2.bf16.msra.mxu0 0
      %746 = vmatprep.subr.bf16.mxu0 0
      %747 = vmatpush2.bf16.msra.mxu0 0
      %748 = vmatprep.subr.bf16.mxu0 0
      %749 = vmatpush2.bf16.msra.mxu0 0
      %750 = vmatprep.subr.bf16.mxu0 0
      %751 = vmatpush2.bf16.msra.mxu0 0
      %752 = vmatprep.subr.bf16.mxu0 0
      %753 = vmatpush2.bf16.msra.mxu0 0
      %754 = vmatprep.mubr.bf16.mxu0 0
      %755 = vmatmul.mubr.bf16.gmra.mxu0 %v621
      %v756 = vpop.f32.mrf.mxu0
      %v757 = vadd.f32 %v548, %v756
      %v758 = vpop.f32.mrf.mxu0
      %v759 = vpop.f32.mrf.mxu0
      %v760 = vadd.f32 %v551, %v759
      %v761 = vpop.f32.mrf.mxu0
      %762 = vmatprep.mubr.bf16.mxu0 0
      %763 = vmatmul.mubr.bf16.gmra.mxu0 %v630
      %v764 = vpop.f32.mrf.mxu0
      %v765 = vadd.f32 %v556, %v764
      %v766 = vpop.f32.mrf.mxu0
      %v767 = vpop.f32.mrf.mxu0
      %v768 = vadd.f32 %v559, %v767
      %v769 = vpop.f32.mrf.mxu0
      %770 = vmatprep.mubr.bf16.mxu0 0
      %771 = vmatmul.mubr.bf16.gmra.mxu0 %v639
      %v772 = vpop.f32.mrf.mxu0
      %v773 = vadd.f32 %v564, %v772
      %v774 = vpop.f32.mrf.mxu0
      %v775 = vpop.f32.mrf.mxu0
      %v776 = vadd.f32 %v567, %v775
      %v777 = vpop.f32.mrf.mxu0
      %778 = vmatprep.mubr.bf16.mxu0 0
      %779 = vmatmul.mubr.bf16.gmra.mxu0 %v648
      %v780 = vpop.f32.mrf.mxu0
      %v781 = vadd.f32 %v572, %v780
      %v782 = vpop.f32.mrf.mxu0
      %v783 = vpop.f32.mrf.mxu0
      %v784 = vadd.f32 %v575, %v783
      %v785 = vpop.f32.mrf.mxu0
      %786 = vmatprep.mubr.bf16.mxu0 0
      %787 = vmatmul.mubr.bf16.gmra.mxu0 %v657
      %v788 = vpop.f32.mrf.mxu0
      %v789 = vadd.f32 %v580, %v788
      %v790 = vpop.f32.mrf.mxu0
      %v791 = vpop.f32.mrf.mxu0
      %v792 = vadd.f32 %v583, %v791
      %v793 = vpop.f32.mrf.mxu0
      %794 = vmatprep.mubr.bf16.mxu0 0
      %795 = vmatmul.mubr.bf16.gmra.mxu0 %v666
      %v796 = vpop.f32.mrf.mxu0
      %v797 = vadd.f32 %v588, %v796
      %v798 = vpop.f32.mrf.mxu0
      %v799 = vpop.f32.mrf.mxu0
      %v800 = vadd.f32 %v591, %v799
      %v801 = vpop.f32.mrf.mxu0
      %802 = vmatprep.mubr.bf16.mxu0 0
      %803 = vmatmul.mubr.bf16.gmra.mxu0 %v665
      %v804 = vpop.f32.mrf.mxu0
      %v805 = vadd.f32 %v596, %v804
      %v806 = vpop.f32.mrf.mxu0
      %v807 = vpop.f32.mrf.mxu0
      %v808 = vpop.f32.mrf.mxu0
      %809 = vdwg.mxu0
      %v810 = vld [vmem:[%s270 + $0x34] sm:$0xf]
      %v811 = vld [vmem:[%s1 + $0x80] sm:$0xf]
      %v812 = vld [vmem:[%s1 + $0x84] sm:$0xf]
      %v813 = vld [vmem:[%s1 + $0x88] sm:$0xf]
      %v814 = vld [vmem:[%s1 + $0x8c] sm:$0xf]
      %v815 = vld [vmem:[%s1 + $0x90] sm:$0xf]
      %v816 = vld [vmem:[%s1 + $0x94] sm:$0xf]
      %v817 = vld [vmem:[%s1 + $0x98] sm:$0xf]
      %v818 = vld [vmem:[%s1 + $0x9c] sm:$0xf]
      %v819 = vld [vmem:[%s1 + $0xa0] sm:$0xf]
      %v820 = vld [vmem:[%s1 + $0xa4] sm:$0xf]
      %v821 = vld [vmem:[%s1 + $0xa8] sm:$0xf]
      %v822 = vld [vmem:[%s1 + $0xac] sm:$0xf]
      %v823 = vld [vmem:[%s1 + $0xb0] sm:$0xf]
      %v824 = vld [vmem:[%s1 + $0xb4] sm:$0xf]
      %v825 = vld [vmem:[%s1 + $0xb8] sm:$0xf]
      %v826 = vld [vmem:[%s1 + $0xbc] sm:$0xf]
      %v828 = vunpack.c.l.b16 %v810
      %v829 = vpack.c.b16 %v828, %v435
      %vm830 = vsmask.f32 4352
      %v832 = vshrl.u32 %v437, 16
      %v834 = vrot.slane %v832, 3
      %v835 = vshll.u32 %v437, 16
      %v837 = vrot.slane %v835, 4
      %v838 = vor.u32 %v834, %v837
      %v839 = vrot.slane %v614, 3
      %v840 = vrot.slane %v617, 4
      %v841 = vor.u32 %v839, %v840
      %v842 = vsel %vm830, %v838, %v841
      %v843 = vrot.slane %v623, 3
      %v844 = vrot.slane %v626, 4
      %v845 = vor.u32 %v843, %v844
      %v846 = vsel %vm830, %v841, %v845
      %v847 = vrot.slane %v632, 3
      %v848 = vrot.slane %v635, 4
      %v849 = vor.u32 %v847, %v848
      %v850 = vsel %vm830, %v845, %v849
      %v851 = vrot.slane %v641, 3
      %v852 = vrot.slane %v644, 4
      %v853 = vor.u32 %v851, %v852
      %v854 = vsel %vm830, %v849, %v853
      %v855 = vrot.slane %v650, 3
      %v856 = vrot.slane %v653, 4
      %v857 = vor.u32 %v855, %v856
      %v858 = vsel %vm830, %v853, %v857
      %v860 = vshrl.u32 %v829, 16
      %v862 = vrot.slane %v860, 3
      %v863 = vshll.u32 %v829, 16
      %v865 = vrot.slane %v863, 4
      %v866 = vor.u32 %v862, %v865
      %v867 = vsel %vm830, %v857, %v866
      %v891 = vunpack.c.l.b16 %v811
      %v892 = vunpack.c.l.b16 %v812
      %v893 = vunpack.c.l.b16 %v813
      %v894 = vunpack.c.l.b16 %v814
      %v895 = vunpack.c.l.b16 %v815
      %v896 = vunpack.c.l.b16 %v816
      %v897 = vunpack.c.l.b16 %v817
      %v898 = vunpack.c.l.b16 %v818
      %v899 = vunpack.c.l.b16 %v819
      %v900 = vunpack.c.l.b16 %v820
      %v901 = vunpack.c.l.b16 %v821
      %v902 = vunpack.c.l.b16 %v822
      %v903 = vunpack.c.l.b16 %v823
      %v904 = vunpack.c.l.b16 %v824
      %v905 = vunpack.c.l.b16 %v825
      %v906 = vunpack.c.l.b16 %v826
      %v907 = vpack.c.b16 %v892, %v891
      %v908 = vpack.c.b16 %v894, %v893
      %v909 = vpack.c.b16 %v896, %v895
      %v910 = vpack.c.b16 %v898, %v897
      %v911 = vpack.c.b16 %v900, %v899
      %v912 = vpack.c.b16 %v902, %v901
      %v913 = vpack.c.b16 %v904, %v903
      %v914 = vpack.c.b16 %v906, %v905
      %923 = vmatprep.subr.bf16.mxu0 0
      %924 = vmatpush1.bf16.msra.mxu0 %v914
      %925 = vmatprep.subr.bf16.mxu0 0
      %926 = vmatpush1.bf16.msra.mxu0 %v913
      %927 = vmatprep.subr.bf16.mxu0 0
      %928 = vmatpush1.bf16.msra.mxu0 %v912
      %929 = vmatprep.subr.bf16.mxu0 0
      %930 = vmatpush1.bf16.msra.mxu0 %v911
      %931 = vmatprep.subr.bf16.mxu0 0
      %932 = vmatpush1.bf16.msra.mxu0 %v910
      %933 = vmatprep.subr.bf16.mxu0 0
      %934 = vmatpush1.bf16.msra.mxu0 %v909
      %935 = vmatprep.subr.bf16.mxu0 0
      %936 = vmatpush1.bf16.msra.mxu0 %v908
      %937 = vmatprep.subr.bf16.mxu0 0
      %938 = vmatpush1.bf16.msra.mxu0 %v907
      %939 = vmatprep.subr.bf16.mxu0 0
      %940 = vmatpush2.bf16.msra.mxu0 0
      %941 = vmatprep.subr.bf16.mxu0 0
      %942 = vmatpush2.bf16.msra.mxu0 0
      %943 = vmatprep.subr.bf16.mxu0 0
      %944 = vmatpush2.bf16.msra.mxu0 0
      %945 = vmatprep.subr.bf16.mxu0 0
      %946 = vmatpush2.bf16.msra.mxu0 0
      %947 = vmatprep.subr.bf16.mxu0 0
      %948 = vmatpush2.bf16.msra.mxu0 0
      %949 = vmatprep.subr.bf16.mxu0 0
      %950 = vmatpush2.bf16.msra.mxu0 0
      %951 = vmatprep.subr.bf16.mxu0 0
      %952 = vmatpush2.bf16.msra.mxu0 0
      %953 = vmatprep.subr.bf16.mxu0 0
      %954 = vmatpush2.bf16.msra.mxu0 0
      %955 = vmatprep.mubr.bf16.mxu0 0
      %956 = vmatmul.mubr.bf16.gmra.mxu0 %v842
      %v957 = vpop.f32.mrf.mxu0
      %v958 = vadd.f32 0.0, %v957
      %v959 = vpop.f32.mrf.mxu0
      %v960 = vpop.f32.mrf.mxu0
      %v961 = vadd.f32 0.0, %v960
      %v962 = vpop.f32.mrf.mxu0
      %963 = vmatprep.mubr.bf16.mxu0 0
      %964 = vmatmul.mubr.bf16.gmra.mxu0 %v846
      %v965 = vpop.f32.mrf.mxu0
      %v966 = vadd.f32 0.0, %v965
      %v967 = vpop.f32.mrf.mxu0
      %v968 = vpop.f32.mrf.mxu0
      %v969 = vadd.f32 0.0, %v968
      %v970 = vpop.f32.mrf.mxu0
      %971 = vmatprep.mubr.bf16.mxu0 0
      %972 = vmatmul.mubr.bf16.gmra.mxu0 %v850
      %v973 = vpop.f32.mrf.mxu0
      %v974 = vadd.f32 0.0, %v973
      %v975 = vpop.f32.mrf.mxu0
      %v976 = vpop.f32.mrf.mxu0
      %v977 = vadd.f32 0.0, %v976
      %v978 = vpop.f32.mrf.mxu0
      %979 = vmatprep.mubr.bf16.mxu0 0
      %980 = vmatmul.mubr.bf16.gmra.mxu0 %v854
      %v981 = vpop.f32.mrf.mxu0
      %v982 = vadd.f32 0.0, %v981
      %v983 = vpop.f32.mrf.mxu0
      %v984 = vpop.f32.mrf.mxu0
      %v985 = vadd.f32 0.0, %v984
      %v986 = vpop.f32.mrf.mxu0
      %987 = vmatprep.mubr.bf16.mxu0 0
      %988 = vmatmul.mubr.bf16.gmra.mxu0 %v858
      %v989 = vpop.f32.mrf.mxu0
      %v990 = vadd.f32 0.0, %v989
      %v991 = vpop.f32.mrf.mxu0
      %v992 = vpop.f32.mrf.mxu0
      %v993 = vadd.f32 0.0, %v992
      %v994 = vpop.f32.mrf.mxu0
      %995 = vmatprep.mubr.bf16.mxu0 0
      %996 = vmatmul.mubr.bf16.gmra.mxu0 %v867
      %v997 = vpop.f32.mrf.mxu0
      %v998 = vadd.f32 0.0, %v997
      %v999 = vpop.f32.mrf.mxu0
      %v1000 = vpop.f32.mrf.mxu0
      %v1001 = vadd.f32 0.0, %v1000
      %v1002 = vpop.f32.mrf.mxu0
      %1003 = vmatprep.mubr.bf16.mxu0 0
      %1004 = vmatmul.mubr.bf16.gmra.mxu0 %v866
      %v1005 = vpop.f32.mrf.mxu0
      %v1006 = vadd.f32 0.0, %v1005
      %v1007 = vpop.f32.mrf.mxu0
      %v1008 = vpop.f32.mrf.mxu0
      %v1009 = vpop.f32.mrf.mxu0
      %1010 = vdwg.mxu0
      %v1011 = vadd.f32 %v757, %v958
      %v1012 = vadd.f32 %v760, %v961
      %v1013 = vadd.f32 %v765, %v966
      %v1014 = vadd.f32 %v768, %v969
      %v1015 = vadd.f32 %v773, %v974
      %v1016 = vadd.f32 %v776, %v977
      %v1017 = vadd.f32 %v781, %v982
      %v1018 = vadd.f32 %v784, %v985
      %v1019 = vadd.f32 %v789, %v990
      %v1020 = vadd.f32 %v792, %v993
      %v1021 = vadd.f32 %v797, %v998
      %v1022 = vadd.f32 %v800, %v1001
      %v1023 = vadd.f32 %v805, %v1006
      %v1024 = vld [vmem:[%s270 + $0x4] sm:$0x8]
      %v1025 = vld [vmem:[%s270 + $0x8] sm:$0xf]
      %v1026 = vld [vmem:[%s270 + $0xc] sm:$0xf]
      %v1027 = vld [vmem:[%s270 + $0x10] sm:$0xf]
      %v1028 = vld [vmem:[%s270 + $0x14] sm:$0xf]
      %v1029 = vld [vmem:[%s270 + $0x18] sm:$0xf]
      %v1030 = vld [vmem:[%s270 + $0x1c] sm:$0xf]
      %v1031 = vld [vmem:[%s270 + $0x20] sm:$0xf]
      %v1032 = vld [vmem:[%s270 + $0x24] sm:$0xf]
      %v1033 = vld [vmem:[%s270 + $0x28] sm:$0xf]
      %v1034 = vld [vmem:[%s270 + $0x2c] sm:$0xf]
      %v1035 = vld [vmem:[%s270 + $0x30] sm:$0xf]
      %v1036 = vld [vmem:[%s270 + $0x34] sm:$0xf]
      %v1037 = vld [vmem:[%s270 + $0x38] sm:$0xf]
      %v1038 = vld [vmem:[%s1 + $0xc0] sm:$0xf]
      %v1039 = vld [vmem:[%s1 + $0xc4] sm:$0xf]
      %v1040 = vld [vmem:[%s1 + $0xc8] sm:$0xf]
      %v1041 = vld [vmem:[%s1 + $0xcc] sm:$0xf]
      %v1042 = vld [vmem:[%s1 + $0xd0] sm:$0xf]
      %v1043 = vld [vmem:[%s1 + $0xd4] sm:$0xf]
      %v1044 = vld [vmem:[%s1 + $0xd8] sm:$0xf]
      %v1045 = vld [vmem:[%s1 + $0xdc] sm:$0xf]
      %v1046 = vld [vmem:[%s1 + $0xe0] sm:$0xf]
      %v1047 = vld [vmem:[%s1 + $0xe4] sm:$0xf]
      %v1048 = vld [vmem:[%s1 + $0xe8] sm:$0xf]
      %v1049 = vld [vmem:[%s1 + $0xec] sm:$0xf]
      %v1050 = vld [vmem:[%s1 + $0xf0] sm:$0xf]
      %v1051 = vld [vmem:[%s1 + $0xf4] sm:$0xf]
      %v1052 = vld [vmem:[%s1 + $0xf8] sm:$0xf]
      %v1053 = vld [vmem:[%s1 + $0xfc] sm:$0xf]
      %v1068 = vunpack.c.l.b16 %v1024
      %v1069 = vunpack.c.l.b16 %v1025
      %v1070 = vunpack.c.l.b16 %v1026
      %v1071 = vunpack.c.l.b16 %v1027
      %v1072 = vunpack.c.l.b16 %v1028
      %v1073 = vunpack.c.l.b16 %v1029
      %v1074 = vunpack.c.l.b16 %v1030
      %v1075 = vunpack.c.l.b16 %v1031
      %v1076 = vunpack.c.l.b16 %v1032
      %v1077 = vunpack.c.l.b16 %v1033
      %v1078 = vunpack.c.l.b16 %v1034
      %v1079 = vunpack.c.l.b16 %v1035
      %v1080 = vunpack.c.l.b16 %v1036
      %v1081 = vunpack.c.l.b16 %v1037
      %v1082 = vpack.c.b16 %v1069, %v1068
      %v1083 = vpack.c.b16 %v1071, %v1070
      %v1084 = vpack.c.b16 %v1073, %v1072
      %v1085 = vpack.c.b16 %v1075, %v1074
      %v1086 = vpack.c.b16 %v1077, %v1076
      %v1087 = vpack.c.b16 %v1079, %v1078
      %v1088 = vpack.c.b16 %v1081, %v1080
      %v1090 = vshrl.u32 %v1082, 16
      %v1092 = vrot.slane %v1090, 3
      %v1093 = vshll.u32 %v1082, 16
      %v1095 = vrot.slane %v1093, 4
      %v1096 = vor.u32 %v1092, %v1095
      %v1098 = vshrl.u32 %v1083, 16
      %v1100 = vrot.slane %v1098, 3
      %v1101 = vshll.u32 %v1083, 16
      %v1103 = vrot.slane %v1101, 4
      %v1104 = vor.u32 %v1100, %v1103
      %v1105 = vsel %vm830, %v1096, %v1104
      %v1107 = vshrl.u32 %v1084, 16
      %v1109 = vrot.slane %v1107, 3
      %v1110 = vshll.u32 %v1084, 16
      %v1112 = vrot.slane %v1110, 4
      %v1113 = vor.u32 %v1109, %v1112
      %v1114 = vsel %vm830, %v1104, %v1113
      %v1116 = vshrl.u32 %v1085, 16
      %v1118 = vrot.slane %v1116, 3
      %v1119 = vshll.u32 %v1085, 16
      %v1121 = vrot.slane %v1119, 4
      %v1122 = vor.u32 %v1118, %v1121
      %v1123 = vsel %vm830, %v1113, %v1122
      %v1125 = vshrl.u32 %v1086, 16
      %v1127 = vrot.slane %v1125, 3
      %v1128 = vshll.u32 %v1086, 16
      %v1130 = vrot.slane %v1128, 4
      %v1131 = vor.u32 %v1127, %v1130
      %v1132 = vsel %vm830, %v1122, %v1131
      %v1134 = vshrl.u32 %v1087, 16
      %v1136 = vrot.slane %v1134, 3
      %v1137 = vshll.u32 %v1087, 16
      %v1139 = vrot.slane %v1137, 4
      %v1140 = vor.u32 %v1136, %v1139
      %v1141 = vsel %vm830, %v1131, %v1140
      %v1143 = vshrl.u32 %v1088, 16
      %v1145 = vrot.slane %v1143, 3
      %v1146 = vshll.u32 %v1088, 16
      %v1148 = vrot.slane %v1146, 4
      %v1149 = vor.u32 %v1145, %v1148
      %v1150 = vsel %vm830, %v1140, %v1149
      %v1174 = vunpack.c.l.b16 %v1038
      %v1175 = vunpack.c.l.b16 %v1039
      %v1176 = vunpack.c.l.b16 %v1040
      %v1177 = vunpack.c.l.b16 %v1041
      %v1178 = vunpack.c.l.b16 %v1042
      %v1179 = vunpack.c.l.b16 %v1043
      %v1180 = vunpack.c.l.b16 %v1044
      %v1181 = vunpack.c.l.b16 %v1045
      %v1182 = vunpack.c.l.b16 %v1046
      %v1183 = vunpack.c.l.b16 %v1047
      %v1184 = vunpack.c.l.b16 %v1048
      %v1185 = vunpack.c.l.b16 %v1049
      %v1186 = vunpack.c.l.b16 %v1050
      %v1187 = vunpack.c.l.b16 %v1051
      %v1188 = vunpack.c.l.b16 %v1052
      %v1189 = vunpack.c.l.b16 %v1053
      %v1190 = vpack.c.b16 %v1175, %v1174
      %v1191 = vpack.c.b16 %v1177, %v1176
      %v1192 = vpack.c.b16 %v1179, %v1178
      %v1193 = vpack.c.b16 %v1181, %v1180
      %v1194 = vpack.c.b16 %v1183, %v1182
      %v1195 = vpack.c.b16 %v1185, %v1184
      %v1196 = vpack.c.b16 %v1187, %v1186
      %v1197 = vpack.c.b16 %v1189, %v1188
      %1206 = vmatprep.subr.bf16.mxu0 0
      %1207 = vmatpush1.bf16.msra.mxu0 %v1197
      %1208 = vmatprep.subr.bf16.mxu0 0
      %1209 = vmatpush1.bf16.msra.mxu0 %v1196
      %1210 = vmatprep.subr.bf16.mxu0 0
      %1211 = vmatpush1.bf16.msra.mxu0 %v1195
      %1212 = vmatprep.subr.bf16.mxu0 0
      %1213 = vmatpush1.bf16.msra.mxu0 %v1194
      %1214 = vmatprep.subr.bf16.mxu0 0
      %1215 = vmatpush1.bf16.msra.mxu0 %v1193
      %1216 = vmatprep.subr.bf16.mxu0 0
      %1217 = vmatpush1.bf16.msra.mxu0 %v1192
      %1218 = vmatprep.subr.bf16.mxu0 0
      %1219 = vmatpush1.bf16.msra.mxu0 %v1191
      %1220 = vmatprep.subr.bf16.mxu0 0
      %1221 = vmatpush1.bf16.msra.mxu0 %v1190
      %1222 = vmatprep.subr.bf16.mxu0 0
      %1223 = vmatpush2.bf16.msra.mxu0 0
      %1224 = vmatprep.subr.bf16.mxu0 0
      %1225 = vmatpush2.bf16.msra.mxu0 0
      %1226 = vmatprep.subr.bf16.mxu0 0
      %1227 = vmatpush2.bf16.msra.mxu0 0
      %1228 = vmatprep.subr.bf16.mxu0 0
      %1229 = vmatpush2.bf16.msra.mxu0 0
      %1230 = vmatprep.subr.bf16.mxu0 0
      %1231 = vmatpush2.bf16.msra.mxu0 0
      %1232 = vmatprep.subr.bf16.mxu0 0
      %1233 = vmatpush2.bf16.msra.mxu0 0
      %1234 = vmatprep.subr.bf16.mxu0 0
      %1235 = vmatpush2.bf16.msra.mxu0 0
      %1236 = vmatprep.subr.bf16.mxu0 0
      %1237 = vmatpush2.bf16.msra.mxu0 0
      %1238 = vmatprep.mubr.bf16.mxu0 0
      %1239 = vmatmul.mubr.bf16.gmra.mxu0 %v1105
      %v1240 = vpop.f32.mrf.mxu0
      %v1241 = vadd.f32 0.0, %v1240
      %v1242 = vpop.f32.mrf.mxu0
      %v1243 = vpop.f32.mrf.mxu0
      %v1244 = vadd.f32 0.0, %v1243
      %v1245 = vpop.f32.mrf.mxu0
      %1246 = vmatprep.mubr.bf16.mxu0 0
      %1247 = vmatmul.mubr.bf16.gmra.mxu0 %v1114
      %v1248 = vpop.f32.mrf.mxu0
      %v1249 = vadd.f32 0.0, %v1248
      %v1250 = vpop.f32.mrf.mxu0
      %v1251 = vpop.f32.mrf.mxu0
      %v1252 = vadd.f32 0.0, %v1251
      %v1253 = vpop.f32.mrf.mxu0
      %1254 = vmatprep.mubr.bf16.mxu0 0
      %1255 = vmatmul.mubr.bf16.gmra.mxu0 %v1123
      %v1256 = vpop.f32.mrf.mxu0
      %v1257 = vadd.f32 0.0, %v1256
      %v1258 = vpop.f32.mrf.mxu0
      %v1259 = vpop.f32.mrf.mxu0
      %v1260 = vadd.f32 0.0, %v1259
      %v1261 = vpop.f32.mrf.mxu0
      %1262 = vmatprep.mubr.bf16.mxu0 0
      %1263 = vmatmul.mubr.bf16.gmra.mxu0 %v1132
      %v1264 = vpop.f32.mrf.mxu0
      %v1265 = vadd.f32 0.0, %v1264
      %v1266 = vpop.f32.mrf.mxu0
      %v1267 = vpop.f32.mrf.mxu0
      %v1268 = vadd.f32 0.0, %v1267
      %v1269 = vpop.f32.mrf.mxu0
      %1270 = vmatprep.mubr.bf16.mxu0 0
      %1271 = vmatmul.mubr.bf16.gmra.mxu0 %v1141
      %v1272 = vpop.f32.mrf.mxu0
      %v1273 = vadd.f32 0.0, %v1272
      %v1274 = vpop.f32.mrf.mxu0
      %v1275 = vpop.f32.mrf.mxu0
      %v1276 = vadd.f32 0.0, %v1275
      %v1277 = vpop.f32.mrf.mxu0
      %1278 = vmatprep.mubr.bf16.mxu0 0
      %1279 = vmatmul.mubr.bf16.gmra.mxu0 %v1150
      %v1280 = vpop.f32.mrf.mxu0
      %v1281 = vadd.f32 0.0, %v1280
      %v1282 = vpop.f32.mrf.mxu0
      %v1283 = vpop.f32.mrf.mxu0
      %v1284 = vadd.f32 0.0, %v1283
      %v1285 = vpop.f32.mrf.mxu0
      %1286 = vmatprep.mubr.bf16.mxu0 0
      %1287 = vmatmul.mubr.bf16.gmra.mxu0 %v1149
      %v1288 = vpop.f32.mrf.mxu0
      %v1289 = vadd.f32 0.0, %v1288
      %v1290 = vpop.f32.mrf.mxu0
      %v1291 = vpop.f32.mrf.mxu0
      %v1292 = vpop.f32.mrf.mxu0
      %1293 = vdwg.mxu0
      %v1294 = vadd.f32 %v1011, %v1241
      %v1295 = vadd.f32 %v1012, %v1244
      %v1296 = vadd.f32 %v1013, %v1249
      %v1297 = vadd.f32 %v1014, %v1252
      %v1298 = vadd.f32 %v1015, %v1257
      %v1299 = vadd.f32 %v1016, %v1260
      %v1300 = vadd.f32 %v1017, %v1265
      %v1301 = vadd.f32 %v1018, %v1268
      %v1302 = vadd.f32 %v1019, %v1273
      %v1303 = vadd.f32 %v1020, %v1276
      %v1304 = vadd.f32 %v1021, %v1281
      %v1305 = vadd.f32 %v1022, %v1284
      %v1306 = vadd.f32 %v1023, %v1289
      %v1307 = vld [vmem:[%s1 + $0x100] sm:$0xf]
      %v1308 = vld [vmem:[%s1 + $0x104] sm:$0xf]
      %v1309 = vld [vmem:[%s1 + $0x108] sm:$0xf]
      %v1310 = vld [vmem:[%s1 + $0x10c] sm:$0xf]
      %v1311 = vld [vmem:[%s1 + $0x110] sm:$0xf]
      %v1312 = vld [vmem:[%s1 + $0x114] sm:$0xf]
      %v1313 = vld [vmem:[%s1 + $0x118] sm:$0xf]
      %v1314 = vld [vmem:[%s1 + $0x11c] sm:$0xf]
      %v1315 = vld [vmem:[%s1 + $0x120] sm:$0xf]
      %v1316 = vld [vmem:[%s1 + $0x124] sm:$0xf]
      %v1317 = vld [vmem:[%s1 + $0x128] sm:$0xf]
      %v1318 = vld [vmem:[%s1 + $0x12c] sm:$0xf]
      %v1319 = vld [vmem:[%s1 + $0x130] sm:$0xf]
      %v1320 = vld [vmem:[%s1 + $0x134] sm:$0xf]
      %v1321 = vld [vmem:[%s1 + $0x138] sm:$0xf]
      %v1322 = vld [vmem:[%s1 + $0x13c] sm:$0xf]
      %v1323 = vpack.c.b16 %v1070, %v1069
      %v1324 = vpack.c.b16 %v1072, %v1071
      %v1325 = vpack.c.b16 %v1074, %v1073
      %v1326 = vpack.c.b16 %v1076, %v1075
      %v1327 = vpack.c.b16 %v1078, %v1077
      %v1328 = vpack.c.b16 %v1080, %v1079
      %v1329 = vpack.c.b16 %v1081, %v1081
      %v1353 = vunpack.c.l.b16 %v1307
      %v1354 = vunpack.c.l.b16 %v1308
      %v1355 = vunpack.c.l.b16 %v1309
      %v1356 = vunpack.c.l.b16 %v1310
      %v1357 = vunpack.c.l.b16 %v1311
      %v1358 = vunpack.c.l.b16 %v1312
      %v1359 = vunpack.c.l.b16 %v1313
      %v1360 = vunpack.c.l.b16 %v1314
      %v1361 = vunpack.c.l.b16 %v1315
      %v1362 = vunpack.c.l.b16 %v1316
      %v1363 = vunpack.c.l.b16 %v1317
      %v1364 = vunpack.c.l.b16 %v1318
      %v1365 = vunpack.c.l.b16 %v1319
      %v1366 = vunpack.c.l.b16 %v1320
      %v1367 = vunpack.c.l.b16 %v1321
      %v1368 = vunpack.c.l.b16 %v1322
      %v1369 = vpack.c.b16 %v1354, %v1353
      %v1370 = vpack.c.b16 %v1356, %v1355
      %v1371 = vpack.c.b16 %v1358, %v1357
      %v1372 = vpack.c.b16 %v1360, %v1359
      %v1373 = vpack.c.b16 %v1362, %v1361
      %v1374 = vpack.c.b16 %v1364, %v1363
      %v1375 = vpack.c.b16 %v1366, %v1365
      %v1376 = vpack.c.b16 %v1368, %v1367
      %1385 = vmatprep.subr.bf16.mxu0 0
      %1386 = vmatpush1.bf16.msra.mxu0 %v1376
      %1387 = vmatprep.subr.bf16.mxu0 0
      %1388 = vmatpush1.bf16.msra.mxu0 %v1375
      %1389 = vmatprep.subr.bf16.mxu0 0
      %1390 = vmatpush1.bf16.msra.mxu0 %v1374
      %1391 = vmatprep.subr.bf16.mxu0 0
      %1392 = vmatpush1.bf16.msra.mxu0 %v1373
      %1393 = vmatprep.subr.bf16.mxu0 0
      %1394 = vmatpush1.bf16.msra.mxu0 %v1372
      %1395 = vmatprep.subr.bf16.mxu0 0
      %1396 = vmatpush1.bf16.msra.mxu0 %v1371
      %1397 = vmatprep.subr.bf16.mxu0 0
      %1398 = vmatpush1.bf16.msra.mxu0 %v1370
      %1399 = vmatprep.subr.bf16.mxu0 0
      %1400 = vmatpush1.bf16.msra.mxu0 %v1369
      %1401 = vmatprep.subr.bf16.mxu0 0
      %1402 = vmatpush2.bf16.msra.mxu0 0
      %1403 = vmatprep.subr.bf16.mxu0 0
      %1404 = vmatpush2.bf16.msra.mxu0 0
      %1405 = vmatprep.subr.bf16.mxu0 0
      %1406 = vmatpush2.bf16.msra.mxu0 0
      %1407 = vmatprep.subr.bf16.mxu0 0
      %1408 = vmatpush2.bf16.msra.mxu0 0
      %1409 = vmatprep.subr.bf16.mxu0 0
      %1410 = vmatpush2.bf16.msra.mxu0 0
      %1411 = vmatprep.subr.bf16.mxu0 0
      %1412 = vmatpush2.bf16.msra.mxu0 0
      %1413 = vmatprep.subr.bf16.mxu0 0
      %1414 = vmatpush2.bf16.msra.mxu0 0
      %1415 = vmatprep.subr.bf16.mxu0 0
      %1416 = vmatpush2.bf16.msra.mxu0 0
      %1417 = vmatprep.mubr.bf16.mxu0 0
      %1418 = vmatmul.mubr.bf16.gmra.mxu0 %v1323
      %v1419 = vpop.f32.mrf.mxu0
      %v1420 = vadd.f32 0.0, %v1419
      %v1421 = vpop.f32.mrf.mxu0
      %v1422 = vpop.f32.mrf.mxu0
      %v1423 = vadd.f32 0.0, %v1422
      %v1424 = vpop.f32.mrf.mxu0
      %1425 = vmatprep.mubr.bf16.mxu0 0
      %1426 = vmatmul.mubr.bf16.gmra.mxu0 %v1324
      %v1427 = vpop.f32.mrf.mxu0
      %v1428 = vadd.f32 0.0, %v1427
      %v1429 = vpop.f32.mrf.mxu0
      %v1430 = vpop.f32.mrf.mxu0
      %v1431 = vadd.f32 0.0, %v1430
      %v1432 = vpop.f32.mrf.mxu0
      %1433 = vmatprep.mubr.bf16.mxu0 0
      %1434 = vmatmul.mubr.bf16.gmra.mxu0 %v1325
      %v1435 = vpop.f32.mrf.mxu0
      %v1436 = vadd.f32 0.0, %v1435
      %v1437 = vpop.f32.mrf.mxu0
      %v1438 = vpop.f32.mrf.mxu0
      %v1439 = vadd.f32 0.0, %v1438
      %v1440 = vpop.f32.mrf.mxu0
      %1441 = vmatprep.mubr.bf16.mxu0 0
      %1442 = vmatmul.mubr.bf16.gmra.mxu0 %v1326
      %v1443 = vpop.f32.mrf.mxu0
      %v1444 = vadd.f32 0.0, %v1443
      %v1445 = vpop.f32.mrf.mxu0
      %v1446 = vpop.f32.mrf.mxu0
      %v1447 = vadd.f32 0.0, %v1446
      %v1448 = vpop.f32.mrf.mxu0
      %1449 = vmatprep.mubr.bf16.mxu0 0
      %1450 = vmatmul.mubr.bf16.gmra.mxu0 %v1327
      %v1451 = vpop.f32.mrf.mxu0
      %v1452 = vadd.f32 0.0, %v1451
      %v1453 = vpop.f32.mrf.mxu0
      %v1454 = vpop.f32.mrf.mxu0
      %v1455 = vadd.f32 0.0, %v1454
      %v1456 = vpop.f32.mrf.mxu0
      %1457 = vmatprep.mubr.bf16.mxu0 0
      %1458 = vmatmul.mubr.bf16.gmra.mxu0 %v1328
      %v1459 = vpop.f32.mrf.mxu0
      %v1460 = vadd.f32 0.0, %v1459
      %v1461 = vpop.f32.mrf.mxu0
      %v1462 = vpop.f32.mrf.mxu0
      %v1463 = vadd.f32 0.0, %v1462
      %v1464 = vpop.f32.mrf.mxu0
      %1465 = vmatprep.mubr.bf16.mxu0 0
      %1466 = vmatmul.mubr.bf16.gmra.mxu0 %v1329
      %v1467 = vpop.f32.mrf.mxu0
      %v1468 = vadd.f32 0.0, %v1467
      %v1469 = vpop.f32.mrf.mxu0
      %v1470 = vpop.f32.mrf.mxu0
      %v1471 = vpop.f32.mrf.mxu0
      %1472 = vdwg.mxu0
      %v1473 = vadd.f32 %v1294, %v1420
      %v1474 = vadd.f32 %v1295, %v1423
      %v1475 = vadd.f32 %v1296, %v1428
      %v1476 = vadd.f32 %v1297, %v1431
      %v1477 = vadd.f32 %v1298, %v1436
      %v1478 = vadd.f32 %v1299, %v1439
      %v1479 = vadd.f32 %v1300, %v1444
      %v1480 = vadd.f32 %v1301, %v1447
      %v1481 = vadd.f32 %v1302, %v1452
      %v1482 = vadd.f32 %v1303, %v1455
      %v1483 = vadd.f32 %v1304, %v1460
      %v1484 = vadd.f32 %v1305, %v1463
      %v1485 = vadd.f32 %v1306, %v1468
      %v1486 = vld [vmem:[%s270 + $0x8] sm:$0xf]
      %v1487 = vld [vmem:[%s270 + $0xc] sm:$0xf]
      %v1488 = vld [vmem:[%s270 + $0x10] sm:$0xf]
      %v1489 = vld [vmem:[%s270 + $0x14] sm:$0xf]
      %v1490 = vld [vmem:[%s270 + $0x18] sm:$0xf]
      %v1491 = vld [vmem:[%s270 + $0x1c] sm:$0xf]
      %v1492 = vld [vmem:[%s270 + $0x20] sm:$0xf]
      %v1493 = vld [vmem:[%s270 + $0x24] sm:$0xf]
      %v1494 = vld [vmem:[%s270 + $0x28] sm:$0xf]
      %v1495 = vld [vmem:[%s270 + $0x2c] sm:$0xf]
      %v1496 = vld [vmem:[%s270 + $0x30] sm:$0xf]
      %v1497 = vld [vmem:[%s270 + $0x34] sm:$0xf]
      %v1498 = vld [vmem:[%s270 + $0x38] sm:$0xf]
      %v1499 = vld [vmem:[%s270 + $0x3c] sm:$0x1]
      %v1500 = vld [vmem:[%s1 + $0x140] sm:$0xf]
      %v1501 = vld [vmem:[%s1 + $0x144] sm:$0xf]
      %v1502 = vld [vmem:[%s1 + $0x148] sm:$0xf]
      %v1503 = vld [vmem:[%s1 + $0x14c] sm:$0xf]
      %v1504 = vld [vmem:[%s1 + $0x150] sm:$0xf]
      %v1505 = vld [vmem:[%s1 + $0x154] sm:$0xf]
      %v1506 = vld [vmem:[%s1 + $0x158] sm:$0xf]
      %v1507 = vld [vmem:[%s1 + $0x15c] sm:$0xf]
      %v1508 = vld [vmem:[%s1 + $0x160] sm:$0xf]
      %v1509 = vld [vmem:[%s1 + $0x164] sm:$0xf]
      %v1510 = vld [vmem:[%s1 + $0x168] sm:$0xf]
      %v1511 = vld [vmem:[%s1 + $0x16c] sm:$0xf]
      %v1512 = vld [vmem:[%s1 + $0x170] sm:$0xf]
      %v1513 = vld [vmem:[%s1 + $0x174] sm:$0xf]
      %v1514 = vld [vmem:[%s1 + $0x178] sm:$0xf]
      %v1515 = vld [vmem:[%s1 + $0x17c] sm:$0xf]
      %v1530 = vunpack.c.l.b16 %v1486
      %v1531 = vunpack.c.l.b16 %v1487
      %v1532 = vunpack.c.l.b16 %v1488
      %v1533 = vunpack.c.l.b16 %v1489
      %v1534 = vunpack.c.l.b16 %v1490
      %v1535 = vunpack.c.l.b16 %v1491
      %v1536 = vunpack.c.l.b16 %v1492
      %v1537 = vunpack.c.l.b16 %v1493
      %v1538 = vunpack.c.l.b16 %v1494
      %v1539 = vunpack.c.l.b16 %v1495
      %v1540 = vunpack.c.l.b16 %v1496
      %v1541 = vunpack.c.l.b16 %v1497
      %v1542 = vunpack.c.l.b16 %v1498
      %v1543 = vunpack.c.l.b16 %v1499
      %v1544 = vpack.c.b16 %v1531, %v1530
      %v1545 = vpack.c.b16 %v1533, %v1532
      %v1546 = vpack.c.b16 %v1535, %v1534
      %v1547 = vpack.c.b16 %v1537, %v1536
      %v1548 = vpack.c.b16 %v1539, %v1538
      %v1549 = vpack.c.b16 %v1541, %v1540
      %v1550 = vpack.c.b16 %v1543, %v1542
      %vm1551 = vsmask.f32 7424
      %v1553 = vshrl.u32 %v1544, 16
      %v1555 = vshll.u32 %v1544, 16
      %v1557 = vrot.slane %v1555, 1
      %v1558 = vor.u32 %v1553, %v1557
      %v1560 = vshll.u32 %v1545, 16
      %v1562 = vrot.slane %v1560, 1
      %v1563 = vsel %vm1551, %v1558, %v1562
      %v1564 = vshrl.u32 %v1545, 16
      %v1566 = vor.u32 %v1564, %v1562
      %v1568 = vshll.u32 %v1546, 16
      %v1570 = vrot.slane %v1568, 1
      %v1571 = vsel %vm1551, %v1566, %v1570
      %v1572 = vshrl.u32 %v1546, 16
      %v1574 = vor.u32 %v1572, %v1570
      %v1576 = vshll.u32 %v1547, 16
      %v1578 = vrot.slane %v1576, 1
      %v1579 = vsel %vm1551, %v1574, %v1578
      %v1580 = vshrl.u32 %v1547, 16
      %v1582 = vor.u32 %v1580, %v1578
      %v1584 = vshll.u32 %v1548, 16
      %v1586 = vrot.slane %v1584, 1
      %v1587 = vsel %vm1551, %v1582, %v1586
      %v1588 = vshrl.u32 %v1548, 16
      %v1590 = vor.u32 %v1588, %v1586
      %v1592 = vshll.u32 %v1549, 16
      %v1594 = vrot.slane %v1592, 1
      %v1595 = vsel %vm1551, %v1590, %v1594
      %v1596 = vshrl.u32 %v1549, 16
      %v1598 = vor.u32 %v1596, %v1594
      %v1600 = vshll.u32 %v1550, 16
      %v1602 = vrot.slane %v1600, 1
      %v1603 = vsel %vm1551, %v1598, %v1602
      %v1604 = vshrl.u32 %v1550, 16
      %v1606 = vor.u32 %v1604, %v1602
      %v1630 = vunpack.c.l.b16 %v1500
      %v1631 = vunpack.c.l.b16 %v1501
      %v1632 = vunpack.c.l.b16 %v1502
      %v1633 = vunpack.c.l.b16 %v1503
      %v1634 = vunpack.c.l.b16 %v1504
      %v1635 = vunpack.c.l.b16 %v1505
      %v1636 = vunpack.c.l.b16 %v1506
      %v1637 = vunpack.c.l.b16 %v1507
      %v1638 = vunpack.c.l.b16 %v1508
      %v1639 = vunpack.c.l.b16 %v1509
      %v1640 = vunpack.c.l.b16 %v1510
      %v1641 = vunpack.c.l.b16 %v1511
      %v1642 = vunpack.c.l.b16 %v1512
      %v1643 = vunpack.c.l.b16 %v1513
      %v1644 = vunpack.c.l.b16 %v1514
      %v1645 = vunpack.c.l.b16 %v1515
      %v1646 = vpack.c.b16 %v1631, %v1630
      %v1647 = vpack.c.b16 %v1633, %v1632
      %v1648 = vpack.c.b16 %v1635, %v1634
      %v1649 = vpack.c.b16 %v1637, %v1636
      %v1650 = vpack.c.b16 %v1639, %v1638
      %v1651 = vpack.c.b16 %v1641, %v1640
      %v1652 = vpack.c.b16 %v1643, %v1642
      %v1653 = vpack.c.b16 %v1645, %v1644
      %1662 = vmatprep.subr.bf16.mxu0 0
      %1663 = vmatpush1.bf16.msra.mxu0 %v1653
      %1664 = vmatprep.subr.bf16.mxu0 0
      %1665 = vmatpush1.bf16.msra.mxu0 %v1652
      %1666 = vmatprep.subr.bf16.mxu0 0
      %1667 = vmatpush1.bf16.msra.mxu0 %v1651
      %1668 = vmatprep.subr.bf16.mxu0 0
      %1669 = vmatpush1.bf16.msra.mxu0 %v1650
      %1670 = vmatprep.subr.bf16.mxu0 0
      %1671 = vmatpush1.bf16.msra.mxu0 %v1649
      %1672 = vmatprep.subr.bf16.mxu0 0
      %1673 = vmatpush1.bf16.msra.mxu0 %v1648
      %1674 = vmatprep.subr.bf16.mxu0 0
      %1675 = vmatpush1.bf16.msra.mxu0 %v1647
      %1676 = vmatprep.subr.bf16.mxu0 0
      %1677 = vmatpush1.bf16.msra.mxu0 %v1646
      %1678 = vmatprep.subr.bf16.mxu0 0
      %1679 = vmatpush2.bf16.msra.mxu0 0
      %1680 = vmatprep.subr.bf16.mxu0 0
      %1681 = vmatpush2.bf16.msra.mxu0 0
      %1682 = vmatprep.subr.bf16.mxu0 0
      %1683 = vmatpush2.bf16.msra.mxu0 0
      %1684 = vmatprep.subr.bf16.mxu0 0
      %1685 = vmatpush2.bf16.msra.mxu0 0
      %1686 = vmatprep.subr.bf16.mxu0 0
      %1687 = vmatpush2.bf16.msra.mxu0 0
      %1688 = vmatprep.subr.bf16.mxu0 0
      %1689 = vmatpush2.bf16.msra.mxu0 0
      %1690 = vmatprep.subr.bf16.mxu0 0
      %1691 = vmatpush2.bf16.msra.mxu0 0
      %1692 = vmatprep.subr.bf16.mxu0 0
      %1693 = vmatpush2.bf16.msra.mxu0 0
      %1694 = vmatprep.mubr.bf16.mxu0 0
      %1695 = vmatmul.mubr.bf16.gmra.mxu0 %v1563
      %v1696 = vpop.f32.mrf.mxu0
      %v1697 = vadd.f32 0.0, %v1696
      %v1698 = vpop.f32.mrf.mxu0
      %v1699 = vpop.f32.mrf.mxu0
      %v1700 = vadd.f32 0.0, %v1699
      %v1701 = vpop.f32.mrf.mxu0
      %1702 = vmatprep.mubr.bf16.mxu0 0
      %1703 = vmatmul.mubr.bf16.gmra.mxu0 %v1571
      %v1704 = vpop.f32.mrf.mxu0
      %v1705 = vadd.f32 0.0, %v1704
      %v1706 = vpop.f32.mrf.mxu0
      %v1707 = vpop.f32.mrf.mxu0
      %v1708 = vadd.f32 0.0, %v1707
      %v1709 = vpop.f32.mrf.mxu0
      %1710 = vmatprep.mubr.bf16.mxu0 0
      %1711 = vmatmul.mubr.bf16.gmra.mxu0 %v1579
      %v1712 = vpop.f32.mrf.mxu0
      %v1713 = vadd.f32 0.0, %v1712
      %v1714 = vpop.f32.mrf.mxu0
      %v1715 = vpop.f32.mrf.mxu0
      %v1716 = vadd.f32 0.0, %v1715
      %v1717 = vpop.f32.mrf.mxu0
      %1718 = vmatprep.mubr.bf16.mxu0 0
      %1719 = vmatmul.mubr.bf16.gmra.mxu0 %v1587
      %v1720 = vpop.f32.mrf.mxu0
      %v1721 = vadd.f32 0.0, %v1720
      %v1722 = vpop.f32.mrf.mxu0
      %v1723 = vpop.f32.mrf.mxu0
      %v1724 = vadd.f32 0.0, %v1723
      %v1725 = vpop.f32.mrf.mxu0
      %1726 = vmatprep.mubr.bf16.mxu0 0
      %1727 = vmatmul.mubr.bf16.gmra.mxu0 %v1595
      %v1728 = vpop.f32.mrf.mxu0
      %v1729 = vadd.f32 0.0, %v1728
      %v1730 = vpop.f32.mrf.mxu0
      %v1731 = vpop.f32.mrf.mxu0
      %v1732 = vadd.f32 0.0, %v1731
      %v1733 = vpop.f32.mrf.mxu0
      %1734 = vmatprep.mubr.bf16.mxu0 0
      %1735 = vmatmul.mubr.bf16.gmra.mxu0 %v1603
      %v1736 = vpop.f32.mrf.mxu0
      %v1737 = vadd.f32 0.0, %v1736
      %v1738 = vpop.f32.mrf.mxu0
      %v1739 = vpop.f32.mrf.mxu0
      %v1740 = vadd.f32 0.0, %v1739
      %v1741 = vpop.f32.mrf.mxu0
      %1742 = vmatprep.mubr.bf16.mxu0 0
      %1743 = vmatmul.mubr.bf16.gmra.mxu0 %v1606
      %v1744 = vpop.f32.mrf.mxu0
      %v1745 = vadd.f32 0.0, %v1744
      %v1746 = vpop.f32.mrf.mxu0
      %v1747 = vpop.f32.mrf.mxu0
      %v1748 = vpop.f32.mrf.mxu0
      %1749 = vdwg.mxu0
      %v1750 = vadd.f32 %v1473, %v1697
      %v1751 = vadd.f32 %v1474, %v1700
      %v1752 = vadd.f32 %v1475, %v1705
      %v1753 = vadd.f32 %v1476, %v1708
      %v1754 = vadd.f32 %v1477, %v1713
      %v1755 = vadd.f32 %v1478, %v1716
      %v1756 = vadd.f32 %v1479, %v1721
      %v1757 = vadd.f32 %v1480, %v1724
      %v1758 = vadd.f32 %v1481, %v1729
      %v1759 = vadd.f32 %v1482, %v1732
      %v1760 = vadd.f32 %v1483, %v1737
      %v1761 = vadd.f32 %v1484, %v1740
      %v1762 = vadd.f32 %v1485, %v1745
      %v1763 = vld [vmem:[%s270 + $0xc] sm:$0xf]
      %v1764 = vld [vmem:[%s270 + $0x10] sm:$0xf]
      %v1765 = vld [vmem:[%s270 + $0x14] sm:$0xf]
      %v1766 = vld [vmem:[%s270 + $0x18] sm:$0xf]
      %v1767 = vld [vmem:[%s270 + $0x1c] sm:$0xf]
      %v1768 = vld [vmem:[%s270 + $0x20] sm:$0xf]
      %v1769 = vld [vmem:[%s270 + $0x24] sm:$0xf]
      %v1770 = vld [vmem:[%s270 + $0x28] sm:$0xf]
      %v1771 = vld [vmem:[%s270 + $0x2c] sm:$0xf]
      %v1772 = vld [vmem:[%s270 + $0x30] sm:$0xf]
      %v1773 = vld [vmem:[%s270 + $0x34] sm:$0xf]
      %v1774 = vld [vmem:[%s270 + $0x38] sm:$0xf]
      %v1775 = vld [vmem:[%s270 + $0x3c] sm:$0xf]
      %v1776 = vld [vmem:[%s270 + $0x40] sm:$0x1]
      %v1777 = vld [vmem:[%s1 + $0x180] sm:$0xf]
      %v1778 = vld [vmem:[%s1 + $0x184] sm:$0xf]
      %v1779 = vld [vmem:[%s1 + $0x188] sm:$0xf]
      %v1780 = vld [vmem:[%s1 + $0x18c] sm:$0xf]
      %v1781 = vld [vmem:[%s1 + $0x190] sm:$0xf]
      %v1782 = vld [vmem:[%s1 + $0x194] sm:$0xf]
      %v1783 = vld [vmem:[%s1 + $0x198] sm:$0xf]
      %v1784 = vld [vmem:[%s1 + $0x19c] sm:$0xf]
      %v1785 = vld [vmem:[%s1 + $0x1a0] sm:$0xf]
      %v1786 = vld [vmem:[%s1 + $0x1a4] sm:$0xf]
      %v1787 = vld [vmem:[%s1 + $0x1a8] sm:$0xf]
      %v1788 = vld [vmem:[%s1 + $0x1ac] sm:$0xf]
      %v1789 = vld [vmem:[%s1 + $0x1b0] sm:$0xf]
      %v1790 = vld [vmem:[%s1 + $0x1b4] sm:$0xf]
      %v1791 = vld [vmem:[%s1 + $0x1b8] sm:$0xf]
      %v1792 = vld [vmem:[%s1 + $0x1bc] sm:$0xf]
      %v1807 = vunpack.c.l.b16 %v1763
      %v1808 = vunpack.c.l.b16 %v1764
      %v1809 = vunpack.c.l.b16 %v1765
      %v1810 = vunpack.c.l.b16 %v1766
      %v1811 = vunpack.c.l.b16 %v1767
      %v1812 = vunpack.c.l.b16 %v1768
      %v1813 = vunpack.c.l.b16 %v1769
      %v1814 = vunpack.c.l.b16 %v1770
      %v1815 = vunpack.c.l.b16 %v1771
      %v1816 = vunpack.c.l.b16 %v1772
      %v1817 = vunpack.c.l.b16 %v1773
      %v1818 = vunpack.c.l.b16 %v1774
      %v1819 = vunpack.c.l.b16 %v1775
      %v1820 = vunpack.c.l.b16 %v1776
      %v1821 = vpack.c.b16 %v1808, %v1807
      %v1822 = vpack.c.b16 %v1810, %v1809
      %v1823 = vpack.c.b16 %v1812, %v1811
      %v1824 = vpack.c.b16 %v1814, %v1813
      %v1825 = vpack.c.b16 %v1816, %v1815
      %v1826 = vpack.c.b16 %v1818, %v1817
      %v1827 = vpack.c.b16 %v1820, %v1819
      %v1829 = vshrl.u32 %v1821, 16
      %v1831 = vshll.u32 %v1821, 16
      %v1833 = vrot.slane %v1831, 1
      %v1834 = vor.u32 %v1829, %v1833
      %v1836 = vshll.u32 %v1822, 16
      %v1838 = vrot.slane %v1836, 1
      %v1839 = vsel %vm1551, %v1834, %v1838
      %v1840 = vshrl.u32 %v1822, 16
      %v1842 = vor.u32 %v1840, %v1838
      %v1844 = vshll.u32 %v1823, 16
      %v1846 = vrot.slane %v1844, 1
      %v1847 = vsel %vm1551, %v1842, %v1846
      %v1848 = vshrl.u32 %v1823, 16
      %v1850 = vor.u32 %v1848, %v1846
      %v1852 = vshll.u32 %v1824, 16
      %v1854 = vrot.slane %v1852, 1
      %v1855 = vsel %vm1551, %v1850, %v1854
      %v1856 = vshrl.u32 %v1824, 16
      %v1858 = vor.u32 %v1856, %v1854
      %v1860 = vshll.u32 %v1825, 16
      %v1862 = vrot.slane %v1860, 1
      %v1863 = vsel %vm1551, %v1858, %v1862
      %v1864 = vshrl.u32 %v1825, 16
      %v1866 = vor.u32 %v1864, %v1862
      %v1868 = vshll.u32 %v1826, 16
      %v1870 = vrot.slane %v1868, 1
      %v1871 = vsel %vm1551, %v1866, %v1870
      %v1872 = vshrl.u32 %v1826, 16
      %v1874 = vor.u32 %v1872, %v1870
      %v1876 = vshll.u32 %v1827, 16
      %v1878 = vrot.slane %v1876, 1
      %v1879 = vsel %vm1551, %v1874, %v1878
      %v1880 = vshrl.u32 %v1827, 16
      %v1882 = vor.u32 %v1880, %v1878
      %v1906 = vunpack.c.l.b16 %v1777
      %v1907 = vunpack.c.l.b16 %v1778
      %v1908 = vunpack.c.l.b16 %v1779
      %v1909 = vunpack.c.l.b16 %v1780
      %v1910 = vunpack.c.l.b16 %v1781
      %v1911 = vunpack.c.l.b16 %v1782
      %v1912 = vunpack.c.l.b16 %v1783
      %v1913 = vunpack.c.l.b16 %v1784
      %v1914 = vunpack.c.l.b16 %v1785
      %v1915 = vunpack.c.l.b16 %v1786
      %v1916 = vunpack.c.l.b16 %v1787
      %v1917 = vunpack.c.l.b16 %v1788
      %v1918 = vunpack.c.l.b16 %v1789
      %v1919 = vunpack.c.l.b16 %v1790
      %v1920 = vunpack.c.l.b16 %v1791
      %v1921 = vunpack.c.l.b16 %v1792
      %v1922 = vpack.c.b16 %v1907, %v1906
      %v1923 = vpack.c.b16 %v1909, %v1908
      %v1924 = vpack.c.b16 %v1911, %v1910
      %v1925 = vpack.c.b16 %v1913, %v1912
      %v1926 = vpack.c.b16 %v1915, %v1914
      %v1927 = vpack.c.b16 %v1917, %v1916
      %v1928 = vpack.c.b16 %v1919, %v1918
      %v1929 = vpack.c.b16 %v1921, %v1920
      %1938 = vmatprep.subr.bf16.mxu0 0
      %1939 = vmatpush1.bf16.msra.mxu0 %v1929
      %1940 = vmatprep.subr.bf16.mxu0 0
      %1941 = vmatpush1.bf16.msra.mxu0 %v1928
      %1942 = vmatprep.subr.bf16.mxu0 0
      %1943 = vmatpush1.bf16.msra.mxu0 %v1927
      %1944 = vmatprep.subr.bf16.mxu0 0
      %1945 = vmatpush1.bf16.msra.mxu0 %v1926
      %1946 = vmatprep.subr.bf16.mxu0 0
      %1947 = vmatpush1.bf16.msra.mxu0 %v1925
      %1948 = vmatprep.subr.bf16.mxu0 0
      %1949 = vmatpush1.bf16.msra.mxu0 %v1924
      %1950 = vmatprep.subr.bf16.mxu0 0
      %1951 = vmatpush1.bf16.msra.mxu0 %v1923
      %1952 = vmatprep.subr.bf16.mxu0 0
      %1953 = vmatpush1.bf16.msra.mxu0 %v1922
      %1954 = vmatprep.subr.bf16.mxu0 0
      %1955 = vmatpush2.bf16.msra.mxu0 0
      %1956 = vmatprep.subr.bf16.mxu0 0
      %1957 = vmatpush2.bf16.msra.mxu0 0
      %1958 = vmatprep.subr.bf16.mxu0 0
      %1959 = vmatpush2.bf16.msra.mxu0 0
      %1960 = vmatprep.subr.bf16.mxu0 0
      %1961 = vmatpush2.bf16.msra.mxu0 0
      %1962 = vmatprep.subr.bf16.mxu0 0
      %1963 = vmatpush2.bf16.msra.mxu0 0
      %1964 = vmatprep.subr.bf16.mxu0 0
      %1965 = vmatpush2.bf16.msra.mxu0 0
      %1966 = vmatprep.subr.bf16.mxu0 0
      %1967 = vmatpush2.bf16.msra.mxu0 0
      %1968 = vmatprep.subr.bf16.mxu0 0
      %1969 = vmatpush2.bf16.msra.mxu0 0
      %1970 = vmatprep.mubr.bf16.mxu0 0
      %1971 = vmatmul.mubr.bf16.gmra.mxu0 %v1839
      %v1972 = vpop.f32.mrf.mxu0
      %v1973 = vadd.f32 0.0, %v1972
      %v1974 = vpop.f32.mrf.mxu0
      %v1975 = vpop.f32.mrf.mxu0
      %v1976 = vadd.f32 0.0, %v1975
      %v1977 = vpop.f32.mrf.mxu0
      %1978 = vmatprep.mubr.bf16.mxu0 0
      %1979 = vmatmul.mubr.bf16.gmra.mxu0 %v1847
      %v1980 = vpop.f32.mrf.mxu0
      %v1981 = vadd.f32 0.0, %v1980
      %v1982 = vpop.f32.mrf.mxu0
      %v1983 = vpop.f32.mrf.mxu0
      %v1984 = vadd.f32 0.0, %v1983
      %v1985 = vpop.f32.mrf.mxu0
      %1986 = vmatprep.mubr.bf16.mxu0 0
      %1987 = vmatmul.mubr.bf16.gmra.mxu0 %v1855
      %v1988 = vpop.f32.mrf.mxu0
      %v1989 = vadd.f32 0.0, %v1988
      %v1990 = vpop.f32.mrf.mxu0
      %v1991 = vpop.f32.mrf.mxu0
      %v1992 = vadd.f32 0.0, %v1991
      %v1993 = vpop.f32.mrf.mxu0
      %1994 = vmatprep.mubr.bf16.mxu0 0
      %1995 = vmatmul.mubr.bf16.gmra.mxu0 %v1863
      %v1996 = vpop.f32.mrf.mxu0
      %v1997 = vadd.f32 0.0, %v1996
      %v1998 = vpop.f32.mrf.mxu0
      %v1999 = vpop.f32.mrf.mxu0
      %v2000 = vadd.f32 0.0, %v1999
      %v2001 = vpop.f32.mrf.mxu0
      %2002 = vmatprep.mubr.bf16.mxu0 0
      %2003 = vmatmul.mubr.bf16.gmra.mxu0 %v1871
      %v2004 = vpop.f32.mrf.mxu0
      %v2005 = vadd.f32 0.0, %v2004
      %v2006 = vpop.f32.mrf.mxu0
      %v2007 = vpop.f32.mrf.mxu0
      %v2008 = vadd.f32 0.0, %v2007
      %v2009 = vpop.f32.mrf.mxu0
      %2010 = vmatprep.mubr.bf16.mxu0 0
      %2011 = vmatmul.mubr.bf16.gmra.mxu0 %v1879
      %v2012 = vpop.f32.mrf.mxu0
      %v2013 = vadd.f32 0.0, %v2012
      %v2014 = vpop.f32.mrf.mxu0
      %v2015 = vpop.f32.mrf.mxu0
      %v2016 = vadd.f32 0.0, %v2015
      %v2017 = vpop.f32.mrf.mxu0
      %2018 = vmatprep.mubr.bf16.mxu0 0
      %2019 = vmatmul.mubr.bf16.gmra.mxu0 %v1882
      %v2020 = vpop.f32.mrf.mxu0
      %v2021 = vadd.f32 0.0, %v2020
      %v2022 = vpop.f32.mrf.mxu0
      %v2023 = vpop.f32.mrf.mxu0
      %v2024 = vpop.f32.mrf.mxu0
      %2025 = vdwg.mxu0
      %v2026 = vadd.f32 %v1750, %v1973
      %v2027 = vadd.f32 %v1751, %v1976
      %v2028 = vadd.f32 %v1752, %v1981
      %v2029 = vadd.f32 %v1753, %v1984
      %v2030 = vadd.f32 %v1754, %v1989
      %v2031 = vadd.f32 %v1755, %v1992
      %v2032 = vadd.f32 %v1756, %v1997
      %v2033 = vadd.f32 %v1757, %v2000
      %v2034 = vadd.f32 %v1758, %v2005
      %v2035 = vadd.f32 %v1759, %v2008
      %v2036 = vadd.f32 %v1760, %v2013
      %v2037 = vadd.f32 %v1761, %v2016
      %v2038 = vadd.f32 %v1762, %v2021
      %v2039 = vld [vmem:[%s270 + $0xc] sm:$0xe]
      %v2040 = vld [vmem:[%s1 + $0x1c0] sm:$0xf]
      %v2041 = vld [vmem:[%s1 + $0x1c4] sm:$0xf]
      %v2042 = vld [vmem:[%s1 + $0x1c8] sm:$0xf]
      %v2043 = vld [vmem:[%s1 + $0x1cc] sm:$0xf]
      %v2044 = vld [vmem:[%s1 + $0x1d0] sm:$0xf]
      %v2045 = vld [vmem:[%s1 + $0x1d4] sm:$0xf]
      %v2046 = vld [vmem:[%s1 + $0x1d8] sm:$0xf]
      %v2047 = vld [vmem:[%s1 + $0x1dc] sm:$0xf]
      %v2048 = vld [vmem:[%s1 + $0x1e0] sm:$0xf]
      %v2049 = vld [vmem:[%s1 + $0x1e4] sm:$0xf]
      %v2050 = vld [vmem:[%s1 + $0x1e8] sm:$0xf]
      %v2051 = vld [vmem:[%s1 + $0x1ec] sm:$0xf]
      %v2052 = vld [vmem:[%s1 + $0x1f0] sm:$0xf]
      %v2053 = vld [vmem:[%s1 + $0x1f4] sm:$0xf]
      %v2054 = vld [vmem:[%s1 + $0x1f8] sm:$0xf]
      %v2055 = vld [vmem:[%s1 + $0x1fc] sm:$0xf]
      %v2057 = vunpack.c.l.b16 %v2039
      %v2058 = vpack.c.b16 %v1808, %v2057
      %vm2059 = vcmask 1046528
      %v2060 = vrot.slane %v2058, 1
      %v2061 = vrot.slane %v1822, 1
      %v2062 = vsel %vm2059, %v2060, %v2061
      %v2063 = vrot.slane %v1823, 1
      %v2064 = vsel %vm2059, %v2061, %v2063
      %v2065 = vrot.slane %v1824, 1
      %v2066 = vsel %vm2059, %v2063, %v2065
      %v2067 = vrot.slane %v1825, 1
      %v2068 = vsel %vm2059, %v2065, %v2067
      %v2069 = vrot.slane %v1826, 1
      %v2070 = vsel %vm2059, %v2067, %v2069
      %v2071 = vrot.slane %v1827, 1
      %v2072 = vsel %vm2059, %v2069, %v2071
      %v2096 = vunpack.c.l.b16 %v2040
      %v2097 = vunpack.c.l.b16 %v2041
      %v2098 = vunpack.c.l.b16 %v2042
      %v2099 = vunpack.c.l.b16 %v2043
      %v2100 = vunpack.c.l.b16 %v2044
      %v2101 = vunpack.c.l.b16 %v2045
      %v2102 = vunpack.c.l.b16 %v2046
      %v2103 = vunpack.c.l.b16 %v2047
      %v2104 = vunpack.c.l.b16 %v2048
      %v2105 = vunpack.c.l.b16 %v2049
      %v2106 = vunpack.c.l.b16 %v2050
      %v2107 = vunpack.c.l.b16 %v2051
      %v2108 = vunpack.c.l.b16 %v2052
      %v2109 = vunpack.c.l.b16 %v2053
      %v2110 = vunpack.c.l.b16 %v2054
      %v2111 = vunpack.c.l.b16 %v2055
      %v2112 = vpack.c.b16 %v2097, %v2096
      %v2113 = vpack.c.b16 %v2099, %v2098
      %v2114 = vpack.c.b16 %v2101, %v2100
      %v2115 = vpack.c.b16 %v2103, %v2102
      %v2116 = vpack.c.b16 %v2105, %v2104
      %v2117 = vpack.c.b16 %v2107, %v2106
      %v2118 = vpack.c.b16 %v2109, %v2108
      %v2119 = vpack.c.b16 %v2111, %v2110
      %2128 = vmatprep.subr.bf16.mxu0 0
      %2129 = vmatpush1.bf16.msra.mxu0 %v2119
      %2130 = vmatprep.subr.bf16.mxu0 0
      %2131 = vmatpush1.bf16.msra.mxu0 %v2118
      %2132 = vmatprep.subr.bf16.mxu0 0
      %2133 = vmatpush1.bf16.msra.mxu0 %v2117
      %2134 = vmatprep.subr.bf16.mxu0 0
      %2135 = vmatpush1.bf16.msra.mxu0 %v2116
      %2136 = vmatprep.subr.bf16.mxu0 0
      %2137 = vmatpush1.bf16.msra.mxu0 %v2115
      %2138 = vmatprep.subr.bf16.mxu0 0
      %2139 = vmatpush1.bf16.msra.mxu0 %v2114
      %2140 = vmatprep.subr.bf16.mxu0 0
      %2141 = vmatpush1.bf16.msra.mxu0 %v2113
      %2142 = vmatprep.subr.bf16.mxu0 0
      %2143 = vmatpush1.bf16.msra.mxu0 %v2112
      %2144 = vmatprep.subr.bf16.mxu0 0
      %2145 = vmatpush2.bf16.msra.mxu0 0
      %2146 = vmatprep.subr.bf16.mxu0 0
      %2147 = vmatpush2.bf16.msra.mxu0 0
      %2148 = vmatprep.subr.bf16.mxu0 0
      %2149 = vmatpush2.bf16.msra.mxu0 0
      %2150 = vmatprep.subr.bf16.mxu0 0
      %2151 = vmatpush2.bf16.msra.mxu0 0
      %2152 = vmatprep.subr.bf16.mxu0 0
      %2153 = vmatpush2.bf16.msra.mxu0 0
      %2154 = vmatprep.subr.bf16.mxu0 0
      %2155 = vmatpush2.bf16.msra.mxu0 0
      %2156 = vmatprep.subr.bf16.mxu0 0
      %2157 = vmatpush2.bf16.msra.mxu0 0
      %2158 = vmatprep.subr.bf16.mxu0 0
      %2159 = vmatpush2.bf16.msra.mxu0 0
      %2160 = vmatprep.mubr.bf16.mxu0 0
      %2161 = vmatmul.mubr.bf16.gmra.mxu0 %v2062
      %v2162 = vpop.f32.mrf.mxu0
      %v2163 = vadd.f32 0.0, %v2162
      %v2164 = vpop.f32.mrf.mxu0
      %v2165 = vpop.f32.mrf.mxu0
      %v2166 = vadd.f32 0.0, %v2165
      %v2167 = vpop.f32.mrf.mxu0
      %2168 = vmatprep.mubr.bf16.mxu0 0
      %2169 = vmatmul.mubr.bf16.gmra.mxu0 %v2064
      %v2170 = vpop.f32.mrf.mxu0
      %v2171 = vadd.f32 0.0, %v2170
      %v2172 = vpop.f32.mrf.mxu0
      %v2173 = vpop.f32.mrf.mxu0
      %v2174 = vadd.f32 0.0, %v2173
      %v2175 = vpop.f32.mrf.mxu0
      %2176 = vmatprep.mubr.bf16.mxu0 0
      %2177 = vmatmul.mubr.bf16.gmra.mxu0 %v2066
      %v2178 = vpop.f32.mrf.mxu0
      %v2179 = vadd.f32 0.0, %v2178
      %v2180 = vpop.f32.mrf.mxu0
      %v2181 = vpop.f32.mrf.mxu0
      %v2182 = vadd.f32 0.0, %v2181
      %v2183 = vpop.f32.mrf.mxu0
      %2184 = vmatprep.mubr.bf16.mxu0 0
      %2185 = vmatmul.mubr.bf16.gmra.mxu0 %v2068
      %v2186 = vpop.f32.mrf.mxu0
      %v2187 = vadd.f32 0.0, %v2186
      %v2188 = vpop.f32.mrf.mxu0
      %v2189 = vpop.f32.mrf.mxu0
      %v2190 = vadd.f32 0.0, %v2189
      %v2191 = vpop.f32.mrf.mxu0
      %2192 = vmatprep.mubr.bf16.mxu0 0
      %2193 = vmatmul.mubr.bf16.gmra.mxu0 %v2070
      %v2194 = vpop.f32.mrf.mxu0
      %v2195 = vadd.f32 0.0, %v2194
      %v2196 = vpop.f32.mrf.mxu0
      %v2197 = vpop.f32.mrf.mxu0
      %v2198 = vadd.f32 0.0, %v2197
      %v2199 = vpop.f32.mrf.mxu0
      %2200 = vmatprep.mubr.bf16.mxu0 0
      %2201 = vmatmul.mubr.bf16.gmra.mxu0 %v2072
      %v2202 = vpop.f32.mrf.mxu0
      %v2203 = vadd.f32 0.0, %v2202
      %v2204 = vpop.f32.mrf.mxu0
      %v2205 = vpop.f32.mrf.mxu0
      %v2206 = vadd.f32 0.0, %v2205
      %v2207 = vpop.f32.mrf.mxu0
      %2208 = vmatprep.mubr.bf16.mxu0 0
      %2209 = vmatmul.mubr.bf16.gmra.mxu0 %v2071
      %v2210 = vpop.f32.mrf.mxu0
      %v2211 = vadd.f32 0.0, %v2210
      %v2212 = vpop.f32.mrf.mxu0
      %v2213 = vpop.f32.mrf.mxu0
      %v2214 = vpop.f32.mrf.mxu0
      %2215 = vdwg.mxu0
      %v2216 = vadd.f32 %v2026, %v2163
      %v2217 = vadd.f32 %v2027, %v2166
      %v2218 = vadd.f32 %v2028, %v2171
      %v2219 = vadd.f32 %v2029, %v2174
      %v2220 = vadd.f32 %v2030, %v2179
      %v2221 = vadd.f32 %v2031, %v2182
      %v2222 = vadd.f32 %v2032, %v2187
      %v2223 = vadd.f32 %v2033, %v2190
      %v2224 = vadd.f32 %v2034, %v2195
      %v2225 = vadd.f32 %v2035, %v2198
      %v2226 = vadd.f32 %v2036, %v2203
      %v2227 = vadd.f32 %v2037, %v2206
      %v2228 = vadd.f32 %v2038, %v2211
      %v2229 = vld [vmem:[%s270 + $0x40] sm:$0x3]
      %v2230 = vld [vmem:[%s1 + $0x200] sm:$0xf]
      %v2231 = vld [vmem:[%s1 + $0x204] sm:$0xf]
      %v2232 = vld [vmem:[%s1 + $0x208] sm:$0xf]
      %v2233 = vld [vmem:[%s1 + $0x20c] sm:$0xf]
      %v2234 = vld [vmem:[%s1 + $0x210] sm:$0xf]
      %v2235 = vld [vmem:[%s1 + $0x214] sm:$0xf]
      %v2236 = vld [vmem:[%s1 + $0x218] sm:$0xf]
      %v2237 = vld [vmem:[%s1 + $0x21c] sm:$0xf]
      %v2238 = vld [vmem:[%s1 + $0x220] sm:$0xf]
      %v2239 = vld [vmem:[%s1 + $0x224] sm:$0xf]
      %v2240 = vld [vmem:[%s1 + $0x228] sm:$0xf]
      %v2241 = vld [vmem:[%s1 + $0x22c] sm:$0xf]
      %v2242 = vld [vmem:[%s1 + $0x230] sm:$0xf]
      %v2243 = vld [vmem:[%s1 + $0x234] sm:$0xf]
      %v2244 = vld [vmem:[%s1 + $0x238] sm:$0xf]
      %v2245 = vld [vmem:[%s1 + $0x23c] sm:$0xf]
      %v2247 = vunpack.c.l.b16 %v2229
      %v2248 = vpack.c.b16 %v2247, %v1819
      %vm2249 = vsmask.f32 6400
      %v2251 = vshrl.u32 %v2058, 16
      %v2253 = vrot.slane %v2251, 1
      %v2254 = vshll.u32 %v2058, 16
      %v2256 = vrot.slane %v2254, 2
      %v2257 = vor.u32 %v2253, %v2256
      %v2258 = vrot.slane %v1840, 1
      %v2259 = vrot.slane %v1836, 2
      %v2260 = vor.u32 %v2258, %v2259
      %v2261 = vsel %vm2249, %v2257, %v2260
      %v2262 = vrot.slane %v1848, 1
      %v2263 = vrot.slane %v1844, 2
      %v2264 = vor.u32 %v2262, %v2263
      %v2265 = vsel %vm2249, %v2260, %v2264
      %v2266 = vrot.slane %v1856, 1
      %v2267 = vrot.slane %v1852, 2
      %v2268 = vor.u32 %v2266, %v2267
      %v2269 = vsel %vm2249, %v2264, %v2268
      %v2270 = vrot.slane %v1864, 1
      %v2271 = vrot.slane %v1860, 2
      %v2272 = vor.u32 %v2270, %v2271
      %v2273 = vsel %vm2249, %v2268, %v2272
      %v2274 = vrot.slane %v1872, 1
      %v2275 = vrot.slane %v1868, 2
      %v2276 = vor.u32 %v2274, %v2275
      %v2277 = vsel %vm2249, %v2272, %v2276
      %v2279 = vshrl.u32 %v2248, 16
      %v2281 = vrot.slane %v2279, 1
      %v2282 = vshll.u32 %v2248, 16
      %v2284 = vrot.slane %v2282, 2
      %v2285 = vor.u32 %v2281, %v2284
      %v2286 = vsel %vm2249, %v2276, %v2285
      %v2310 = vunpack.c.l.b16 %v2230
      %v2311 = vunpack.c.l.b16 %v2231
      %v2312 = vunpack.c.l.b16 %v2232
      %v2313 = vunpack.c.l.b16 %v2233
      %v2314 = vunpack.c.l.b16 %v2234
      %v2315 = vunpack.c.l.b16 %v2235
      %v2316 = vunpack.c.l.b16 %v2236
      %v2317 = vunpack.c.l.b16 %v2237
      %v2318 = vunpack.c.l.b16 %v2238
      %v2319 = vunpack.c.l.b16 %v2239
      %v2320 = vunpack.c.l.b16 %v2240
      %v2321 = vunpack.c.l.b16 %v2241
      %v2322 = vunpack.c.l.b16 %v2242
      %v2323 = vunpack.c.l.b16 %v2243
      %v2324 = vunpack.c.l.b16 %v2244
      %v2325 = vunpack.c.l.b16 %v2245
      %v2326 = vpack.c.b16 %v2311, %v2310
      %v2327 = vpack.c.b16 %v2313, %v2312
      %v2328 = vpack.c.b16 %v2315, %v2314
      %v2329 = vpack.c.b16 %v2317, %v2316
      %v2330 = vpack.c.b16 %v2319, %v2318
      %v2331 = vpack.c.b16 %v2321, %v2320
      %v2332 = vpack.c.b16 %v2323, %v2322
      %v2333 = vpack.c.b16 %v2325, %v2324
      %2342 = vmatprep.subr.bf16.mxu0 0
      %2343 = vmatpush1.bf16.msra.mxu0 %v2333
      %2344 = vmatprep.subr.bf16.mxu0 0
      %2345 = vmatpush1.bf16.msra.mxu0 %v2332
      %2346 = vmatprep.subr.bf16.mxu0 0
      %2347 = vmatpush1.bf16.msra.mxu0 %v2331
      %2348 = vmatprep.subr.bf16.mxu0 0
      %2349 = vmatpush1.bf16.msra.mxu0 %v2330
      %2350 = vmatprep.subr.bf16.mxu0 0
      %2351 = vmatpush1.bf16.msra.mxu0 %v2329
      %2352 = vmatprep.subr.bf16.mxu0 0
      %2353 = vmatpush1.bf16.msra.mxu0 %v2328
      %2354 = vmatprep.subr.bf16.mxu0 0
      %2355 = vmatpush1.bf16.msra.mxu0 %v2327
      %2356 = vmatprep.subr.bf16.mxu0 0
      %2357 = vmatpush1.bf16.msra.mxu0 %v2326
      %2358 = vmatprep.subr.bf16.mxu0 0
      %2359 = vmatpush2.bf16.msra.mxu0 0
      %2360 = vmatprep.subr.bf16.mxu0 0
      %2361 = vmatpush2.bf16.msra.mxu0 0
      %2362 = vmatprep.subr.bf16.mxu0 0
      %2363 = vmatpush2.bf16.msra.mxu0 0
      %2364 = vmatprep.subr.bf16.mxu0 0
      %2365 = vmatpush2.bf16.msra.mxu0 0
      %2366 = vmatprep.subr.bf16.mxu0 0
      %2367 = vmatpush2.bf16.msra.mxu0 0
      %2368 = vmatprep.subr.bf16.mxu0 0
      %2369 = vmatpush2.bf16.msra.mxu0 0
      %2370 = vmatprep.subr.bf16.mxu0 0
      %2371 = vmatpush2.bf16.msra.mxu0 0
      %2372 = vmatprep.subr.bf16.mxu0 0
      %2373 = vmatpush2.bf16.msra.mxu0 0
      %2374 = vmatprep.mubr.bf16.mxu0 0
      %2375 = vmatmul.mubr.bf16.gmra.mxu0 %v2261
      %v2376 = vpop.f32.mrf.mxu0
      %v2377 = vadd.f32 0.0, %v2376
      %v2378 = vpop.f32.mrf.mxu0
      %v2379 = vpop.f32.mrf.mxu0
      %v2380 = vadd.f32 0.0, %v2379
      %v2381 = vpop.f32.mrf.mxu0
      %2382 = vmatprep.mubr.bf16.mxu0 0
      %2383 = vmatmul.mubr.bf16.gmra.mxu0 %v2265
      %v2384 = vpop.f32.mrf.mxu0
      %v2385 = vadd.f32 0.0, %v2384
      %v2386 = vpop.f32.mrf.mxu0
      %v2387 = vpop.f32.mrf.mxu0
      %v2388 = vadd.f32 0.0, %v2387
      %v2389 = vpop.f32.mrf.mxu0
      %2390 = vmatprep.mubr.bf16.mxu0 0
      %2391 = vmatmul.mubr.bf16.gmra.mxu0 %v2269
      %v2392 = vpop.f32.mrf.mxu0
      %v2393 = vadd.f32 0.0, %v2392
      %v2394 = vpop.f32.mrf.mxu0
      %v2395 = vpop.f32.mrf.mxu0
      %v2396 = vadd.f32 0.0, %v2395
      %v2397 = vpop.f32.mrf.mxu0
      %2398 = vmatprep.mubr.bf16.mxu0 0
      %2399 = vmatmul.mubr.bf16.gmra.mxu0 %v2273
      %v2400 = vpop.f32.mrf.mxu0
      %v2401 = vadd.f32 0.0, %v2400
      %v2402 = vpop.f32.mrf.mxu0
      %v2403 = vpop.f32.mrf.mxu0
      %v2404 = vadd.f32 0.0, %v2403
      %v2405 = vpop.f32.mrf.mxu0
      %2406 = vmatprep.mubr.bf16.mxu0 0
      %2407 = vmatmul.mubr.bf16.gmra.mxu0 %v2277
      %v2408 = vpop.f32.mrf.mxu0
      %v2409 = vadd.f32 0.0, %v2408
      %v2410 = vpop.f32.mrf.mxu0
      %v2411 = vpop.f32.mrf.mxu0
      %v2412 = vadd.f32 0.0, %v2411
      %v2413 = vpop.f32.mrf.mxu0
      %2414 = vmatprep.mubr.bf16.mxu0 0
      %2415 = vmatmul.mubr.bf16.gmra.mxu0 %v2286
      %v2416 = vpop.f32.mrf.mxu0
      %v2417 = vadd.f32 0.0, %v2416
      %v2418 = vpop.f32.mrf.mxu0
      %v2419 = vpop.f32.mrf.mxu0
      %v2420 = vadd.f32 0.0, %v2419
      %v2421 = vpop.f32.mrf.mxu0
      %2422 = vmatprep.mubr.bf16.mxu0 0
      %2423 = vmatmul.mubr.bf16.gmra.mxu0 %v2285
      %v2424 = vpop.f32.mrf.mxu0
      %v2425 = vadd.f32 0.0, %v2424
      %v2426 = vpop.f32.mrf.mxu0
      %v2427 = vpop.f32.mrf.mxu0
      %v2428 = vpop.f32.mrf.mxu0
      %2429 = vdwg.mxu0
      %v2430 = vadd.f32 %v2216, %v2377
      %v2431 = vadd.f32 %v2217, %v2380
      %v2432 = vadd.f32 %v2218, %v2385
      %v2433 = vadd.f32 %v2219, %v2388
      %v2434 = vadd.f32 %v2220, %v2393
      %v2435 = vadd.f32 %v2221, %v2396
      %v2436 = vadd.f32 %v2222, %v2401
      %v2437 = vadd.f32 %v2223, %v2404
      %v2438 = vadd.f32 %v2224, %v2409
      %v2439 = vadd.f32 %v2225, %v2412
      %v2440 = vadd.f32 %v2226, %v2417
      %v2441 = vadd.f32 %v2227, %v2420
      %v2442 = vadd.f32 %v2228, %v2425
      %v2443 = vpack.c.bf16 %v2431, %v2430
      %v2444 = vpack.c.bf16 %v2433, %v2432
      %v2445 = vpack.c.bf16 %v2435, %v2434
      %v2446 = vpack.c.bf16 %v2437, %v2436
      %v2447 = vpack.c.bf16 %v2439, %v2438
      %v2448 = vpack.c.bf16 %v2441, %v2440
      %v2449 = vpack.c.bf16 %v2442, %v2442
      %v2457 = vunpack.c.l.b16 %v2443
      %v2458 = vunpack.c.h.b16 %v2443
      %v2459 = vunpack.c.l.b16 %v2444
      %v2460 = vunpack.c.h.b16 %v2444
      %v2461 = vunpack.c.l.b16 %v2445
      %v2462 = vunpack.c.h.b16 %v2445
      %v2463 = vunpack.c.l.b16 %v2446
      %v2464 = vunpack.c.h.b16 %v2446
      %v2465 = vunpack.c.l.b16 %v2447
      %v2466 = vunpack.c.h.b16 %v2447
      %v2467 = vunpack.c.l.b16 %v2448
      %v2468 = vunpack.c.h.b16 %v2448
      %v2469 = vunpack.c.l.b16 %v2449
      %v2470 = vpack.c.b16 %v2457, %v2457
      %v2471 = vpack.c.b16 %v2458, %v2458
      %v2472 = vpack.c.b16 %v2459, %v2459
      %v2473 = vpack.c.b16 %v2460, %v2460
      %v2474 = vpack.c.b16 %v2461, %v2461
      %v2475 = vpack.c.b16 %v2462, %v2462
      %v2476 = vpack.c.b16 %v2463, %v2463
      %v2477 = vpack.c.b16 %v2464, %v2464
      %v2478 = vpack.c.b16 %v2465, %v2465
      %v2479 = vpack.c.b16 %v2466, %v2466
      %v2480 = vpack.c.b16 %v2467, %v2467
      %v2481 = vpack.c.b16 %v2468, %v2468
      %v2482 = vpack.c.b16 %v2469, %v2469
      %2496 = vst [vmem:[%s180] sm:$0xf] %v2470
      %2497 = vst [vmem:[%s180 + $0x4] sm:$0xf] %v2471
      %2498 = vst [vmem:[%s180 + $0x8] sm:$0xf] %v2472
      %2499 = vst [vmem:[%s180 + $0xc] sm:$0xf] %v2473
      %2500 = vst [vmem:[%s180 + $0x10] sm:$0xf] %v2474
      %2501 = vst [vmem:[%s180 + $0x14] sm:$0xf] %v2475
      %2502 = vst [vmem:[%s180 + $0x18] sm:$0xf] %v2476
      %2503 = vst [vmem:[%s180 + $0x1c] sm:$0xf] %v2477
      %2504 = vst [vmem:[%s180 + $0x20] sm:$0xf] %v2478
      %2505 = vst [vmem:[%s180 + $0x24] sm:$0xf] %v2479
      %2506 = vst [vmem:[%s180 + $0x28] sm:$0xf] %v2480
      %2507 = vst [vmem:[%s180 + $0x2c] sm:$0xf] %v2481
      %2508 = vst [vmem:[%s180 + $0x30] sm:$0xf] %v2482
      %v2509 = vld [vmem:[%s174] sm:$0xff]
      %v2510 = vld [vmem:[%s174 + $0x8] sm:$0xff]
      %v2511 = vld [vmem:[%s174 + $0x10] sm:$0xff]
      %v2512 = vld [vmem:[%s174 + $0x18] sm:$0xff]
      %v2513 = vld [vmem:[%s174 + $0x20] sm:$0xff]
      %v2514 = vld [vmem:[%s174 + $0x28] sm:$0xff]
      %v2515 = vld [vmem:[%s174 + $0x30] sm:$0xff]
      %v2516 = vld [vmem:[%s174 + $0x38] sm:$0xff]
      %v2517 = vld [vmem:[%s174 + $0x40] sm:$0xff]
      %v2518 = vld [vmem:[%s174 + $0x48] sm:$0xff]
      %v2519 = vld [vmem:[%s174 + $0x50] sm:$0xff]
      %v2520 = vld [vmem:[%s174 + $0x58] sm:$0xff]
      %v2521 = vld [vmem:[%s174 + $0x60] sm:$0xff]
      %vm2522 = vcmp.gt.f32.partialorder %v2509, 0.5
      %vm2523 = vcmp.gt.f32.partialorder %v2510, 0.5
      %vm2524 = vcmp.gt.f32.partialorder %v2511, 0.5
      %vm2525 = vcmp.gt.f32.partialorder %v2512, 0.5
      %vm2526 = vcmp.gt.f32.partialorder %v2513, 0.5
      %vm2527 = vcmp.gt.f32.partialorder %v2514, 0.5
      %vm2528 = vcmp.gt.f32.partialorder %v2515, 0.5
      %vm2529 = vcmp.gt.f32.partialorder %v2516, 0.5
      %vm2530 = vcmp.gt.f32.partialorder %v2517, 0.5
      %vm2531 = vcmp.gt.f32.partialorder %v2518, 0.5
      %vm2532 = vcmp.gt.f32.partialorder %v2519, 0.5
      %vm2533 = vcmp.gt.f32.partialorder %v2520, 0.5
      %vm2534 = vcmp.gt.f32.partialorder %v2521, 0.5
      %v2535 = vsel %vm2522, 1, 0
      %v2536 = vsel %vm2523, 1, 0
      %v2537 = vsel %vm2524, 1, 0
      %v2538 = vsel %vm2525, 1, 0
      %v2539 = vsel %vm2526, 1, 0
      %v2540 = vsel %vm2527, 1, 0
      %v2541 = vsel %vm2528, 1, 0
      %v2542 = vsel %vm2529, 1, 0
      %v2543 = vsel %vm2530, 1, 0
      %v2544 = vsel %vm2531, 1, 0
      %v2545 = vsel %vm2532, 1, 0
      %v2546 = vsel %vm2533, 1, 0
      %v2547 = vsel %vm2534, 1, 0
      %2548 = vset.pattern.permute.xlu0 0
      %2549 = vperm.xlu0 %2548, %v2535
      %v2550 = vpop.permute.xlu0 %2549
      %2551 = vset.pattern.permute.xlu0 0
      %2552 = vperm.xlu0 %2551, %v2536
      %v2553 = vpop.permute.xlu0 %2552
      %2554 = vset.pattern.permute.xlu0 0
      %2555 = vperm.xlu0 %2554, %v2537
      %v2556 = vpop.permute.xlu0 %2555
      %2557 = vset.pattern.permute.xlu0 0
      %2558 = vperm.xlu0 %2557, %v2538
      %v2559 = vpop.permute.xlu0 %2558
      %2560 = vset.pattern.permute.xlu0 0
      %2561 = vperm.xlu0 %2560, %v2539
      %v2562 = vpop.permute.xlu0 %2561
      %2563 = vset.pattern.permute.xlu0 0
      %2564 = vperm.xlu0 %2563, %v2540
      %v2565 = vpop.permute.xlu0 %2564
      %2566 = vset.pattern.permute.xlu0 0
      %2567 = vperm.xlu0 %2566, %v2541
      %v2568 = vpop.permute.xlu0 %2567
      %2569 = vset.pattern.permute.xlu0 0
      %2570 = vperm.xlu0 %2569, %v2542
      %v2571 = vpop.permute.xlu0 %2570
      %2572 = vset.pattern.permute.xlu0 0
      %2573 = vperm.xlu0 %2572, %v2543
      %v2574 = vpop.permute.xlu0 %2573
      %2575 = vset.pattern.permute.xlu0 0
      %2576 = vperm.xlu0 %2575, %v2544
      %v2577 = vpop.permute.xlu0 %2576
      %2578 = vset.pattern.permute.xlu0 0
      %2579 = vperm.xlu0 %2578, %v2545
      %v2580 = vpop.permute.xlu0 %2579
      %2581 = vset.pattern.permute.xlu0 0
      %2582 = vperm.xlu0 %2581, %v2546
      %v2583 = vpop.permute.xlu0 %2582
      %2584 = vset.pattern.permute.xlu0 0
      %2585 = vperm.xlu0 %2584, %v2547
      %v2586 = vpop.permute.xlu0 %2585
      %vm2587 = vcmp.eq.s32.totalorder %v2550, 1
      %vm2588 = vcmp.eq.s32.totalorder %v2553, 1
      %vm2589 = vcmp.eq.s32.totalorder %v2556, 1
      %vm2590 = vcmp.eq.s32.totalorder %v2559, 1
      %vm2591 = vcmp.eq.s32.totalorder %v2562, 1
      %vm2592 = vcmp.eq.s32.totalorder %v2565, 1
      %vm2593 = vcmp.eq.s32.totalorder %v2568, 1
      %vm2594 = vcmp.eq.s32.totalorder %v2571, 1
      %vm2595 = vcmp.eq.s32.totalorder %v2574, 1
      %vm2596 = vcmp.eq.s32.totalorder %v2577, 1
      %vm2597 = vcmp.eq.s32.totalorder %v2580, 1
      %vm2598 = vcmp.eq.s32.totalorder %v2583, 1
      %vm2599 = vcmp.eq.s32.totalorder %v2586, 1
      %v2600 = vsel %vm2587, %v2430, 0.0
      %v2601 = vsel %vm2588, %v2431, 0.0
      %v2602 = vsel %vm2589, %v2432, 0.0
      %v2603 = vsel %vm2590, %v2433, 0.0
      %v2604 = vsel %vm2591, %v2434, 0.0
      %v2605 = vsel %vm2592, %v2435, 0.0
      %v2606 = vsel %vm2593, %v2436, 0.0
      %v2607 = vsel %vm2594, %v2437, 0.0
      %v2608 = vsel %vm2595, %v2438, 0.0
      %v2609 = vsel %vm2596, %v2439, 0.0
      %v2610 = vsel %vm2597, %v2440, 0.0
      %v2611 = vsel %vm2598, %v2441, 0.0
      %v2612 = vsel %vm2599, %v2442, 0.0
      %v2613 = vadd.f32 %v2600, %v2601
      %v2614 = vadd.f32 %v2613, %v2602
      %v2615 = vadd.f32 %v2614, %v2603
      %v2616 = vadd.f32 %v2615, %v2604
      %v2617 = vadd.f32 %v2616, %v2605
      %v2618 = vadd.f32 %v2617, %v2606
      %v2619 = vadd.f32 %v2618, %v2607
      %v2620 = vadd.f32 %v2619, %v2608
      %v2621 = vadd.f32 %v2620, %v2609
      %v2622 = vadd.f32 %v2621, %v2610
      %v2623 = vadd.f32 %v2622, %v2611
      %v2624 = vadd.f32 %v2623, %v2612
      %v2625 = vrot.slane %v2624, 4
      %v2626 = vadd.f32 %v2624, %v2625
      %v2627 = vrot.slane %v2626, 2
      %v2628 = vadd.f32 %v2626, %v2627
      %v2629 = vrot.slane %v2628, 1
      %v2630 = vadd.f32 %v2628, %v2629
      %v2631 = vmul.f32 %v2600, %v2600
      %v2632 = vmul.f32 %v2601, %v2601
      %v2633 = vmul.f32 %v2602, %v2602
      %v2634 = vmul.f32 %v2603, %v2603
      %v2635 = vmul.f32 %v2604, %v2604
      %v2636 = vmul.f32 %v2605, %v2605
      %v2637 = vmul.f32 %v2606, %v2606
      %v2638 = vmul.f32 %v2607, %v2607
      %v2639 = vmul.f32 %v2608, %v2608
      %v2640 = vmul.f32 %v2609, %v2609
      %v2641 = vmul.f32 %v2610, %v2610
      %v2642 = vmul.f32 %v2611, %v2611
      %v2643 = vmul.f32 %v2612, %v2612
      %v2644 = vadd.f32 %v2631, %v2632
      %v2645 = vadd.f32 %v2644, %v2633
      %v2646 = vadd.f32 %v2645, %v2634
      %v2647 = vadd.f32 %v2646, %v2635
      %v2648 = vadd.f32 %v2647, %v2636
      %v2649 = vadd.f32 %v2648, %v2637
      %v2650 = vadd.f32 %v2649, %v2638
      %v2651 = vadd.f32 %v2650, %v2639
      %v2652 = vadd.f32 %v2651, %v2640
      %v2653 = vadd.f32 %v2652, %v2641
      %v2654 = vadd.f32 %v2653, %v2642
      %v2655 = vadd.f32 %v2654, %v2643
      %v2656 = vrot.slane %v2655, 4
      %v2657 = vadd.f32 %v2655, %v2656
      %v2658 = vrot.slane %v2657, 2
      %v2659 = vadd.f32 %v2657, %v2658
      %v2660 = vrot.slane %v2659, 1
      %v2661 = vadd.f32 %v2659, %v2660
      %vm2662 = vcmask 1040384
      %v2663 = vsel %vm2662, %v2630, %v2661
      %2664 = vst [vmem:[%s185] sm:$0x3] %v2663
      %s2665 = smul.u32 13, %s16
      %p2666 = scmp.lt.s32.totalorder %s2665, 25
      %s2667 = scalar_select %p2666, %s2665, 25
      %s2668 = smul.addr %s2667, 4
      %s2669 = scalar_lea.vmem %s3, %s2668
      %p2670 = scmp.lt.s32.totalorder %s16, 1
      %s2671 = scalar_select %p2670, %s16, 1
      %s2672 = smul.addr %s2671, 2
      %s2673 = scalar_lea.vmem %s4, %s2672
      // Predicated region
      $region111: #{residual_block_forward.7} parent=27 // pred_check
        %p2674 = pneg %p81
      $region112: #{residual_block_forward.7} parent=27 // pred_check_branch
        %2676 = sbr.rel (%p2674) target = $region114
      $region113: #{residual_block_forward.7} parent=27 // pred_region
        %s2677 = smul.u32 13, %s16
      $region114: #{residual_block_forward.7} parent=27 // pred_fallthru
        _
      // Predicated region
      $region115: #{residual_block_forward.7} parent=27 // pred_check
        %p2678 = pneg %p107
      $region116: #{residual_block_forward.7} parent=27 // pred_check_branch
        %2680 = sbr.rel (%p2678) target = $region118
      $region117: #{residual_block_forward.7} parent=27 // pred_region
        _
      $region118: #{residual_block_forward.7} parent=27 // pred_fallthru
        _
    $region28: #{residual_block_forward.7} parent=5 // pred_fallthru
      _
    %p2681 = scmp.le.s32.totalorder 2, %s11
    // Predicated region
    $region119: #{residual_block_forward.7} parent=5 // pred_check
      %p2682 = pneg %p2681
    $region120: #{residual_block_forward.7} parent=5 // pred_check_branch
      %2684 = sbr.rel (%p2682) target = $region122
    $region121: #{residual_block_forward.7} parent=5 // pred_region
      %s2685 = ssub.s32 %s11, 2
      // Predicated region
      $region123: #{residual_block_forward.7} parent=121 // pred_check
        %p2686 = pneg %p87
      $region124: #{residual_block_forward.7} parent=121 // pred_check_branch
        %2688 = sbr.rel (%p2686) target = $region126
      $region125: #{residual_block_forward.7} parent=121 // pred_region
        %s2689 = smul.u32 13, %s17
        %p2690 = scmp.lt.s32.totalorder %s2689, 25
        %s2691 = scalar_select %p2690, %s2689, 25
        %s2692 = smul.addr %s2691, 4
        %s2693 = scalar_lea.vmem %s3, %s2692
      $region126: #{residual_block_forward.7} parent=121 // pred_fallthru
        _
      // Predicated region
      $region127: #{residual_block_forward.7} parent=121 // pred_check
        %p2694 = pneg %p113
      $region128: #{residual_block_forward.7} parent=121 // pred_check_branch
        %2696 = sbr.rel (%p2694) target = $region130
      $region129: #{residual_block_forward.7} parent=121 // pred_region
        %p2697 = scmp.lt.s32.totalorder %s17, 1
        %s2698 = scalar_select %p2697, %s17, 1
        %s2699 = smul.addr %s2698, 2
        %s2700 = scalar_lea.vmem %s4, %s2699
      $region130: #{residual_block_forward.7} parent=121 // pred_fallthru
        _
    $region122: #{residual_block_forward.7} parent=5 // pred_fallthru
      _
  $region6: #{residual_block_forward.7} parent=0 // loop_footer
    %s15 = sadd.s32 1, %s11
  $region7: #{residual_block_forward.7} parent=0 // loop_footer_branch
    %10 = sbr.rel target = $region3
  $region8: #{residual_block_forward.7} parent=0 // loop_exit
    _
  %2701 = vsyncmov [#allocation3]
  %s2702 = vpop.sfrf %2701
  %p2703 = scmp.eq.s32.totalorder %s2702, 0
  %p2704 = pneg %p2703
  %2706 = shalt.err (%p2704)
  %s2707 = scalar_lea.sflag [#allocation3], 1
  %2708 = vsyncmov %s2707
  %s2709 = vpop.sfrf %2708
  %p2710 = scmp.eq.s32.totalorder %s2709, 0
  %p2711 = pneg %p2710
  %2713 = shalt.err (%p2711)

</llo_original>
